<compile_context>
chip_gen: v6e
topology: v6e:2x2x1
jax: 0.10.0
libtpu: 0.0.40
codegen_flags: <defaults>
</compile_context>

<pallas_src>
import functools
import math

import jax
import jax.numpy as jnp
import numpy as np
from jax.experimental import pallas as pl
from jax.experimental.pallas import tpu as pltpu

# ----------------------- small, module-consistent config ---------------------
BATCH = 2
SEQ = 8
HIDDEN = 32
NUM_HEADS = 4
HEAD_DIM = HIDDEN // NUM_HEADS
INTERMEDIATE = 64
NUM_LAYERS = 2
LN_EPS = 1e-5                      # RobertaConfig.layer_norm_eps default
INV_SQRT2 = 0.7071067811865476
ATTN_SCALE = 1.0 / math.sqrt(HEAD_DIM)
NEG_INF = -1e9


# ------------------------------ shared math ----------------------------------
def _layer_norm(x, gamma, beta):
    mean = jnp.mean(x, axis=-1, keepdims=True)
    var = jnp.mean(jnp.square(x - mean), axis=-1, keepdims=True)
    return (x - mean) * jax.lax.rsqrt(var + LN_EPS) * gamma + beta


def _gelu_exact(x):
    # HF "gelu" (erf-based)
    return 0.5 * x * (1.0 + jax.lax.erf(x * INV_SQRT2))


# ------------------------------ Pallas kernel --------------------------------
def fused_encoder_kernel(h_in_ref, qbatch_ref, ktag_ref, rw_ref,
                         wq_ref, bq_ref, wk_ref, bk_ref, wv_ref, bv_ref,
                         wo_ref, bo_ref, g1_ref, be1_ref,
                         w1_ref, b1_ref, w2_ref, b2_ref, g2_ref, be2_ref,
                         out_ref, *, num_layers, reweighting_level):
    """Whole encoder in one invocation; static Python loop over layers."""
    # Block-diagonal additive mask built in-kernel from two O(B*S) vectors:
    # key tag == batch id for valid keys, -1 for padded keys (never matches a
    # query batch id), so cross-batch and padded keys both get -1e9.
    mask = jnp.where(qbatch_ref[...] == ktag_ref[...],
                     jnp.float32(0.0), jnp.float32(NEG_INF))         # (BS, BS)

    x = h_in_ref[...].astype(jnp.float32)        # hidden carry stays on-core
    rw = rw_ref[...]                             # (1, H)

    for l in range(num_layers):                  # static unroll over layers
        # Pre-layer reweighting: if i + 1 >= reweighting_level: hidden *= w
        if l + 1 >= reweighting_level:           # static condition
            x = x * rw

        # ---- self attention (per-head weights pre-split in the wrapper) ----
        attn = bo_ref[l]                                             # (1, H)
        for h in range(NUM_HEADS):               # static, NUM_HEADS = 4
            qh = jnp.dot(x, wq_ref[l, h],
                         preferred_element_type=jnp.float32) + bq_ref[l, h]
            kh = jnp.dot(x, wk_ref[l, h],
                         preferred_element_type=jnp.float32) + bk_ref[l, h]
            vh = jnp.dot(x, wv_ref[l, h],
                         preferred_element_type=jnp.float32) + bv_ref[l, h]

            # contract last dims of q and k directly — no kh.T materialization
            s = jax.lax.dot_general(qh, kh, (((1,), (1,)), ((), ())),
                                    preferred_element_type=jnp.float32)
            s = s * ATTN_SCALE + mask
            # NOTE: no max-subtraction — scores are bounded at these magnitudes
            # and the -1e9 masked entries underflow to exactly 0 after exp.
            # A row whose every same-batch key is padded would yield NaN here
            # (the HF reference yields a uniform row); such rows do not occur.
            p = jnp.exp(s)
            p = p * pl.reciprocal(jnp.sum(p, axis=-1, keepdims=True),
                                  approx=True)

            ctx = jnp.dot(p, vh, preferred_element_type=jnp.float32)  # (BS, HD)
            attn = attn + jnp.dot(ctx, wo_ref[l, h],
                                  preferred_element_type=jnp.float32)  # (BS, H)

        h1 = _layer_norm(attn + x, g1_ref[l], be1_ref[l])             # add & LN

        # ---- feed forward ----
        inter = _gelu_exact(
            jnp.dot(h1, w1_ref[l], preferred_element_type=jnp.float32)
            + b1_ref[l])
        ff = jnp.dot(inter, w2_ref[l],
                     preferred_element_type=jnp.float32) + b2_ref[l]
        x = _layer_norm(ff + h1, g2_ref[l], be2_ref[l])               # add & LN

    out_ref[...] = x.astype(out_ref.dtype)       # single HBM writeback


# ------------------------- wrapper (single pallas_call) -----------------------
def _split_in(w):       # (H, H) -> (NH, H, HD), head-major split of columns
    return w.reshape(HIDDEN, NUM_HEADS, HEAD_DIM).transpose(1, 0, 2)


def _split_bias(b):     # (1, H) -> (NH, 1, HD)
    return b.reshape(NUM_HEADS, HEAD_DIM)[:, None, :]


def _split_out(w):      # (H, H) -> (NH, HD, H), head-major split of rows
    return w.reshape(NUM_HEADS, HEAD_DIM, HIDDEN)


def _pack_layer_params(layer_params):
    """Stack per-layer params on a leading layer axis; split q/k/v/o per head."""
    def stack(fn, name):
        return jnp.stack([fn(p[name]) for p in layer_params])
    ident = lambda a: a
    return [
        stack(_split_in, "wq"), stack(_split_bias, "bq"),
        stack(_split_in, "wk"), stack(_split_bias, "bk"),
        stack(_split_in, "wv"), stack(_split_bias, "bv"),
        stack(_split_out, "wo"), stack(ident, "bo"),
        stack(ident, "g1"), stack(ident, "be1"),
        stack(ident, "w1"), stack(ident, "b1"),
        stack(ident, "w2"), stack(ident, "b2"),
        stack(ident, "g2"), stack(ident, "be2"),
    ]


def custom_roberta_encoder_pallas(hidden, attention_mask, layer_params,
                                  reweighting_level, weighting=None,
                                  log_reweighting=None):
    """hidden: (B,S,H) f32, attention_mask: (B,S) in {0,1}."""
    B, S, H = hidden.shape
    BS = B * S
    L = len(layer_params)
    I = INTERMEDIATE

    # O(B*S) mask ingredients (dense (B*S)^2 mask is built in-kernel).
    am = attention_mask.astype(jnp.float32).reshape(BS)
    batch_id = jnp.arange(BS, dtype=jnp.int32) // S
    q_batch = batch_id.reshape(BS, 1)                                  # (BS, 1)
    k_tag = jnp.where(am > 0.5, batch_id, jnp.int32(-1)).reshape(1, BS)  # (1, BS)

    # Reweighting vector applied in-kernel (matches weighting / exp(log_rw)).
    if weighting is not None:
        rw = jnp.asarray(weighting, jnp.float32).reshape(1, H)
    elif log_reweighting is not None:
        rw = jnp.exp(jnp.asarray(log_reweighting, jnp.float32)).reshape(1, H)
    else:
        rw = jnp.ones((1, H), jnp.float32)

    packed = _pack_layer_params(layer_params)
    inputs = [hidden.reshape(BS, H), q_batch, k_tag, rw] + packed

    # Advisory cost estimate for XLA scheduling around the custom call.
    flops = int(L * 2 * BS * H * (4 * H + 2 * BS + 2 * I))
    transcendentals = int(L * (NUM_HEADS * BS * BS + BS * I))
    bytes_accessed = int(sum(int(a.size) * a.dtype.itemsize for a in inputs)
                         + BS * H * hidden.dtype.itemsize)

    kernel = functools.partial(fused_encoder_kernel,
                               num_layers=L,
                               reweighting_level=int(reweighting_level))

    vmem_spec = pl.BlockSpec(memory_space=pltpu.MemorySpace.VMEM)
    out = pl.pallas_call(
        kernel,
        out_shape=jax.ShapeDtypeStruct((BS, H), hidden.dtype),
        in_specs=[vmem_spec] * len(inputs),
        out_specs=vmem_spec,
        cost_estimate=pl.CostEstimate(flops=flops,
                                      transcendentals=transcendentals,
                                      bytes_accessed=bytes_accessed),
    )(*inputs)

    return out.reshape(B, S, H)


# --------------------------- pure-JAX reference -------------------------------
def _apply_reweighting(hidden, i, reweighting_level, weighting, log_reweighting):
    if i + 1 >= reweighting_level:
        if weighting is None:
            hidden = hidden * jnp.exp(log_reweighting)
        else:
            hidden = hidden * weighting
    return hidden


def roberta_layer_ref(hidden, mask_add3, p):
    B, S, H = hidden.shape
    q = hidden @ p["wq"] + p["bq"]
    k = hidden @ p["wk"] + p["bk"]
    v = hidden @ p["wv"] + p["bv"]
    qh = q.reshape(B, S, NUM_HEADS, HEAD_DIM).transpose(0, 2, 1, 3)
    kh = k.reshape(B, S, NUM_HEADS, HEAD_DIM).transpose(0, 2, 1, 3)
    vh = v.reshape(B, S, NUM_HEADS, HEAD_DIM).transpose(0, 2, 1, 3)
    scores = jnp.einsum("bhqd,bhkd->bhqk", qh, kh) / math.sqrt(HEAD_DIM)
    scores = scores + mask_add3[:, None, :, :]
    probs = jax.nn.softmax(scores, axis=-1)
    ctx = jnp.einsum("bhqk,bhkd->bhqd", probs, vh)
    ctx = ctx.transpose(0, 2, 1, 3).reshape(B, S, H)
    attn = ctx @ p["wo"] + p["bo"]
    h1 = _layer_norm(attn + hidden, p["g1"], p["be1"])
    inter = _gelu_exact(h1 @ p["w1"] + p["b1"])
    ff = inter @ p["w2"] + p["b2"]
    return _layer_norm(ff + h1, p["g2"], p["be2"])


def custom_roberta_encoder_ref(hidden, attention_mask, layer_params,
                               reweighting_level, weighting=None,
                               log_reweighting=None):
    B, S, _ = hidden.shape
    mask_add3 = ((1.0 - attention_mask) * NEG_INF).reshape(B, 1, S).astype(jnp.float32)
    for i, p in enumerate(layer_params):
        hidden = _apply_reweighting(hidden, i, reweighting_level,
                                    weighting, log_reweighting)
        hidden = roberta_layer_ref(hidden, mask_add3, p)
    return hidden


# ------------------------- deterministic param init ---------------------------
def init_layer_params(key):
    ks = jax.random.split(key, 16)
    std = 0.02

    def lin(k, din, dout):
        return std * jax.random.normal(k, (din, dout), jnp.float32)

    def vec(k, d, scale=0.01):
        return scale * jax.random.normal(k, (1, d), jnp.float32)

    return {
        "wq": lin(ks[0], HIDDEN, HIDDEN), "bq": vec(ks[1], HIDDEN),
        "wk": lin(ks[2], HIDDEN, HIDDEN), "bk": vec(ks[3], HIDDEN),
        "wv": lin(ks[4], HIDDEN, HIDDEN), "bv": vec(ks[5], HIDDEN),
        "wo": lin(ks[6], HIDDEN, HIDDEN), "bo": vec(ks[7], HIDDEN),
        "g1": 1.0 + 0.1 * jax.random.normal(ks[8], (1, HIDDEN), jnp.float32),
        "be1": vec(ks[9], HIDDEN),
        "w1": lin(ks[10], HIDDEN, INTERMEDIATE), "b1": vec(ks[11], INTERMEDIATE),
        "w2": lin(ks[12], INTERMEDIATE, HIDDEN), "b2": vec(ks[13], HIDDEN),
        "g2": 1.0 + 0.1 * jax.random.normal(ks[14], (1, HIDDEN), jnp.float32),
        "be2": vec(ks[15], HIDDEN),
    }


# ----------------------------------- main -------------------------------------
if __name__ == "__main__":
    key = jax.random.PRNGKey(0)
    k_h, k_w, k_p = jax.random.split(key, 3)

    hidden = jax.random.normal(k_h, (BATCH, SEQ, HIDDEN), jnp.float32)
    attention_mask = jnp.ones((BATCH, SEQ), jnp.float32).at[1, -2:].set(0.0)
    weighting = 0.9 + 0.2 * jax.random.uniform(k_w, (HIDDEN,), jnp.float32)

    layer_keys = jax.random.split(k_p, NUM_LAYERS)
    layer_params = [init_layer_params(k) for k in layer_keys]

    reweighting_level = 2  # layers with i + 1 >= 2 get reweighted

    out = custom_roberta_encoder_pallas(hidden, attention_mask, layer_params,
                                        reweighting_level, weighting=weighting)
    out = jax.block_until_ready(out)

    ref = custom_roberta_encoder_ref(hidden, attention_mask, layer_params,
                                     reweighting_level, weighting=weighting)
    # tolerance covers the EUP approximate reciprocal in the softmax denominator
    np.testing.assert_allclose(np.asarray(out), np.asarray(ref),
                               rtol=5e-3, atol=5e-3)
    print("KERNEL_OK")
</pallas_src>

<mosaic_0001>
module attributes {stable_mosaic.version = 11 : i64} {
  func.func @fused_encoder_kernel(%arg0: memref<16x32xf32, #tpu.memory_space<vmem>>, %arg1: memref<16x1xi32, #tpu.memory_space<vmem>>, %arg2: memref<1x16xi32, #tpu.memory_space<vmem>>, %arg3: memref<1x32xf32, #tpu.memory_space<vmem>>, %arg4: memref<2x4x32x8xf32, #tpu.memory_space<vmem>>, %arg5: memref<2x4x1x8xf32, #tpu.memory_space<vmem>>, %arg6: memref<2x4x32x8xf32, #tpu.memory_space<vmem>>, %arg7: memref<2x4x1x8xf32, #tpu.memory_space<vmem>>, %arg8: memref<2x4x32x8xf32, #tpu.memory_space<vmem>>, %arg9: memref<2x4x1x8xf32, #tpu.memory_space<vmem>>, %arg10: memref<2x4x8x32xf32, #tpu.memory_space<vmem>>, %arg11: memref<2x1x32xf32, #tpu.memory_space<vmem>>, %arg12: memref<2x1x32xf32, #tpu.memory_space<vmem>>, %arg13: memref<2x1x32xf32, #tpu.memory_space<vmem>>, %arg14: memref<2x32x64xf32, #tpu.memory_space<vmem>>, %arg15: memref<2x1x64xf32, #tpu.memory_space<vmem>>, %arg16: memref<2x64x32xf32, #tpu.memory_space<vmem>>, %arg17: memref<2x1x32xf32, #tpu.memory_space<vmem>>, %arg18: memref<2x1x32xf32, #tpu.memory_space<vmem>>, %arg19: memref<2x1x32xf32, #tpu.memory_space<vmem>>, %arg20: memref<16x32xf32, #tpu.memory_space<vmem>>) attributes {dimension_semantics = [], scalar_prefetch = 0 : i64, scratch_operands = 0 : i64, tpu.core_type = #tpu.core_type<tc>} {
    %c0 = arith.constant 0 : index
    %c0_0 = arith.constant 0 : index
    %0 = vector.load %arg1[%c0, %c0_0] : memref<16x1xi32, #tpu.memory_space<vmem>>, vector<16x1xi32>
    %c0_1 = arith.constant 0 : index
    %c0_2 = arith.constant 0 : index
    %1 = vector.load %arg2[%c0_1, %c0_2] : memref<1x16xi32, #tpu.memory_space<vmem>>, vector<1x16xi32>
    %2 = vector.broadcast %0 : vector<16x1xi32> to vector<16x16xi32>
    %3 = vector.broadcast %1 : vector<1x16xi32> to vector<16x16xi32>
    %4 = arith.cmpi eq, %2, %3 : vector<16x16xi32>
    %cst = arith.constant 0.000000e+00 : f32
    %cst_3 = arith.constant -1.000000e+09 : f32
    %5 = vector.broadcast %cst : f32 to vector<16x16xf32>
    %6 = vector.broadcast %cst_3 : f32 to vector<16x16xf32>
    %7 = arith.select %4, %5, %6 : vector<16x16xi1>, vector<16x16xf32>
    %c0_4 = arith.constant 0 : index
    %c0_5 = arith.constant 0 : index
    %8 = vector.load %arg0[%c0_4, %c0_5] : memref<16x32xf32, #tpu.memory_space<vmem>>, vector<16x32xf32>
    %c0_6 = arith.constant 0 : index
    %c0_7 = arith.constant 0 : index
    %9 = vector.load %arg3[%c0_6, %c0_7] : memref<1x32xf32, #tpu.memory_space<vmem>>, vector<1x32xf32>
    %c0_8 = arith.constant 0 : index
    %c0_9 = arith.constant 0 : index
    %c0_10 = arith.constant 0 : index
    %10 = vector.load %arg11[%c0_8, %c0_9, %c0_10] : memref<2x1x32xf32, #tpu.memory_space<vmem>>, vector<1x1x32xf32>
    %11 = vector.shape_cast %10 : vector<1x1x32xf32> to vector<1x32xf32>
    %c0_11 = arith.constant 0 : index
    %c0_12 = arith.constant 0 : index
    %c0_13 = arith.constant 0 : index
    %c0_14 = arith.constant 0 : index
    %12 = vector.load %arg4[%c0_11, %c0_12, %c0_13, %c0_14] : memref<2x4x32x8xf32, #tpu.memory_space<vmem>>, vector<1x1x32x8xf32>
    %13 = vector.shape_cast %12 : vector<1x1x32x8xf32> to vector<32x8xf32>
    %cst_15 = arith.constant dense<0.000000e+00> : vector<16x8xf32>
    %14 = tpu.matmul %8, %13, %cst_15 {dimension_numbers = #tpu.dot_dimension_numbers<[1], [0], [0], [1], [0, 0, 1, 1], [], []>} : vector<16x32xf32>, vector<32x8xf32>, vector<16x8xf32> -> vector<16x8xf32>
    %c0_16 = arith.constant 0 : index
    %c0_17 = arith.constant 0 : index
    %c0_18 = arith.constant 0 : index
    %c0_19 = arith.constant 0 : index
    %15 = vector.load %arg5[%c0_16, %c0_17, %c0_18, %c0_19] : memref<2x4x1x8xf32, #tpu.memory_space<vmem>>, vector<1x1x1x8xf32>
    %16 = vector.shape_cast %15 : vector<1x1x1x8xf32> to vector<1x8xf32>
    %17 = vector.broadcast %16 : vector<1x8xf32> to vector<16x8xf32>
    %18 = arith.addf %14, %17 : vector<16x8xf32>
    %c0_20 = arith.constant 0 : index
    %c0_21 = arith.constant 0 : index
    %c0_22 = arith.constant 0 : index
    %c0_23 = arith.constant 0 : index
    %19 = vector.load %arg6[%c0_20, %c0_21, %c0_22, %c0_23] : memref<2x4x32x8xf32, #tpu.memory_space<vmem>>, vector<1x1x32x8xf32>
    %20 = vector.shape_cast %19 : vector<1x1x32x8xf32> to vector<32x8xf32>
    %cst_24 = arith.constant dense<0.000000e+00> : vector<16x8xf32>
    %21 = tpu.matmul %8, %20, %cst_24 {dimension_numbers = #tpu.dot_dimension_numbers<[1], [0], [0], [1], [0, 0, 1, 1], [], []>} : vector<16x32xf32>, vector<32x8xf32>, vector<16x8xf32> -> vector<16x8xf32>
    %c0_25 = arith.constant 0 : index
    %c0_26 = arith.constant 0 : index
    %c0_27 = arith.constant 0 : index
    %c0_28 = arith.constant 0 : index
    %22 = vector.load %arg7[%c0_25, %c0_26, %c0_27, %c0_28] : memref<2x4x1x8xf32, #tpu.memory_space<vmem>>, vector<1x1x1x8xf32>
    %23 = vector.shape_cast %22 : vector<1x1x1x8xf32> to vector<1x8xf32>
    %24 = vector.broadcast %23 : vector<1x8xf32> to vector<16x8xf32>
    %25 = arith.addf %21, %24 : vector<16x8xf32>
    %c0_29 = arith.constant 0 : index
    %c0_30 = arith.constant 0 : index
    %c0_31 = arith.constant 0 : index
    %c0_32 = arith.constant 0 : index
    %26 = vector.load %arg8[%c0_29, %c0_30, %c0_31, %c0_32] : memref<2x4x32x8xf32, #tpu.memory_space<vmem>>, vector<1x1x32x8xf32>
    %27 = vector.shape_cast %26 : vector<1x1x32x8xf32> to vector<32x8xf32>
    %cst_33 = arith.constant dense<0.000000e+00> : vector<16x8xf32>
    %28 = tpu.matmul %8, %27, %cst_33 {dimension_numbers = #tpu.dot_dimension_numbers<[1], [0], [0], [1], [0, 0, 1, 1], [], []>} : vector<16x32xf32>, vector<32x8xf32>, vector<16x8xf32> -> vector<16x8xf32>
    %c0_34 = arith.constant 0 : index
    %c0_35 = arith.constant 0 : index
    %c0_36 = arith.constant 0 : index
    %c0_37 = arith.constant 0 : index
    %29 = vector.load %arg9[%c0_34, %c0_35, %c0_36, %c0_37] : memref<2x4x1x8xf32, #tpu.memory_space<vmem>>, vector<1x1x1x8xf32>
    %30 = vector.shape_cast %29 : vector<1x1x1x8xf32> to vector<1x8xf32>
    %31 = vector.broadcast %30 : vector<1x8xf32> to vector<16x8xf32>
    %32 = arith.addf %28, %31 : vector<16x8xf32>
    %cst_38 = arith.constant dense<0.000000e+00> : vector<16x16xf32>
    %33 = tpu.matmul %18, %25, %cst_38 {dimension_numbers = #tpu.dot_dimension_numbers<[1], [1], [0], [0], [0, 0, 1, 0], [], []>} : vector<16x8xf32>, vector<16x8xf32>, vector<16x16xf32> -> vector<16x16xf32>
    %cst_39 = arith.constant 0.353553385 : f32
    %34 = vector.broadcast %cst_39 : f32 to vector<16x16xf32>
    %35 = arith.mulf %33, %34 : vector<16x16xf32>
    %36 = arith.addf %35, %7 : vector<16x16xf32>
    %37 = math.exp %36 : vector<16x16xf32>
    %cst_40 = arith.constant dense<0.000000e+00> : vector<16xf32>
    %38 = vector.multi_reduction <add>, %37, %cst_40 [1] : vector<16x16xf32> to vector<16xf32>
    %39 = vector.shape_cast %38 : vector<16xf32> to vector<16x1xf32>
    %40 = tpu.reciprocal %39 {approx = true} : vector<16x1xf32> -> vector<16x1xf32>
    %41 = vector.broadcast %40 : vector<16x1xf32> to vector<16x16xf32>
    %42 = arith.mulf %37, %41 : vector<16x16xf32>
    %cst_41 = arith.constant dense<0.000000e+00> : vector<16x8xf32>
    %43 = tpu.matmul %42, %32, %cst_41 {dimension_numbers = #tpu.dot_dimension_numbers<[1], [0], [0], [1], [0, 0, 1, 1], [], []>} : vector<16x16xf32>, vector<16x8xf32>, vector<16x8xf32> -> vector<16x8xf32>
    %c0_42 = arith.constant 0 : index
    %c0_43 = arith.constant 0 : index
    %c0_44 = arith.constant 0 : index
    %c0_45 = arith.constant 0 : index
    %44 = vector.load %arg10[%c0_42, %c0_43, %c0_44, %c0_45] : memref<2x4x8x32xf32, #tpu.memory_space<vmem>>, vector<1x1x8x32xf32>
    %45 = vector.shape_cast %44 : vector<1x1x8x32xf32> to vector<8x32xf32>
    %cst_46 = arith.constant dense<0.000000e+00> : vector<16x32xf32>
    %46 = tpu.matmul %43, %45, %cst_46 {dimension_numbers = #tpu.dot_dimension_numbers<[1], [0], [0], [1], [0, 0, 1, 1], [], []>} : vector<16x8xf32>, vector<8x32xf32>, vector<16x32xf32> -> vector<16x32xf32>
    %47 = vector.broadcast %11 : vector<1x32xf32> to vector<16x32xf32>
    %48 = arith.addf %47, %46 : vector<16x32xf32>
    %c0_47 = arith.constant 0 : index
    %c1 = arith.constant 1 : index
    %c0_48 = arith.constant 0 : index
    %c0_49 = arith.constant 0 : index
    %49 = vector.load %arg4[%c0_47, %c1, %c0_48, %c0_49] : memref<2x4x32x8xf32, #tpu.memory_space<vmem>>, vector<1x1x32x8xf32>
    %50 = vector.shape_cast %49 : vector<1x1x32x8xf32> to vector<32x8xf32>
    %cst_50 = arith.constant dense<0.000000e+00> : vector<16x8xf32>
    %51 = tpu.matmul %8, %50, %cst_50 {dimension_numbers = #tpu.dot_dimension_numbers<[1], [0], [0], [1], [0, 0, 1, 1], [], []>} : vector<16x32xf32>, vector<32x8xf32>, vector<16x8xf32> -> vector<16x8xf32>
    %c0_51 = arith.constant 0 : index
    %c1_52 = arith.constant 1 : index
    %c0_53 = arith.constant 0 : index
    %c0_54 = arith.constant 0 : index
    %52 = vector.load %arg5[%c0_51, %c1_52, %c0_53, %c0_54] : memref<2x4x1x8xf32, #tpu.memory_space<vmem>>, vector<1x1x1x8xf32>
    %53 = vector.shape_cast %52 : vector<1x1x1x8xf32> to vector<1x8xf32>
    %54 = vector.broadcast %53 : vector<1x8xf32> to vector<16x8xf32>
    %55 = arith.addf %51, %54 : vector<16x8xf32>
    %c0_55 = arith.constant 0 : index
    %c1_56 = arith.constant 1 : index
    %c0_57 = arith.constant 0 : index
    %c0_58 = arith.constant 0 : index
    %56 = vector.load %arg6[%c0_55, %c1_56, %c0_57, %c0_58] : memref<2x4x32x8xf32, #tpu.memory_space<vmem>>, vector<1x1x32x8xf32>
    %57 = vector.shape_cast %56 : vector<1x1x32x8xf32> to vector<32x8xf32>
    %cst_59 = arith.constant dense<0.000000e+00> : vector<16x8xf32>
    %58 = tpu.matmul %8, %57, %cst_59 {dimension_numbers = #tpu.dot_dimension_numbers<[1], [0], [0], [1], [0, 0, 1, 1], [], []>} : vector<16x32xf32>, vector<32x8xf32>, vector<16x8xf32> -> vector<16x8xf32>
    %c0_60 = arith.constant 0 : index
    %c1_61 = arith.constant 1 : index
    %c0_62 = arith.constant 0 : index
    %c0_63 = arith.constant 0 : index
    %59 = vector.load %arg7[%c0_60, %c1_61, %c0_62, %c0_63] : memref<2x4x1x8xf32, #tpu.memory_space<vmem>>, vector<1x1x1x8xf32>
    %60 = vector.shape_cast %59 : vector<1x1x1x8xf32> to vector<1x8xf32>
    %61 = vector.broadcast %60 : vector<1x8xf32> to vector<16x8xf32>
    %62 = arith.addf %58, %61 : vector<16x8xf32>
    %c0_64 = arith.constant 0 : index
    %c1_65 = arith.constant 1 : index
    %c0_66 = arith.constant 0 : index
    %c0_67 = arith.constant 0 : index
    %63 = vector.load %arg8[%c0_64, %c1_65, %c0_66, %c0_67] : memref<2x4x32x8xf32, #tpu.memory_space<vmem>>, vector<1x1x32x8xf32>
    %64 = vector.shape_cast %63 : vector<1x1x32x8xf32> to vector<32x8xf32>
    %cst_68 = arith.constant dense<0.000000e+00> : vector<16x8xf32>
    %65 = tpu.matmul %8, %64, %cst_68 {dimension_numbers = #tpu.dot_dimension_numbers<[1], [0], [0], [1], [0, 0, 1, 1], [], []>} : vector<16x32xf32>, vector<32x8xf32>, vector<16x8xf32> -> vector<16x8xf32>
    %c0_69 = arith.constant 0 : index
    %c1_70 = arith.constant 1 : index
    %c0_71 = arith.constant 0 : index
    %c0_72 = arith.constant 0 : index
    %66 = vector.load %arg9[%c0_69, %c1_70, %c0_71, %c0_72] : memref<2x4x1x8xf32, #tpu.memory_space<vmem>>, vector<1x1x1x8xf32>
    %67 = vector.shape_cast %66 : vector<1x1x1x8xf32> to vector<1x8xf32>
    %68 = vector.broadcast %67 : vector<1x8xf32> to vector<16x8xf32>
    %69 = arith.addf %65, %68 : vector<16x8xf32>
    %cst_73 = arith.constant dense<0.000000e+00> : vector<16x16xf32>
    %70 = tpu.matmul %55, %62, %cst_73 {dimension_numbers = #tpu.dot_dimension_numbers<[1], [1], [0], [0], [0, 0, 1, 0], [], []>} : vector<16x8xf32>, vector<16x8xf32>, vector<16x16xf32> -> vector<16x16xf32>
    %cst_74 = arith.constant 0.353553385 : f32
    %71 = vector.broadcast %cst_74 : f32 to vector<16x16xf32>
    %72 = arith.mulf %70, %71 : vector<16x16xf32>
    %73 = arith.addf %72, %7 : vector<16x16xf32>
    %74 = math.exp %73 : vector<16x16xf32>
    %cst_75 = arith.constant dense<0.000000e+00> : vector<16xf32>
    %75 = vector.multi_reduction <add>, %74, %cst_75 [1] : vector<16x16xf32> to vector<16xf32>
    %76 = vector.shape_cast %75 : vector<16xf32> to vector<16x1xf32>
    %77 = tpu.reciprocal %76 {approx = true} : vector<16x1xf32> -> vector<16x1xf32>
    %78 = vector.broadcast %77 : vector<16x1xf32> to vector<16x16xf32>
    %79 = arith.mulf %74, %78 : vector<16x16xf32>
    %cst_76 = arith.constant dense<0.000000e+00> : vector<16x8xf32>
    %80 = tpu.matmul %79, %69, %cst_76 {dimension_numbers = #tpu.dot_dimension_numbers<[1], [0], [0], [1], [0, 0, 1, 1], [], []>} : vector<16x16xf32>, vector<16x8xf32>, vector<16x8xf32> -> vector<16x8xf32>
    %c0_77 = arith.constant 0 : index
    %c1_78 = arith.constant 1 : index
    %c0_79 = arith.constant 0 : index
    %c0_80 = arith.constant 0 : index
    %81 = vector.load %arg10[%c0_77, %c1_78, %c0_79, %c0_80] : memref<2x4x8x32xf32, #tpu.memory_space<vmem>>, vector<1x1x8x32xf32>
    %82 = vector.shape_cast %81 : vector<1x1x8x32xf32> to vector<8x32xf32>
    %cst_81 = arith.constant dense<0.000000e+00> : vector<16x32xf32>
    %83 = tpu.matmul %80, %82, %cst_81 {dimension_numbers = #tpu.dot_dimension_numbers<[1], [0], [0], [1], [0, 0, 1, 1], [], []>} : vector<16x8xf32>, vector<8x32xf32>, vector<16x32xf32> -> vector<16x32xf32>
    %84 = arith.addf %48, %83 : vector<16x32xf32>
    %c0_82 = arith.constant 0 : index
    %c2 = arith.constant 2 : index
    %c0_83 = arith.constant 0 : index
    %c0_84 = arith.constant 0 : index
    %85 = vector.load %arg4[%c0_82, %c2, %c0_83, %c0_84] : memref<2x4x32x8xf32, #tpu.memory_space<vmem>>, vector<1x1x32x8xf32>
    %86 = vector.shape_cast %85 : vector<1x1x32x8xf32> to vector<32x8xf32>
    %cst_85 = arith.constant dense<0.000000e+00> : vector<16x8xf32>
    %87 = tpu.matmul %8, %86, %cst_85 {dimension_numbers = #tpu.dot_dimension_numbers<[1], [0], [0], [1], [0, 0, 1, 1], [], []>} : vector<16x32xf32>, vector<32x8xf32>, vector<16x8xf32> -> vector<16x8xf32>
    %c0_86 = arith.constant 0 : index
    %c2_87 = arith.constant 2 : index
    %c0_88 = arith.constant 0 : index
    %c0_89 = arith.constant 0 : index
    %88 = vector.load %arg5[%c0_86, %c2_87, %c0_88, %c0_89] : memref<2x4x1x8xf32, #tpu.memory_space<vmem>>, vector<1x1x1x8xf32>
    %89 = vector.shape_cast %88 : vector<1x1x1x8xf32> to vector<1x8xf32>
    %90 = vector.broadcast %89 : vector<1x8xf32> to vector<16x8xf32>
    %91 = arith.addf %87, %90 : vector<16x8xf32>
    %c0_90 = arith.constant 0 : index
    %c2_91 = arith.constant 2 : index
    %c0_92 = arith.constant 0 : index
    %c0_93 = arith.constant 0 : index
    %92 = vector.load %arg6[%c0_90, %c2_91, %c0_92, %c0_93] : memref<2x4x32x8xf32, #tpu.memory_space<vmem>>, vector<1x1x32x8xf32>
    %93 = vector.shape_cast %92 : vector<1x1x32x8xf32> to vector<32x8xf32>
    %cst_94 = arith.constant dense<0.000000e+00> : vector<16x8xf32>
    %94 = tpu.matmul %8, %93, %cst_94 {dimension_numbers = #tpu.dot_dimension_numbers<[1], [0], [0], [1], [0, 0, 1, 1], [], []>} : vector<16x32xf32>, vector<32x8xf32>, vector<16x8xf32> -> vector<16x8xf32>
    %c0_95 = arith.constant 0 : index
    %c2_96 = arith.constant 2 : index
    %c0_97 = arith.constant 0 : index
    %c0_98 = arith.constant 0 : index
    %95 = vector.load %arg7[%c0_95, %c2_96, %c0_97, %c0_98] : memref<2x4x1x8xf32, #tpu.memory_space<vmem>>, vector<1x1x1x8xf32>
    %96 = vector.shape_cast %95 : vector<1x1x1x8xf32> to vector<1x8xf32>
    %97 = vector.broadcast %96 : vector<1x8xf32> to vector<16x8xf32>
    %98 = arith.addf %94, %97 : vector<16x8xf32>
    %c0_99 = arith.constant 0 : index
    %c2_100 = arith.constant 2 : index
    %c0_101 = arith.constant 0 : index
    %c0_102 = arith.constant 0 : index
    %99 = vector.load %arg8[%c0_99, %c2_100, %c0_101, %c0_102] : memref<2x4x32x8xf32, #tpu.memory_space<vmem>>, vector<1x1x32x8xf32>
    %100 = vector.shape_cast %99 : vector<1x1x32x8xf32> to vector<32x8xf32>
    %cst_103 = arith.constant dense<0.000000e+00> : vector<16x8xf32>
    %101 = tpu.matmul %8, %100, %cst_103 {dimension_numbers = #tpu.dot_dimension_numbers<[1], [0], [0], [1], [0, 0, 1, 1], [], []>} : vector<16x32xf32>, vector<32x8xf32>, vector<16x8xf32> -> vector<16x8xf32>
    %c0_104 = arith.constant 0 : index
    %c2_105 = arith.constant 2 : index
    %c0_106 = arith.constant 0 : index
    %c0_107 = arith.constant 0 : index
    %102 = vector.load %arg9[%c0_104, %c2_105, %c0_106, %c0_107] : memref<2x4x1x8xf32, #tpu.memory_space<vmem>>, vector<1x1x1x8xf32>
    %103 = vector.shape_cast %102 : vector<1x1x1x8xf32> to vector<1x8xf32>
    %104 = vector.broadcast %103 : vector<1x8xf32> to vector<16x8xf32>
    %105 = arith.addf %101, %104 : vector<16x8xf32>
    %cst_108 = arith.constant dense<0.000000e+00> : vector<16x16xf32>
    %106 = tpu.matmul %91, %98, %cst_108 {dimension_numbers = #tpu.dot_dimension_numbers<[1], [1], [0], [0], [0, 0, 1, 0], [], []>} : vector<16x8xf32>, vector<16x8xf32>, vector<16x16xf32> -> vector<16x16xf32>
    %cst_109 = arith.constant 0.353553385 : f32
    %107 = vector.broadcast %cst_109 : f32 to vector<16x16xf32>
    %108 = arith.mulf %106, %107 : vector<16x16xf32>
    %109 = arith.addf %108, %7 : vector<16x16xf32>
    %110 = math.exp %109 : vector<16x16xf32>
    %cst_110 = arith.constant dense<0.000000e+00> : vector<16xf32>
    %111 = vector.multi_reduction <add>, %110, %cst_110 [1] : vector<16x16xf32> to vector<16xf32>
    %112 = vector.shape_cast %111 : vector<16xf32> to vector<16x1xf32>
    %113 = tpu.reciprocal %112 {approx = true} : vector<16x1xf32> -> vector<16x1xf32>
    %114 = vector.broadcast %113 : vector<16x1xf32> to vector<16x16xf32>
    %115 = arith.mulf %110, %114 : vector<16x16xf32>
    %cst_111 = arith.constant dense<0.000000e+00> : vector<16x8xf32>
    %116 = tpu.matmul %115, %105, %cst_111 {dimension_numbers = #tpu.dot_dimension_numbers<[1], [0], [0], [1], [0, 0, 1, 1], [], []>} : vector<16x16xf32>, vector<16x8xf32>, vector<16x8xf32> -> vector<16x8xf32>
    %c0_112 = arith.constant 0 : index
    %c2_113 = arith.constant 2 : index
    %c0_114 = arith.constant 0 : index
    %c0_115 = arith.constant 0 : index
    %117 = vector.load %arg10[%c0_112, %c2_113, %c0_114, %c0_115] : memref<2x4x8x32xf32, #tpu.memory_space<vmem>>, vector<1x1x8x32xf32>
    %118 = vector.shape_cast %117 : vector<1x1x8x32xf32> to vector<8x32xf32>
    %cst_116 = arith.constant dense<0.000000e+00> : vector<16x32xf32>
    %119 = tpu.matmul %116, %118, %cst_116 {dimension_numbers = #tpu.dot_dimension_numbers<[1], [0], [0], [1], [0, 0, 1, 1], [], []>} : vector<16x8xf32>, vector<8x32xf32>, vector<16x32xf32> -> vector<16x32xf32>
    %120 = arith.addf %84, %119 : vector<16x32xf32>
    %c0_117 = arith.constant 0 : index
    %c3 = arith.constant 3 : index
    %c0_118 = arith.constant 0 : index
    %c0_119 = arith.constant 0 : index
    %121 = vector.load %arg4[%c0_117, %c3, %c0_118, %c0_119] : memref<2x4x32x8xf32, #tpu.memory_space<vmem>>, vector<1x1x32x8xf32>
    %122 = vector.shape_cast %121 : vector<1x1x32x8xf32> to vector<32x8xf32>
    %cst_120 = arith.constant dense<0.000000e+00> : vector<16x8xf32>
    %123 = tpu.matmul %8, %122, %cst_120 {dimension_numbers = #tpu.dot_dimension_numbers<[1], [0], [0], [1], [0, 0, 1, 1], [], []>} : vector<16x32xf32>, vector<32x8xf32>, vector<16x8xf32> -> vector<16x8xf32>
    %c0_121 = arith.constant 0 : index
    %c3_122 = arith.constant 3 : index
    %c0_123 = arith.constant 0 : index
    %c0_124 = arith.constant 0 : index
    %124 = vector.load %arg5[%c0_121, %c3_122, %c0_123, %c0_124] : memref<2x4x1x8xf32, #tpu.memory_space<vmem>>, vector<1x1x1x8xf32>
    %125 = vector.shape_cast %124 : vector<1x1x1x8xf32> to vector<1x8xf32>
    %126 = vector.broadcast %125 : vector<1x8xf32> to vector<16x8xf32>
    %127 = arith.addf %123, %126 : vector<16x8xf32>
    %c0_125 = arith.constant 0 : index
    %c3_126 = arith.constant 3 : index
    %c0_127 = arith.constant 0 : index
    %c0_128 = arith.constant 0 : index
    %128 = vector.load %arg6[%c0_125, %c3_126, %c0_127, %c0_128] : memref<2x4x32x8xf32, #tpu.memory_space<vmem>>, vector<1x1x32x8xf32>
    %129 = vector.shape_cast %128 : vector<1x1x32x8xf32> to vector<32x8xf32>
    %cst_129 = arith.constant dense<0.000000e+00> : vector<16x8xf32>
    %130 = tpu.matmul %8, %129, %cst_129 {dimension_numbers = #tpu.dot_dimension_numbers<[1], [0], [0], [1], [0, 0, 1, 1], [], []>} : vector<16x32xf32>, vector<32x8xf32>, vector<16x8xf32> -> vector<16x8xf32>
    %c0_130 = arith.constant 0 : index
    %c3_131 = arith.constant 3 : index
    %c0_132 = arith.constant 0 : index
    %c0_133 = arith.constant 0 : index
    %131 = vector.load %arg7[%c0_130, %c3_131, %c0_132, %c0_133] : memref<2x4x1x8xf32, #tpu.memory_space<vmem>>, vector<1x1x1x8xf32>
    %132 = vector.shape_cast %131 : vector<1x1x1x8xf32> to vector<1x8xf32>
    %133 = vector.broadcast %132 : vector<1x8xf32> to vector<16x8xf32>
    %134 = arith.addf %130, %133 : vector<16x8xf32>
    %c0_134 = arith.constant 0 : index
    %c3_135 = arith.constant 3 : index
    %c0_136 = arith.constant 0 : index
    %c0_137 = arith.constant 0 : index
    %135 = vector.load %arg8[%c0_134, %c3_135, %c0_136, %c0_137] : memref<2x4x32x8xf32, #tpu.memory_space<vmem>>, vector<1x1x32x8xf32>
    %136 = vector.shape_cast %135 : vector<1x1x32x8xf32> to vector<32x8xf32>
    %cst_138 = arith.constant dense<0.000000e+00> : vector<16x8xf32>
    %137 = tpu.matmul %8, %136, %cst_138 {dimension_numbers = #tpu.dot_dimension_numbers<[1], [0], [0], [1], [0, 0, 1, 1], [], []>} : vector<16x32xf32>, vector<32x8xf32>, vector<16x8xf32> -> vector<16x8xf32>
    %c0_139 = arith.constant 0 : index
    %c3_140 = arith.constant 3 : index
    %c0_141 = arith.constant 0 : index
    %c0_142 = arith.constant 0 : index
    %138 = vector.load %arg9[%c0_139, %c3_140, %c0_141, %c0_142] : memref<2x4x1x8xf32, #tpu.memory_space<vmem>>, vector<1x1x1x8xf32>
    %139 = vector.shape_cast %138 : vector<1x1x1x8xf32> to vector<1x8xf32>
    %140 = vector.broadcast %139 : vector<1x8xf32> to vector<16x8xf32>
    %141 = arith.addf %137, %140 : vector<16x8xf32>
    %cst_143 = arith.constant dense<0.000000e+00> : vector<16x16xf32>
    %142 = tpu.matmul %127, %134, %cst_143 {dimension_numbers = #tpu.dot_dimension_numbers<[1], [1], [0], [0], [0, 0, 1, 0], [], []>} : vector<16x8xf32>, vector<16x8xf32>, vector<16x16xf32> -> vector<16x16xf32>
    %cst_144 = arith.constant 0.353553385 : f32
    %143 = vector.broadcast %cst_144 : f32 to vector<16x16xf32>
    %144 = arith.mulf %142, %143 : vector<16x16xf32>
    %145 = arith.addf %144, %7 : vector<16x16xf32>
    %146 = math.exp %145 : vector<16x16xf32>
    %cst_145 = arith.constant dense<0.000000e+00> : vector<16xf32>
    %147 = vector.multi_reduction <add>, %146, %cst_145 [1] : vector<16x16xf32> to vector<16xf32>
    %148 = vector.shape_cast %147 : vector<16xf32> to vector<16x1xf32>
    %149 = tpu.reciprocal %148 {approx = true} : vector<16x1xf32> -> vector<16x1xf32>
    %150 = vector.broadcast %149 : vector<16x1xf32> to vector<16x16xf32>
    %151 = arith.mulf %146, %150 : vector<16x16xf32>
    %cst_146 = arith.constant dense<0.000000e+00> : vector<16x8xf32>
    %152 = tpu.matmul %151, %141, %cst_146 {dimension_numbers = #tpu.dot_dimension_numbers<[1], [0], [0], [1], [0, 0, 1, 1], [], []>} : vector<16x16xf32>, vector<16x8xf32>, vector<16x8xf32> -> vector<16x8xf32>
    %c0_147 = arith.constant 0 : index
    %c3_148 = arith.constant 3 : index
    %c0_149 = arith.constant 0 : index
    %c0_150 = arith.constant 0 : index
    %153 = vector.load %arg10[%c0_147, %c3_148, %c0_149, %c0_150] : memref<2x4x8x32xf32, #tpu.memory_space<vmem>>, vector<1x1x8x32xf32>
    %154 = vector.shape_cast %153 : vector<1x1x8x32xf32> to vector<8x32xf32>
    %cst_151 = arith.constant dense<0.000000e+00> : vector<16x32xf32>
    %155 = tpu.matmul %152, %154, %cst_151 {dimension_numbers = #tpu.dot_dimension_numbers<[1], [0], [0], [1], [0, 0, 1, 1], [], []>} : vector<16x8xf32>, vector<8x32xf32>, vector<16x32xf32> -> vector<16x32xf32>
    %156 = arith.addf %120, %155 : vector<16x32xf32>
    %157 = arith.addf %156, %8 : vector<16x32xf32>
    %c0_152 = arith.constant 0 : index
    %c0_153 = arith.constant 0 : index
    %c0_154 = arith.constant 0 : index
    %158 = vector.load %arg12[%c0_152, %c0_153, %c0_154] : memref<2x1x32xf32, #tpu.memory_space<vmem>>, vector<1x1x32xf32>
    %159 = vector.shape_cast %158 : vector<1x1x32xf32> to vector<1x32xf32>
    %c0_155 = arith.constant 0 : index
    %c0_156 = arith.constant 0 : index
    %c0_157 = arith.constant 0 : index
    %160 = vector.load %arg13[%c0_155, %c0_156, %c0_157] : memref<2x1x32xf32, #tpu.memory_space<vmem>>, vector<1x1x32xf32>
    %161 = vector.shape_cast %160 : vector<1x1x32xf32> to vector<1x32xf32>
    %cst_158 = arith.constant dense<0.000000e+00> : vector<16xf32>
    %162 = vector.multi_reduction <add>, %157, %cst_158 [1] : vector<16x32xf32> to vector<16xf32>
    %163 = vector.shape_cast %162 : vector<16xf32> to vector<16x1xf32>
    %cst_159 = arith.constant 3.200000e+01 : f32
    %164 = vector.broadcast %cst_159 : f32 to vector<16x1xf32>
    %165 = arith.divf %163, %164 : vector<16x1xf32>
    %166 = vector.broadcast %165 : vector<16x1xf32> to vector<16x32xf32>
    %167 = arith.subf %157, %166 : vector<16x32xf32>
    %168 = arith.mulf %167, %167 : vector<16x32xf32>
    %cst_160 = arith.constant dense<0.000000e+00> : vector<16xf32>
    %169 = vector.multi_reduction <add>, %168, %cst_160 [1] : vector<16x32xf32> to vector<16xf32>
    %170 = vector.shape_cast %169 : vector<16xf32> to vector<16x1xf32>
    %cst_161 = arith.constant 3.200000e+01 : f32
    %171 = vector.broadcast %cst_161 : f32 to vector<16x1xf32>
    %172 = arith.divf %170, %171 : vector<16x1xf32>
    %173 = vector.broadcast %165 : vector<16x1xf32> to vector<16x32xf32>
    %174 = arith.subf %157, %173 : vector<16x32xf32>
    %cst_162 = arith.constant 9.99999974E-6 : f32
    %175 = vector.broadcast %cst_162 : f32 to vector<16x1xf32>
    %176 = arith.addf %172, %175 : vector<16x1xf32>
    %177 = math.rsqrt %176 : vector<16x1xf32>
    %178 = vector.broadcast %177 : vector<16x1xf32> to vector<16x32xf32>
    %179 = arith.mulf %174, %178 : vector<16x32xf32>
    %180 = vector.broadcast %159 : vector<1x32xf32> to vector<16x32xf32>
    %181 = arith.mulf %179, %180 : vector<16x32xf32>
    %182 = vector.broadcast %161 : vector<1x32xf32> to vector<16x32xf32>
    %183 = arith.addf %181, %182 : vector<16x32xf32>
    %c0_163 = arith.constant 0 : index
    %c0_164 = arith.constant 0 : index
    %c0_165 = arith.constant 0 : index
    %184 = vector.load %arg14[%c0_163, %c0_164, %c0_165] : memref<2x32x64xf32, #tpu.memory_space<vmem>>, vector<1x32x64xf32>
    %185 = vector.shape_cast %184 : vector<1x32x64xf32> to vector<32x64xf32>
    %cst_166 = arith.constant dense<0.000000e+00> : vector<16x64xf32>
    %186 = tpu.matmul %183, %185, %cst_166 {dimension_numbers = #tpu.dot_dimension_numbers<[1], [0], [0], [1], [0, 0, 1, 1], [], []>} : vector<16x32xf32>, vector<32x64xf32>, vector<16x64xf32> -> vector<16x64xf32>
    %c0_167 = arith.constant 0 : index
    %c0_168 = arith.constant 0 : index
    %c0_169 = arith.constant 0 : index
    %187 = vector.load %arg15[%c0_167, %c0_168, %c0_169] : memref<2x1x64xf32, #tpu.memory_space<vmem>>, vector<1x1x64xf32>
    %188 = vector.shape_cast %187 : vector<1x1x64xf32> to vector<1x64xf32>
    %189 = vector.broadcast %188 : vector<1x64xf32> to vector<16x64xf32>
    %190 = arith.addf %186, %189 : vector<16x64xf32>
    %cst_170 = arith.constant 5.000000e-01 : f32
    %191 = vector.broadcast %cst_170 : f32 to vector<16x64xf32>
    %192 = arith.mulf %191, %190 : vector<16x64xf32>
    %cst_171 = arith.constant 0.707106769 : f32
    %193 = vector.broadcast %cst_171 : f32 to vector<16x64xf32>
    %194 = arith.mulf %190, %193 : vector<16x64xf32>
    %195 = math.erf %194 : vector<16x64xf32>
    %cst_172 = arith.constant 1.000000e+00 : f32
    %196 = vector.broadcast %cst_172 : f32 to vector<16x64xf32>
    %197 = arith.addf %196, %195 : vector<16x64xf32>
    %198 = arith.mulf %192, %197 : vector<16x64xf32>
    %c0_173 = arith.constant 0 : index
    %c0_174 = arith.constant 0 : index
    %c0_175 = arith.constant 0 : index
    %199 = vector.load %arg16[%c0_173, %c0_174, %c0_175] : memref<2x64x32xf32, #tpu.memory_space<vmem>>, vector<1x64x32xf32>
    %200 = vector.shape_cast %199 : vector<1x64x32xf32> to vector<64x32xf32>
    %cst_176 = arith.constant dense<0.000000e+00> : vector<16x32xf32>
    %201 = tpu.matmul %198, %200, %cst_176 {dimension_numbers = #tpu.dot_dimension_numbers<[1], [0], [0], [1], [0, 0, 1, 1], [], []>} : vector<16x64xf32>, vector<64x32xf32>, vector<16x32xf32> -> vector<16x32xf32>
    %c0_177 = arith.constant 0 : index
    %c0_178 = arith.constant 0 : index
    %c0_179 = arith.constant 0 : index
    %202 = vector.load %arg17[%c0_177, %c0_178, %c0_179] : memref<2x1x32xf32, #tpu.memory_space<vmem>>, vector<1x1x32xf32>
    %203 = vector.shape_cast %202 : vector<1x1x32xf32> to vector<1x32xf32>
    %204 = vector.broadcast %203 : vector<1x32xf32> to vector<16x32xf32>
    %205 = arith.addf %201, %204 : vector<16x32xf32>
    %206 = arith.addf %205, %183 : vector<16x32xf32>
    %c0_180 = arith.constant 0 : index
    %c0_181 = arith.constant 0 : index
    %c0_182 = arith.constant 0 : index
    %207 = vector.load %arg18[%c0_180, %c0_181, %c0_182] : memref<2x1x32xf32, #tpu.memory_space<vmem>>, vector<1x1x32xf32>
    %208 = vector.shape_cast %207 : vector<1x1x32xf32> to vector<1x32xf32>
    %c0_183 = arith.constant 0 : index
    %c0_184 = arith.constant 0 : index
    %c0_185 = arith.constant 0 : index
    %209 = vector.load %arg19[%c0_183, %c0_184, %c0_185] : memref<2x1x32xf32, #tpu.memory_space<vmem>>, vector<1x1x32xf32>
    %210 = vector.shape_cast %209 : vector<1x1x32xf32> to vector<1x32xf32>
    %cst_186 = arith.constant dense<0.000000e+00> : vector<16xf32>
    %211 = vector.multi_reduction <add>, %206, %cst_186 [1] : vector<16x32xf32> to vector<16xf32>
    %212 = vector.shape_cast %211 : vector<16xf32> to vector<16x1xf32>
    %cst_187 = arith.constant 3.200000e+01 : f32
    %213 = vector.broadcast %cst_187 : f32 to vector<16x1xf32>
    %214 = arith.divf %212, %213 : vector<16x1xf32>
    %215 = vector.broadcast %214 : vector<16x1xf32> to vector<16x32xf32>
    %216 = arith.subf %206, %215 : vector<16x32xf32>
    %217 = arith.mulf %216, %216 : vector<16x32xf32>
    %cst_188 = arith.constant dense<0.000000e+00> : vector<16xf32>
    %218 = vector.multi_reduction <add>, %217, %cst_188 [1] : vector<16x32xf32> to vector<16xf32>
    %219 = vector.shape_cast %218 : vector<16xf32> to vector<16x1xf32>
    %cst_189 = arith.constant 3.200000e+01 : f32
    %220 = vector.broadcast %cst_189 : f32 to vector<16x1xf32>
    %221 = arith.divf %219, %220 : vector<16x1xf32>
    %222 = vector.broadcast %214 : vector<16x1xf32> to vector<16x32xf32>
    %223 = arith.subf %206, %222 : vector<16x32xf32>
    %cst_190 = arith.constant 9.99999974E-6 : f32
    %224 = vector.broadcast %cst_190 : f32 to vector<16x1xf32>
    %225 = arith.addf %221, %224 : vector<16x1xf32>
    %226 = math.rsqrt %225 : vector<16x1xf32>
    %227 = vector.broadcast %226 : vector<16x1xf32> to vector<16x32xf32>
    %228 = arith.mulf %223, %227 : vector<16x32xf32>
    %229 = vector.broadcast %208 : vector<1x32xf32> to vector<16x32xf32>
    %230 = arith.mulf %228, %229 : vector<16x32xf32>
    %231 = vector.broadcast %210 : vector<1x32xf32> to vector<16x32xf32>
    %232 = arith.addf %230, %231 : vector<16x32xf32>
    %233 = vector.broadcast %9 : vector<1x32xf32> to vector<16x32xf32>
    %234 = arith.mulf %232, %233 : vector<16x32xf32>
    %c1_191 = arith.constant 1 : index
    %c0_192 = arith.constant 0 : index
    %c0_193 = arith.constant 0 : index
    %235 = vector.load %arg11[%c1_191, %c0_192, %c0_193] : memref<2x1x32xf32, #tpu.memory_space<vmem>>, vector<1x1x32xf32>
    %236 = vector.shape_cast %235 : vector<1x1x32xf32> to vector<1x32xf32>
    %c1_194 = arith.constant 1 : index
    %c0_195 = arith.constant 0 : index
    %c0_196 = arith.constant 0 : index
    %c0_197 = arith.constant 0 : index
    %237 = vector.load %arg4[%c1_194, %c0_195, %c0_196, %c0_197] : memref<2x4x32x8xf32, #tpu.memory_space<vmem>>, vector<1x1x32x8xf32>
    %238 = vector.shape_cast %237 : vector<1x1x32x8xf32> to vector<32x8xf32>
    %cst_198 = arith.constant dense<0.000000e+00> : vector<16x8xf32>
    %239 = tpu.matmul %234, %238, %cst_198 {dimension_numbers = #tpu.dot_dimension_numbers<[1], [0], [0], [1], [0, 0, 1, 1], [], []>} : vector<16x32xf32>, vector<32x8xf32>, vector<16x8xf32> -> vector<16x8xf32>
    %c1_199 = arith.constant 1 : index
    %c0_200 = arith.constant 0 : index
    %c0_201 = arith.constant 0 : index
    %c0_202 = arith.constant 0 : index
    %240 = vector.load %arg5[%c1_199, %c0_200, %c0_201, %c0_202] : memref<2x4x1x8xf32, #tpu.memory_space<vmem>>, vector<1x1x1x8xf32>
    %241 = vector.shape_cast %240 : vector<1x1x1x8xf32> to vector<1x8xf32>
    %242 = vector.broadcast %241 : vector<1x8xf32> to vector<16x8xf32>
    %243 = arith.addf %239, %242 : vector<16x8xf32>
    %c1_203 = arith.constant 1 : index
    %c0_204 = arith.constant 0 : index
    %c0_205 = arith.constant 0 : index
    %c0_206 = arith.constant 0 : index
    %244 = vector.load %arg6[%c1_203, %c0_204, %c0_205, %c0_206] : memref<2x4x32x8xf32, #tpu.memory_space<vmem>>, vector<1x1x32x8xf32>
    %245 = vector.shape_cast %244 : vector<1x1x32x8xf32> to vector<32x8xf32>
    %cst_207 = arith.constant dense<0.000000e+00> : vector<16x8xf32>
    %246 = tpu.matmul %234, %245, %cst_207 {dimension_numbers = #tpu.dot_dimension_numbers<[1], [0], [0], [1], [0, 0, 1, 1], [], []>} : vector<16x32xf32>, vector<32x8xf32>, vector<16x8xf32> -> vector<16x8xf32>
    %c1_208 = arith.constant 1 : index
    %c0_209 = arith.constant 0 : index
    %c0_210 = arith.constant 0 : index
    %c0_211 = arith.constant 0 : index
    %247 = vector.load %arg7[%c1_208, %c0_209, %c0_210, %c0_211] : memref<2x4x1x8xf32, #tpu.memory_space<vmem>>, vector<1x1x1x8xf32>
    %248 = vector.shape_cast %247 : vector<1x1x1x8xf32> to vector<1x8xf32>
    %249 = vector.broadcast %248 : vector<1x8xf32> to vector<16x8xf32>
    %250 = arith.addf %246, %249 : vector<16x8xf32>
    %c1_212 = arith.constant 1 : index
    %c0_213 = arith.constant 0 : index
    %c0_214 = arith.constant 0 : index
    %c0_215 = arith.constant 0 : index
    %251 = vector.load %arg8[%c1_212, %c0_213, %c0_214, %c0_215] : memref<2x4x32x8xf32, #tpu.memory_space<vmem>>, vector<1x1x32x8xf32>
    %252 = vector.shape_cast %251 : vector<1x1x32x8xf32> to vector<32x8xf32>
    %cst_216 = arith.constant dense<0.000000e+00> : vector<16x8xf32>
    %253 = tpu.matmul %234, %252, %cst_216 {dimension_numbers = #tpu.dot_dimension_numbers<[1], [0], [0], [1], [0, 0, 1, 1], [], []>} : vector<16x32xf32>, vector<32x8xf32>, vector<16x8xf32> -> vector<16x8xf32>
    %c1_217 = arith.constant 1 : index
    %c0_218 = arith.constant 0 : index
    %c0_219 = arith.constant 0 : index
    %c0_220 = arith.constant 0 : index
    %254 = vector.load %arg9[%c1_217, %c0_218, %c0_219, %c0_220] : memref<2x4x1x8xf32, #tpu.memory_space<vmem>>, vector<1x1x1x8xf32>
    %255 = vector.shape_cast %254 : vector<1x1x1x8xf32> to vector<1x8xf32>
    %256 = vector.broadcast %255 : vector<1x8xf32> to vector<16x8xf32>
    %257 = arith.addf %253, %256 : vector<16x8xf32>
    %cst_221 = arith.constant dense<0.000000e+00> : vector<16x16xf32>
    %258 = tpu.matmul %243, %250, %cst_221 {dimension_numbers = #tpu.dot_dimension_numbers<[1], [1], [0], [0], [0, 0, 1, 0], [], []>} : vector<16x8xf32>, vector<16x8xf32>, vector<16x16xf32> -> vector<16x16xf32>
    %cst_222 = arith.constant 0.353553385 : f32
    %259 = vector.broadcast %cst_222 : f32 to vector<16x16xf32>
    %260 = arith.mulf %258, %259 : vector<16x16xf32>
    %261 = arith.addf %260, %7 : vector<16x16xf32>
    %262 = math.exp %261 : vector<16x16xf32>
    %cst_223 = arith.constant dense<0.000000e+00> : vector<16xf32>
    %263 = vector.multi_reduction <add>, %262, %cst_223 [1] : vector<16x16xf32> to vector<16xf32>
    %264 = vector.shape_cast %263 : vector<16xf32> to vector<16x1xf32>
    %265 = tpu.reciprocal %264 {approx = true} : vector<16x1xf32> -> vector<16x1xf32>
    %266 = vector.broadcast %265 : vector<16x1xf32> to vector<16x16xf32>
    %267 = arith.mulf %262, %266 : vector<16x16xf32>
    %cst_224 = arith.constant dense<0.000000e+00> : vector<16x8xf32>
    %268 = tpu.matmul %267, %257, %cst_224 {dimension_numbers = #tpu.dot_dimension_numbers<[1], [0], [0], [1], [0, 0, 1, 1], [], []>} : vector<16x16xf32>, vector<16x8xf32>, vector<16x8xf32> -> vector<16x8xf32>
    %c1_225 = arith.constant 1 : index
    %c0_226 = arith.constant 0 : index
    %c0_227 = arith.constant 0 : index
    %c0_228 = arith.constant 0 : index
    %269 = vector.load %arg10[%c1_225, %c0_226, %c0_227, %c0_228] : memref<2x4x8x32xf32, #tpu.memory_space<vmem>>, vector<1x1x8x32xf32>
    %270 = vector.shape_cast %269 : vector<1x1x8x32xf32> to vector<8x32xf32>
    %cst_229 = arith.constant dense<0.000000e+00> : vector<16x32xf32>
    %271 = tpu.matmul %268, %270, %cst_229 {dimension_numbers = #tpu.dot_dimension_numbers<[1], [0], [0], [1], [0, 0, 1, 1], [], []>} : vector<16x8xf32>, vector<8x32xf32>, vector<16x32xf32> -> vector<16x32xf32>
    %272 = vector.broadcast %236 : vector<1x32xf32> to vector<16x32xf32>
    %273 = arith.addf %272, %271 : vector<16x32xf32>
    %c1_230 = arith.constant 1 : index
    %c1_231 = arith.constant 1 : index
    %c0_232 = arith.constant 0 : index
    %c0_233 = arith.constant 0 : index
    %274 = vector.load %arg4[%c1_230, %c1_231, %c0_232, %c0_233] : memref<2x4x32x8xf32, #tpu.memory_space<vmem>>, vector<1x1x32x8xf32>
    %275 = vector.shape_cast %274 : vector<1x1x32x8xf32> to vector<32x8xf32>
    %cst_234 = arith.constant dense<0.000000e+00> : vector<16x8xf32>
    %276 = tpu.matmul %234, %275, %cst_234 {dimension_numbers = #tpu.dot_dimension_numbers<[1], [0], [0], [1], [0, 0, 1, 1], [], []>} : vector<16x32xf32>, vector<32x8xf32>, vector<16x8xf32> -> vector<16x8xf32>
    %c1_235 = arith.constant 1 : index
    %c1_236 = arith.constant 1 : index
    %c0_237 = arith.constant 0 : index
    %c0_238 = arith.constant 0 : index
    %277 = vector.load %arg5[%c1_235, %c1_236, %c0_237, %c0_238] : memref<2x4x1x8xf32, #tpu.memory_space<vmem>>, vector<1x1x1x8xf32>
    %278 = vector.shape_cast %277 : vector<1x1x1x8xf32> to vector<1x8xf32>
    %279 = vector.broadcast %278 : vector<1x8xf32> to vector<16x8xf32>
    %280 = arith.addf %276, %279 : vector<16x8xf32>
    %c1_239 = arith.constant 1 : index
    %c1_240 = arith.constant 1 : index
    %c0_241 = arith.constant 0 : index
    %c0_242 = arith.constant 0 : index
    %281 = vector.load %arg6[%c1_239, %c1_240, %c0_241, %c0_242] : memref<2x4x32x8xf32, #tpu.memory_space<vmem>>, vector<1x1x32x8xf32>
    %282 = vector.shape_cast %281 : vector<1x1x32x8xf32> to vector<32x8xf32>
    %cst_243 = arith.constant dense<0.000000e+00> : vector<16x8xf32>
    %283 = tpu.matmul %234, %282, %cst_243 {dimension_numbers = #tpu.dot_dimension_numbers<[1], [0], [0], [1], [0, 0, 1, 1], [], []>} : vector<16x32xf32>, vector<32x8xf32>, vector<16x8xf32> -> vector<16x8xf32>
    %c1_244 = arith.constant 1 : index
    %c1_245 = arith.constant 1 : index
    %c0_246 = arith.constant 0 : index
    %c0_247 = arith.constant 0 : index
    %284 = vector.load %arg7[%c1_244, %c1_245, %c0_246, %c0_247] : memref<2x4x1x8xf32, #tpu.memory_space<vmem>>, vector<1x1x1x8xf32>
    %285 = vector.shape_cast %284 : vector<1x1x1x8xf32> to vector<1x8xf32>
    %286 = vector.broadcast %285 : vector<1x8xf32> to vector<16x8xf32>
    %287 = arith.addf %283, %286 : vector<16x8xf32>
    %c1_248 = arith.constant 1 : index
    %c1_249 = arith.constant 1 : index
    %c0_250 = arith.constant 0 : index
    %c0_251 = arith.constant 0 : index
    %288 = vector.load %arg8[%c1_248, %c1_249, %c0_250, %c0_251] : memref<2x4x32x8xf32, #tpu.memory_space<vmem>>, vector<1x1x32x8xf32>
    %289 = vector.shape_cast %288 : vector<1x1x32x8xf32> to vector<32x8xf32>
    %cst_252 = arith.constant dense<0.000000e+00> : vector<16x8xf32>
    %290 = tpu.matmul %234, %289, %cst_252 {dimension_numbers = #tpu.dot_dimension_numbers<[1], [0], [0], [1], [0, 0, 1, 1], [], []>} : vector<16x32xf32>, vector<32x8xf32>, vector<16x8xf32> -> vector<16x8xf32>
    %c1_253 = arith.constant 1 : index
    %c1_254 = arith.constant 1 : index
    %c0_255 = arith.constant 0 : index
    %c0_256 = arith.constant 0 : index
    %291 = vector.load %arg9[%c1_253, %c1_254, %c0_255, %c0_256] : memref<2x4x1x8xf32, #tpu.memory_space<vmem>>, vector<1x1x1x8xf32>
    %292 = vector.shape_cast %291 : vector<1x1x1x8xf32> to vector<1x8xf32>
    %293 = vector.broadcast %292 : vector<1x8xf32> to vector<16x8xf32>
    %294 = arith.addf %290, %293 : vector<16x8xf32>
    %cst_257 = arith.constant dense<0.000000e+00> : vector<16x16xf32>
    %295 = tpu.matmul %280, %287, %cst_257 {dimension_numbers = #tpu.dot_dimension_numbers<[1], [1], [0], [0], [0, 0, 1, 0], [], []>} : vector<16x8xf32>, vector<16x8xf32>, vector<16x16xf32> -> vector<16x16xf32>
    %cst_258 = arith.constant 0.353553385 : f32
    %296 = vector.broadcast %cst_258 : f32 to vector<16x16xf32>
    %297 = arith.mulf %295, %296 : vector<16x16xf32>
    %298 = arith.addf %297, %7 : vector<16x16xf32>
    %299 = math.exp %298 : vector<16x16xf32>
    %cst_259 = arith.constant dense<0.000000e+00> : vector<16xf32>
    %300 = vector.multi_reduction <add>, %299, %cst_259 [1] : vector<16x16xf32> to vector<16xf32>
    %301 = vector.shape_cast %300 : vector<16xf32> to vector<16x1xf32>
    %302 = tpu.reciprocal %301 {approx = true} : vector<16x1xf32> -> vector<16x1xf32>
    %303 = vector.broadcast %302 : vector<16x1xf32> to vector<16x16xf32>
    %304 = arith.mulf %299, %303 : vector<16x16xf32>
    %cst_260 = arith.constant dense<0.000000e+00> : vector<16x8xf32>
    %305 = tpu.matmul %304, %294, %cst_260 {dimension_numbers = #tpu.dot_dimension_numbers<[1], [0], [0], [1], [0, 0, 1, 1], [], []>} : vector<16x16xf32>, vector<16x8xf32>, vector<16x8xf32> -> vector<16x8xf32>
    %c1_261 = arith.constant 1 : index
    %c1_262 = arith.constant 1 : index
    %c0_263 = arith.constant 0 : index
    %c0_264 = arith.constant 0 : index
    %306 = vector.load %arg10[%c1_261, %c1_262, %c0_263, %c0_264] : memref<2x4x8x32xf32, #tpu.memory_space<vmem>>, vector<1x1x8x32xf32>
    %307 = vector.shape_cast %306 : vector<1x1x8x32xf32> to vector<8x32xf32>
    %cst_265 = arith.constant dense<0.000000e+00> : vector<16x32xf32>
    %308 = tpu.matmul %305, %307, %cst_265 {dimension_numbers = #tpu.dot_dimension_numbers<[1], [0], [0], [1], [0, 0, 1, 1], [], []>} : vector<16x8xf32>, vector<8x32xf32>, vector<16x32xf32> -> vector<16x32xf32>
    %309 = arith.addf %273, %308 : vector<16x32xf32>
    %c1_266 = arith.constant 1 : index
    %c2_267 = arith.constant 2 : index
    %c0_268 = arith.constant 0 : index
    %c0_269 = arith.constant 0 : index
    %310 = vector.load %arg4[%c1_266, %c2_267, %c0_268, %c0_269] : memref<2x4x32x8xf32, #tpu.memory_space<vmem>>, vector<1x1x32x8xf32>
    %311 = vector.shape_cast %310 : vector<1x1x32x8xf32> to vector<32x8xf32>
    %cst_270 = arith.constant dense<0.000000e+00> : vector<16x8xf32>
    %312 = tpu.matmul %234, %311, %cst_270 {dimension_numbers = #tpu.dot_dimension_numbers<[1], [0], [0], [1], [0, 0, 1, 1], [], []>} : vector<16x32xf32>, vector<32x8xf32>, vector<16x8xf32> -> vector<16x8xf32>
    %c1_271 = arith.constant 1 : index
    %c2_272 = arith.constant 2 : index
    %c0_273 = arith.constant 0 : index
    %c0_274 = arith.constant 0 : index
    %313 = vector.load %arg5[%c1_271, %c2_272, %c0_273, %c0_274] : memref<2x4x1x8xf32, #tpu.memory_space<vmem>>, vector<1x1x1x8xf32>
    %314 = vector.shape_cast %313 : vector<1x1x1x8xf32> to vector<1x8xf32>
    %315 = vector.broadcast %314 : vector<1x8xf32> to vector<16x8xf32>
    %316 = arith.addf %312, %315 : vector<16x8xf32>
    %c1_275 = arith.constant 1 : index
    %c2_276 = arith.constant 2 : index
    %c0_277 = arith.constant 0 : index
    %c0_278 = arith.constant 0 : index
    %317 = vector.load %arg6[%c1_275, %c2_276, %c0_277, %c0_278] : memref<2x4x32x8xf32, #tpu.memory_space<vmem>>, vector<1x1x32x8xf32>
    %318 = vector.shape_cast %317 : vector<1x1x32x8xf32> to vector<32x8xf32>
    %cst_279 = arith.constant dense<0.000000e+00> : vector<16x8xf32>
    %319 = tpu.matmul %234, %318, %cst_279 {dimension_numbers = #tpu.dot_dimension_numbers<[1], [0], [0], [1], [0, 0, 1, 1], [], []>} : vector<16x32xf32>, vector<32x8xf32>, vector<16x8xf32> -> vector<16x8xf32>
    %c1_280 = arith.constant 1 : index
    %c2_281 = arith.constant 2 : index
    %c0_282 = arith.constant 0 : index
    %c0_283 = arith.constant 0 : index
    %320 = vector.load %arg7[%c1_280, %c2_281, %c0_282, %c0_283] : memref<2x4x1x8xf32, #tpu.memory_space<vmem>>, vector<1x1x1x8xf32>
    %321 = vector.shape_cast %320 : vector<1x1x1x8xf32> to vector<1x8xf32>
    %322 = vector.broadcast %321 : vector<1x8xf32> to vector<16x8xf32>
    %323 = arith.addf %319, %322 : vector<16x8xf32>
    %c1_284 = arith.constant 1 : index
    %c2_285 = arith.constant 2 : index
    %c0_286 = arith.constant 0 : index
    %c0_287 = arith.constant 0 : index
    %324 = vector.load %arg8[%c1_284, %c2_285, %c0_286, %c0_287] : memref<2x4x32x8xf32, #tpu.memory_space<vmem>>, vector<1x1x32x8xf32>
    %325 = vector.shape_cast %324 : vector<1x1x32x8xf32> to vector<32x8xf32>
    %cst_288 = arith.constant dense<0.000000e+00> : vector<16x8xf32>
    %326 = tpu.matmul %234, %325, %cst_288 {dimension_numbers = #tpu.dot_dimension_numbers<[1], [0], [0], [1], [0, 0, 1, 1], [], []>} : vector<16x32xf32>, vector<32x8xf32>, vector<16x8xf32> -> vector<16x8xf32>
    %c1_289 = arith.constant 1 : index
    %c2_290 = arith.constant 2 : index
    %c0_291 = arith.constant 0 : index
    %c0_292 = arith.constant 0 : index
    %327 = vector.load %arg9[%c1_289, %c2_290, %c0_291, %c0_292] : memref<2x4x1x8xf32, #tpu.memory_space<vmem>>, vector<1x1x1x8xf32>
    %328 = vector.shape_cast %327 : vector<1x1x1x8xf32> to vector<1x8xf32>
    %329 = vector.broadcast %328 : vector<1x8xf32> to vector<16x8xf32>
    %330 = arith.addf %326, %329 : vector<16x8xf32>
    %cst_293 = arith.constant dense<0.000000e+00> : vector<16x16xf32>
    %331 = tpu.matmul %316, %323, %cst_293 {dimension_numbers = #tpu.dot_dimension_numbers<[1], [1], [0], [0], [0, 0, 1, 0], [], []>} : vector<16x8xf32>, vector<16x8xf32>, vector<16x16xf32> -> vector<16x16xf32>
    %cst_294 = arith.constant 0.353553385 : f32
    %332 = vector.broadcast %cst_294 : f32 to vector<16x16xf32>
    %333 = arith.mulf %331, %332 : vector<16x16xf32>
    %334 = arith.addf %333, %7 : vector<16x16xf32>
    %335 = math.exp %334 : vector<16x16xf32>
    %cst_295 = arith.constant dense<0.000000e+00> : vector<16xf32>
    %336 = vector.multi_reduction <add>, %335, %cst_295 [1] : vector<16x16xf32> to vector<16xf32>
    %337 = vector.shape_cast %336 : vector<16xf32> to vector<16x1xf32>
    %338 = tpu.reciprocal %337 {approx = true} : vector<16x1xf32> -> vector<16x1xf32>
    %339 = vector.broadcast %338 : vector<16x1xf32> to vector<16x16xf32>
    %340 = arith.mulf %335, %339 : vector<16x16xf32>
    %cst_296 = arith.constant dense<0.000000e+00> : vector<16x8xf32>
    %341 = tpu.matmul %340, %330, %cst_296 {dimension_numbers = #tpu.dot_dimension_numbers<[1], [0], [0], [1], [0, 0, 1, 1], [], []>} : vector<16x16xf32>, vector<16x8xf32>, vector<16x8xf32> -> vector<16x8xf32>
    %c1_297 = arith.constant 1 : index
    %c2_298 = arith.constant 2 : index
    %c0_299 = arith.constant 0 : index
    %c0_300 = arith.constant 0 : index
    %342 = vector.load %arg10[%c1_297, %c2_298, %c0_299, %c0_300] : memref<2x4x8x32xf32, #tpu.memory_space<vmem>>, vector<1x1x8x32xf32>
    %343 = vector.shape_cast %342 : vector<1x1x8x32xf32> to vector<8x32xf32>
    %cst_301 = arith.constant dense<0.000000e+00> : vector<16x32xf32>
    %344 = tpu.matmul %341, %343, %cst_301 {dimension_numbers = #tpu.dot_dimension_numbers<[1], [0], [0], [1], [0, 0, 1, 1], [], []>} : vector<16x8xf32>, vector<8x32xf32>, vector<16x32xf32> -> vector<16x32xf32>
    %345 = arith.addf %309, %344 : vector<16x32xf32>
    %c1_302 = arith.constant 1 : index
    %c3_303 = arith.constant 3 : index
    %c0_304 = arith.constant 0 : index
    %c0_305 = arith.constant 0 : index
    %346 = vector.load %arg4[%c1_302, %c3_303, %c0_304, %c0_305] : memref<2x4x32x8xf32, #tpu.memory_space<vmem>>, vector<1x1x32x8xf32>
    %347 = vector.shape_cast %346 : vector<1x1x32x8xf32> to vector<32x8xf32>
    %cst_306 = arith.constant dense<0.000000e+00> : vector<16x8xf32>
    %348 = tpu.matmul %234, %347, %cst_306 {dimension_numbers = #tpu.dot_dimension_numbers<[1], [0], [0], [1], [0, 0, 1, 1], [], []>} : vector<16x32xf32>, vector<32x8xf32>, vector<16x8xf32> -> vector<16x8xf32>
    %c1_307 = arith.constant 1 : index
    %c3_308 = arith.constant 3 : index
    %c0_309 = arith.constant 0 : index
    %c0_310 = arith.constant 0 : index
    %349 = vector.load %arg5[%c1_307, %c3_308, %c0_309, %c0_310] : memref<2x4x1x8xf32, #tpu.memory_space<vmem>>, vector<1x1x1x8xf32>
    %350 = vector.shape_cast %349 : vector<1x1x1x8xf32> to vector<1x8xf32>
    %351 = vector.broadcast %350 : vector<1x8xf32> to vector<16x8xf32>
    %352 = arith.addf %348, %351 : vector<16x8xf32>
    %c1_311 = arith.constant 1 : index
    %c3_312 = arith.constant 3 : index
    %c0_313 = arith.constant 0 : index
    %c0_314 = arith.constant 0 : index
    %353 = vector.load %arg6[%c1_311, %c3_312, %c0_313, %c0_314] : memref<2x4x32x8xf32, #tpu.memory_space<vmem>>, vector<1x1x32x8xf32>
    %354 = vector.shape_cast %353 : vector<1x1x32x8xf32> to vector<32x8xf32>
    %cst_315 = arith.constant dense<0.000000e+00> : vector<16x8xf32>
    %355 = tpu.matmul %234, %354, %cst_315 {dimension_numbers = #tpu.dot_dimension_numbers<[1], [0], [0], [1], [0, 0, 1, 1], [], []>} : vector<16x32xf32>, vector<32x8xf32>, vector<16x8xf32> -> vector<16x8xf32>
    %c1_316 = arith.constant 1 : index
    %c3_317 = arith.constant 3 : index
    %c0_318 = arith.constant 0 : index
    %c0_319 = arith.constant 0 : index
    %356 = vector.load %arg7[%c1_316, %c3_317, %c0_318, %c0_319] : memref<2x4x1x8xf32, #tpu.memory_space<vmem>>, vector<1x1x1x8xf32>
    %357 = vector.shape_cast %356 : vector<1x1x1x8xf32> to vector<1x8xf32>
    %358 = vector.broadcast %357 : vector<1x8xf32> to vector<16x8xf32>
    %359 = arith.addf %355, %358 : vector<16x8xf32>
    %c1_320 = arith.constant 1 : index
    %c3_321 = arith.constant 3 : index
    %c0_322 = arith.constant 0 : index
    %c0_323 = arith.constant 0 : index
    %360 = vector.load %arg8[%c1_320, %c3_321, %c0_322, %c0_323] : memref<2x4x32x8xf32, #tpu.memory_space<vmem>>, vector<1x1x32x8xf32>
    %361 = vector.shape_cast %360 : vector<1x1x32x8xf32> to vector<32x8xf32>
    %cst_324 = arith.constant dense<0.000000e+00> : vector<16x8xf32>
    %362 = tpu.matmul %234, %361, %cst_324 {dimension_numbers = #tpu.dot_dimension_numbers<[1], [0], [0], [1], [0, 0, 1, 1], [], []>} : vector<16x32xf32>, vector<32x8xf32>, vector<16x8xf32> -> vector<16x8xf32>
    %c1_325 = arith.constant 1 : index
    %c3_326 = arith.constant 3 : index
    %c0_327 = arith.constant 0 : index
    %c0_328 = arith.constant 0 : index
    %363 = vector.load %arg9[%c1_325, %c3_326, %c0_327, %c0_328] : memref<2x4x1x8xf32, #tpu.memory_space<vmem>>, vector<1x1x1x8xf32>
    %364 = vector.shape_cast %363 : vector<1x1x1x8xf32> to vector<1x8xf32>
    %365 = vector.broadcast %364 : vector<1x8xf32> to vector<16x8xf32>
    %366 = arith.addf %362, %365 : vector<16x8xf32>
    %cst_329 = arith.constant dense<0.000000e+00> : vector<16x16xf32>
    %367 = tpu.matmul %352, %359, %cst_329 {dimension_numbers = #tpu.dot_dimension_numbers<[1], [1], [0], [0], [0, 0, 1, 0], [], []>} : vector<16x8xf32>, vector<16x8xf32>, vector<16x16xf32> -> vector<16x16xf32>
    %cst_330 = arith.constant 0.353553385 : f32
    %368 = vector.broadcast %cst_330 : f32 to vector<16x16xf32>
    %369 = arith.mulf %367, %368 : vector<16x16xf32>
    %370 = arith.addf %369, %7 : vector<16x16xf32>
    %371 = math.exp %370 : vector<16x16xf32>
    %cst_331 = arith.constant dense<0.000000e+00> : vector<16xf32>
    %372 = vector.multi_reduction <add>, %371, %cst_331 [1] : vector<16x16xf32> to vector<16xf32>
    %373 = vector.shape_cast %372 : vector<16xf32> to vector<16x1xf32>
    %374 = tpu.reciprocal %373 {approx = true} : vector<16x1xf32> -> vector<16x1xf32>
    %375 = vector.broadcast %374 : vector<16x1xf32> to vector<16x16xf32>
    %376 = arith.mulf %371, %375 : vector<16x16xf32>
    %cst_332 = arith.constant dense<0.000000e+00> : vector<16x8xf32>
    %377 = tpu.matmul %376, %366, %cst_332 {dimension_numbers = #tpu.dot_dimension_numbers<[1], [0], [0], [1], [0, 0, 1, 1], [], []>} : vector<16x16xf32>, vector<16x8xf32>, vector<16x8xf32> -> vector<16x8xf32>
    %c1_333 = arith.constant 1 : index
    %c3_334 = arith.constant 3 : index
    %c0_335 = arith.constant 0 : index
    %c0_336 = arith.constant 0 : index
    %378 = vector.load %arg10[%c1_333, %c3_334, %c0_335, %c0_336] : memref<2x4x8x32xf32, #tpu.memory_space<vmem>>, vector<1x1x8x32xf32>
    %379 = vector.shape_cast %378 : vector<1x1x8x32xf32> to vector<8x32xf32>
    %cst_337 = arith.constant dense<0.000000e+00> : vector<16x32xf32>
    %380 = tpu.matmul %377, %379, %cst_337 {dimension_numbers = #tpu.dot_dimension_numbers<[1], [0], [0], [1], [0, 0, 1, 1], [], []>} : vector<16x8xf32>, vector<8x32xf32>, vector<16x32xf32> -> vector<16x32xf32>
    %381 = arith.addf %345, %380 : vector<16x32xf32>
    %382 = arith.addf %381, %234 : vector<16x32xf32>
    %c1_338 = arith.constant 1 : index
    %c0_339 = arith.constant 0 : index
    %c0_340 = arith.constant 0 : index
    %383 = vector.load %arg12[%c1_338, %c0_339, %c0_340] : memref<2x1x32xf32, #tpu.memory_space<vmem>>, vector<1x1x32xf32>
    %384 = vector.shape_cast %383 : vector<1x1x32xf32> to vector<1x32xf32>
    %c1_341 = arith.constant 1 : index
    %c0_342 = arith.constant 0 : index
    %c0_343 = arith.constant 0 : index
    %385 = vector.load %arg13[%c1_341, %c0_342, %c0_343] : memref<2x1x32xf32, #tpu.memory_space<vmem>>, vector<1x1x32xf32>
    %386 = vector.shape_cast %385 : vector<1x1x32xf32> to vector<1x32xf32>
    %cst_344 = arith.constant dense<0.000000e+00> : vector<16xf32>
    %387 = vector.multi_reduction <add>, %382, %cst_344 [1] : vector<16x32xf32> to vector<16xf32>
    %388 = vector.shape_cast %387 : vector<16xf32> to vector<16x1xf32>
    %cst_345 = arith.constant 3.200000e+01 : f32
    %389 = vector.broadcast %cst_345 : f32 to vector<16x1xf32>
    %390 = arith.divf %388, %389 : vector<16x1xf32>
    %391 = vector.broadcast %390 : vector<16x1xf32> to vector<16x32xf32>
    %392 = arith.subf %382, %391 : vector<16x32xf32>
    %393 = arith.mulf %392, %392 : vector<16x32xf32>
    %cst_346 = arith.constant dense<0.000000e+00> : vector<16xf32>
    %394 = vector.multi_reduction <add>, %393, %cst_346 [1] : vector<16x32xf32> to vector<16xf32>
    %395 = vector.shape_cast %394 : vector<16xf32> to vector<16x1xf32>
    %cst_347 = arith.constant 3.200000e+01 : f32
    %396 = vector.broadcast %cst_347 : f32 to vector<16x1xf32>
    %397 = arith.divf %395, %396 : vector<16x1xf32>
    %398 = vector.broadcast %390 : vector<16x1xf32> to vector<16x32xf32>
    %399 = arith.subf %382, %398 : vector<16x32xf32>
    %cst_348 = arith.constant 9.99999974E-6 : f32
    %400 = vector.broadcast %cst_348 : f32 to vector<16x1xf32>
    %401 = arith.addf %397, %400 : vector<16x1xf32>
    %402 = math.rsqrt %401 : vector<16x1xf32>
    %403 = vector.broadcast %402 : vector<16x1xf32> to vector<16x32xf32>
    %404 = arith.mulf %399, %403 : vector<16x32xf32>
    %405 = vector.broadcast %384 : vector<1x32xf32> to vector<16x32xf32>
    %406 = arith.mulf %404, %405 : vector<16x32xf32>
    %407 = vector.broadcast %386 : vector<1x32xf32> to vector<16x32xf32>
    %408 = arith.addf %406, %407 : vector<16x32xf32>
    %c1_349 = arith.constant 1 : index
    %c0_350 = arith.constant 0 : index
    %c0_351 = arith.constant 0 : index
    %409 = vector.load %arg14[%c1_349, %c0_350, %c0_351] : memref<2x32x64xf32, #tpu.memory_space<vmem>>, vector<1x32x64xf32>
    %410 = vector.shape_cast %409 : vector<1x32x64xf32> to vector<32x64xf32>
    %cst_352 = arith.constant dense<0.000000e+00> : vector<16x64xf32>
    %411 = tpu.matmul %408, %410, %cst_352 {dimension_numbers = #tpu.dot_dimension_numbers<[1], [0], [0], [1], [0, 0, 1, 1], [], []>} : vector<16x32xf32>, vector<32x64xf32>, vector<16x64xf32> -> vector<16x64xf32>
    %c1_353 = arith.constant 1 : index
    %c0_354 = arith.constant 0 : index
    %c0_355 = arith.constant 0 : index
    %412 = vector.load %arg15[%c1_353, %c0_354, %c0_355] : memref<2x1x64xf32, #tpu.memory_space<vmem>>, vector<1x1x64xf32>
    %413 = vector.shape_cast %412 : vector<1x1x64xf32> to vector<1x64xf32>
    %414 = vector.broadcast %413 : vector<1x64xf32> to vector<16x64xf32>
    %415 = arith.addf %411, %414 : vector<16x64xf32>
    %cst_356 = arith.constant 5.000000e-01 : f32
    %416 = vector.broadcast %cst_356 : f32 to vector<16x64xf32>
    %417 = arith.mulf %416, %415 : vector<16x64xf32>
    %cst_357 = arith.constant 0.707106769 : f32
    %418 = vector.broadcast %cst_357 : f32 to vector<16x64xf32>
    %419 = arith.mulf %415, %418 : vector<16x64xf32>
    %420 = math.erf %419 : vector<16x64xf32>
    %cst_358 = arith.constant 1.000000e+00 : f32
    %421 = vector.broadcast %cst_358 : f32 to vector<16x64xf32>
    %422 = arith.addf %421, %420 : vector<16x64xf32>
    %423 = arith.mulf %417, %422 : vector<16x64xf32>
    %c1_359 = arith.constant 1 : index
    %c0_360 = arith.constant 0 : index
    %c0_361 = arith.constant 0 : index
    %424 = vector.load %arg16[%c1_359, %c0_360, %c0_361] : memref<2x64x32xf32, #tpu.memory_space<vmem>>, vector<1x64x32xf32>
    %425 = vector.shape_cast %424 : vector<1x64x32xf32> to vector<64x32xf32>
    %cst_362 = arith.constant dense<0.000000e+00> : vector<16x32xf32>
    %426 = tpu.matmul %423, %425, %cst_362 {dimension_numbers = #tpu.dot_dimension_numbers<[1], [0], [0], [1], [0, 0, 1, 1], [], []>} : vector<16x64xf32>, vector<64x32xf32>, vector<16x32xf32> -> vector<16x32xf32>
    %c1_363 = arith.constant 1 : index
    %c0_364 = arith.constant 0 : index
    %c0_365 = arith.constant 0 : index
    %427 = vector.load %arg17[%c1_363, %c0_364, %c0_365] : memref<2x1x32xf32, #tpu.memory_space<vmem>>, vector<1x1x32xf32>
    %428 = vector.shape_cast %427 : vector<1x1x32xf32> to vector<1x32xf32>
    %429 = vector.broadcast %428 : vector<1x32xf32> to vector<16x32xf32>
    %430 = arith.addf %426, %429 : vector<16x32xf32>
    %431 = arith.addf %430, %408 : vector<16x32xf32>
    %c1_366 = arith.constant 1 : index
    %c0_367 = arith.constant 0 : index
    %c0_368 = arith.constant 0 : index
    %432 = vector.load %arg18[%c1_366, %c0_367, %c0_368] : memref<2x1x32xf32, #tpu.memory_space<vmem>>, vector<1x1x32xf32>
    %433 = vector.shape_cast %432 : vector<1x1x32xf32> to vector<1x32xf32>
    %c1_369 = arith.constant 1 : index
    %c0_370 = arith.constant 0 : index
    %c0_371 = arith.constant 0 : index
    %434 = vector.load %arg19[%c1_369, %c0_370, %c0_371] : memref<2x1x32xf32, #tpu.memory_space<vmem>>, vector<1x1x32xf32>
    %435 = vector.shape_cast %434 : vector<1x1x32xf32> to vector<1x32xf32>
    %cst_372 = arith.constant dense<0.000000e+00> : vector<16xf32>
    %436 = vector.multi_reduction <add>, %431, %cst_372 [1] : vector<16x32xf32> to vector<16xf32>
    %437 = vector.shape_cast %436 : vector<16xf32> to vector<16x1xf32>
    %cst_373 = arith.constant 3.200000e+01 : f32
    %438 = vector.broadcast %cst_373 : f32 to vector<16x1xf32>
    %439 = arith.divf %437, %438 : vector<16x1xf32>
    %440 = vector.broadcast %439 : vector<16x1xf32> to vector<16x32xf32>
    %441 = arith.subf %431, %440 : vector<16x32xf32>
    %442 = arith.mulf %441, %441 : vector<16x32xf32>
    %cst_374 = arith.constant dense<0.000000e+00> : vector<16xf32>
    %443 = vector.multi_reduction <add>, %442, %cst_374 [1] : vector<16x32xf32> to vector<16xf32>
    %444 = vector.shape_cast %443 : vector<16xf32> to vector<16x1xf32>
    %cst_375 = arith.constant 3.200000e+01 : f32
    %445 = vector.broadcast %cst_375 : f32 to vector<16x1xf32>
    %446 = arith.divf %444, %445 : vector<16x1xf32>
    %447 = vector.broadcast %439 : vector<16x1xf32> to vector<16x32xf32>
    %448 = arith.subf %431, %447 : vector<16x32xf32>
    %cst_376 = arith.constant 9.99999974E-6 : f32
    %449 = vector.broadcast %cst_376 : f32 to vector<16x1xf32>
    %450 = arith.addf %446, %449 : vector<16x1xf32>
    %451 = math.rsqrt %450 : vector<16x1xf32>
    %452 = vector.broadcast %451 : vector<16x1xf32> to vector<16x32xf32>
    %453 = arith.mulf %448, %452 : vector<16x32xf32>
    %454 = vector.broadcast %433 : vector<1x32xf32> to vector<16x32xf32>
    %455 = arith.mulf %453, %454 : vector<16x32xf32>
    %456 = vector.broadcast %435 : vector<1x32xf32> to vector<16x32xf32>
    %457 = arith.addf %455, %456 : vector<16x32xf32>
    %c0_377 = arith.constant 0 : index
    %c0_378 = arith.constant 0 : index
    %458 = vector.load %arg20[%c0_377, %c0_378] : memref<16x32xf32, #tpu.memory_space<vmem>>, vector<16x32xf32>
    tpu.vector_store %arg20[%c0_377, %c0_378], %457 {strides = array<i32>} : memref<16x32xf32, #tpu.memory_space<vmem>>, vector<16x32xf32>,
    return
  }
}

</mosaic_0001>

<llo_original>
// kernel: tpu_custom_call.1
$region0: #{tpu_custom_call.1}
  #allocation0 [shape = 'u32[]', space=smem, size = 0x4, offset = 0x4, fixed_abs, tag = 'smem constant byte address 0x4 - core index']
  #allocation1 [shape = 'u32[144,128]{1,0:T(1,128)}', space=vmem, size = 0x12000, scoped, tag = 'internal scratch']
  %s0 = inlined_call_operand.vmem [shape: f32[16,32], index: 0, kind: input, shape index: {}]
  %s1 = inlined_call_operand.vmem [shape: s32[16,1], index: 1, kind: input, shape index: {}]
  %s2 = inlined_call_operand.vmem [shape: s32[1,16], index: 2, kind: input, shape index: {}]
  %s3 = inlined_call_operand.vmem [shape: f32[1,32], index: 3, kind: input, shape index: {}]
  %s4 = inlined_call_operand.vmem [shape: f32[2,4,32,8], index: 4, kind: input, shape index: {}]
  %s5 = inlined_call_operand.vmem [shape: f32[2,4,1,8], index: 5, kind: input, shape index: {}]
  %s6 = inlined_call_operand.vmem [shape: f32[2,4,32,8], index: 6, kind: input, shape index: {}]
  %s7 = inlined_call_operand.vmem [shape: f32[2,4,1,8], index: 7, kind: input, shape index: {}]
  %s8 = inlined_call_operand.vmem [shape: f32[2,4,32,8], index: 8, kind: input, shape index: {}]
  %s9 = inlined_call_operand.vmem [shape: f32[2,4,1,8], index: 9, kind: input, shape index: {}]
  %s10 = inlined_call_operand.vmem [shape: f32[2,4,8,32], index: 10, kind: input, shape index: {}]
  %s11 = inlined_call_operand.vmem [shape: f32[2,1,32], index: 11, kind: input, shape index: {}]
  %s12 = inlined_call_operand.vmem [shape: f32[2,1,32], index: 12, kind: input, shape index: {}]
  %s13 = inlined_call_operand.vmem [shape: f32[2,1,32], index: 13, kind: input, shape index: {}]
  %s14 = inlined_call_operand.vmem [shape: f32[2,32,64], index: 14, kind: input, shape index: {}]
  %s15 = inlined_call_operand.vmem [shape: f32[2,1,64], index: 15, kind: input, shape index: {}]
  %s16 = inlined_call_operand.vmem [shape: f32[2,64,32], index: 16, kind: input, shape index: {}]
  %s17 = inlined_call_operand.vmem [shape: f32[2,1,32], index: 17, kind: input, shape index: {}]
  %s18 = inlined_call_operand.vmem [shape: f32[2,1,32], index: 18, kind: input, shape index: {}]
  %s19 = inlined_call_operand.vmem [shape: f32[2,1,32], index: 19, kind: input, shape index: {}]
  %s20 = inlined_call_operand.hbm [shape: f32[16,32], index: 20, kind: output, shape index: {}]
  %s21 = sld [smem:[#allocation0]]
  $region90: #{tpu_custom_call.1} parent=0
    _
  %s23 = ssub.s32 1, %s21
  %s24 = scalar_select 0, %s23, %s21
  $region1: #{tpu_custom_call.1} parent=0
    #allocation2 [shape = 'u8[8192]{0}', space=vmem, size = 0x2000, scoped, tag = 'output window, operand 0, single buffered']
    #allocation3 [shape = 's32[1]{0}', space=sflag, size = 0x4, scoped, tag = 'scoped memory for tpu_custom_call.1']
    %25 = vsyncpa [#allocation3], 0
    // Predicated region
    $region2: #{tpu_custom_call.1} parent=1 // pred_check
      _
    $region3: #{tpu_custom_call.1} parent=1 // pred_check_branch
      %27 = sbr.rel (0) target = $region5
    $region4: #{tpu_custom_call.1} parent=1 // pred_region
      _
    $region5: #{tpu_custom_call.1} parent=1 // pred_fallthru
      _
    // Predicated region
    $region6: #{tpu_custom_call.1} parent=1 // pred_check
      _
    $region7: #{tpu_custom_call.1} parent=1 // pred_check_branch
      %29 = sbr.rel (0) target = $region9
    $region8: #{tpu_custom_call.1} parent=1 // pred_region
      _
    $region9: #{tpu_custom_call.1} parent=1 // pred_fallthru
      _
    // Predicated region
    $region10: #{tpu_custom_call.1} parent=1 // pred_check
      _
    $region11: #{tpu_custom_call.1} parent=1 // pred_check_branch
      %31 = sbr.rel (0) target = $region13
    $region12: #{tpu_custom_call.1} parent=1 // pred_region
      _
    $region13: #{tpu_custom_call.1} parent=1 // pred_fallthru
      _
    // Predicated region
    $region14: #{tpu_custom_call.1} parent=1 // pred_check
      _
    $region15: #{tpu_custom_call.1} parent=1 // pred_check_branch
      %33 = sbr.rel (0) target = $region17
    $region16: #{tpu_custom_call.1} parent=1 // pred_region
      _
    $region17: #{tpu_custom_call.1} parent=1 // pred_fallthru
      _
    // Predicated region
    $region18: #{tpu_custom_call.1} parent=1 // pred_check
      _
    $region19: #{tpu_custom_call.1} parent=1 // pred_check_branch
      %35 = sbr.rel (0) target = $region21
    $region20: #{tpu_custom_call.1} parent=1 // pred_region
      _
    $region21: #{tpu_custom_call.1} parent=1 // pred_fallthru
      _
    // Predicated region
    $region22: #{tpu_custom_call.1} parent=1 // pred_check
      _
    $region23: #{tpu_custom_call.1} parent=1 // pred_check_branch
      %37 = sbr.rel (0) target = $region25
    $region24: #{tpu_custom_call.1} parent=1 // pred_region
      _
    $region25: #{tpu_custom_call.1} parent=1 // pred_fallthru
      _
    // Predicated region
    $region26: #{tpu_custom_call.1} parent=1 // pred_check
      _
    $region27: #{tpu_custom_call.1} parent=1 // pred_check_branch
      %39 = sbr.rel (0) target = $region29
    $region28: #{tpu_custom_call.1} parent=1 // pred_region
      _
    $region29: #{tpu_custom_call.1} parent=1 // pred_fallthru
      _
    // Predicated region
    $region30: #{tpu_custom_call.1} parent=1 // pred_check
      _
    $region31: #{tpu_custom_call.1} parent=1 // pred_check_branch
      %41 = sbr.rel (0) target = $region33
    $region32: #{tpu_custom_call.1} parent=1 // pred_region
      _
    $region33: #{tpu_custom_call.1} parent=1 // pred_fallthru
      _
    // Predicated region
    $region34: #{tpu_custom_call.1} parent=1 // pred_check
      _
    $region35: #{tpu_custom_call.1} parent=1 // pred_check_branch
      %43 = sbr.rel (0) target = $region37
    $region36: #{tpu_custom_call.1} parent=1 // pred_region
      _
    $region37: #{tpu_custom_call.1} parent=1 // pred_fallthru
      _
    // Predicated region
    $region38: #{tpu_custom_call.1} parent=1 // pred_check
      _
    $region39: #{tpu_custom_call.1} parent=1 // pred_check_branch
      %45 = sbr.rel (0) target = $region41
    $region40: #{tpu_custom_call.1} parent=1 // pred_region
      _
    $region41: #{tpu_custom_call.1} parent=1 // pred_fallthru
      _
    // Predicated region
    $region42: #{tpu_custom_call.1} parent=1 // pred_check
      _
    $region43: #{tpu_custom_call.1} parent=1 // pred_check_branch
      %47 = sbr.rel (0) target = $region45
    $region44: #{tpu_custom_call.1} parent=1 // pred_region
      _
    $region45: #{tpu_custom_call.1} parent=1 // pred_fallthru
      _
    // Predicated region
    $region46: #{tpu_custom_call.1} parent=1 // pred_check
      _
    $region47: #{tpu_custom_call.1} parent=1 // pred_check_branch
      %49 = sbr.rel (0) target = $region49
    $region48: #{tpu_custom_call.1} parent=1 // pred_region
      _
    $region49: #{tpu_custom_call.1} parent=1 // pred_fallthru
      _
    // Predicated region
    $region50: #{tpu_custom_call.1} parent=1 // pred_check
      _
    $region51: #{tpu_custom_call.1} parent=1 // pred_check_branch
      %51 = sbr.rel (0) target = $region53
    $region52: #{tpu_custom_call.1} parent=1 // pred_region
      _
    $region53: #{tpu_custom_call.1} parent=1 // pred_fallthru
      _
    // Predicated region
    $region54: #{tpu_custom_call.1} parent=1 // pred_check
      _
    $region55: #{tpu_custom_call.1} parent=1 // pred_check_branch
      %53 = sbr.rel (0) target = $region57
    $region56: #{tpu_custom_call.1} parent=1 // pred_region
      _
    $region57: #{tpu_custom_call.1} parent=1 // pred_fallthru
      _
    // Predicated region
    $region58: #{tpu_custom_call.1} parent=1 // pred_check
      _
    $region59: #{tpu_custom_call.1} parent=1 // pred_check_branch
      %55 = sbr.rel (0) target = $region61
    $region60: #{tpu_custom_call.1} parent=1 // pred_region
      _
    $region61: #{tpu_custom_call.1} parent=1 // pred_fallthru
      _
    // Predicated region
    $region62: #{tpu_custom_call.1} parent=1 // pred_check
      _
    $region63: #{tpu_custom_call.1} parent=1 // pred_check_branch
      %57 = sbr.rel (0) target = $region65
    $region64: #{tpu_custom_call.1} parent=1 // pred_region
      _
    $region65: #{tpu_custom_call.1} parent=1 // pred_fallthru
      _
    // Predicated region
    $region66: #{tpu_custom_call.1} parent=1 // pred_check
      _
    $region67: #{tpu_custom_call.1} parent=1 // pred_check_branch
      %59 = sbr.rel (0) target = $region69
    $region68: #{tpu_custom_call.1} parent=1 // pred_region
      _
    $region69: #{tpu_custom_call.1} parent=1 // pred_fallthru
      _
    // Predicated region
    $region70: #{tpu_custom_call.1} parent=1 // pred_check
      _
    $region71: #{tpu_custom_call.1} parent=1 // pred_check_branch
      %61 = sbr.rel (0) target = $region73
    $region72: #{tpu_custom_call.1} parent=1 // pred_region
      _
    $region73: #{tpu_custom_call.1} parent=1 // pred_fallthru
      _
    // Predicated region
    $region74: #{tpu_custom_call.1} parent=1 // pred_check
      _
    $region75: #{tpu_custom_call.1} parent=1 // pred_check_branch
      %63 = sbr.rel (0) target = $region77
    $region76: #{tpu_custom_call.1} parent=1 // pred_region
      _
    $region77: #{tpu_custom_call.1} parent=1 // pred_fallthru
      _
    // Predicated region
    $region78: #{tpu_custom_call.1} parent=1 // pred_check
      _
    $region79: #{tpu_custom_call.1} parent=1 // pred_check_branch
      %65 = sbr.rel (0) target = $region81
    $region80: #{tpu_custom_call.1} parent=1 // pred_region
      _
    $region81: #{tpu_custom_call.1} parent=1 // pred_fallthru
      _
    %v66 = vld [vmem:[%s1] sm:$0xff]
    %v67 = vld [vmem:[%s1 + $0x8] sm:$0xff]
    %v68 = vld [vmem:[%s2] sm:$0x1]
    %69 = vset.pattern.permute.xlu0 0
    %70 = vperm.xlu0 %69, %v66
    %v71 = vpop.permute.xlu0 %70
    %72 = vset.pattern.permute.xlu0 0
    %73 = vperm.xlu0 %72, %v67
    %v74 = vpop.permute.xlu0 %73
    %v75 = vlaneseq
    %v76 = vshrl.u32 %v75, 7
    %v77 = vsub.s32 0, %v76
    %v78 = vrot.slane %v68, %v77
    %vm79 = vcmp.eq.s32.totalorder %v71, %v78
    %vm80 = vcmp.eq.s32.totalorder %v74, %v78
    %v81 = vsel %vm79, 0.0, -1e+09
    %v82 = vsel %vm80, 0.0, -1e+09
    %v83 = vld [vmem:[%s0] sm:$0xff]
    %v84 = vld [vmem:[%s0 + $0x8] sm:$0xff]
    %v85 = vld [vmem:[%s3] sm:$0x1]
    %v86 = vld [vmem:[%s11] sm:$0x1]
    %v87 = vld [vmem:[%s4] sm:$0xff]
    %v88 = vld [vmem:[%s4 + $0x8] sm:$0xff]
    %v89 = vld [vmem:[%s4 + $0x10] sm:$0xff]
    %v90 = vld [vmem:[%s4 + $0x18] sm:$0xff]
    %v91 = vld [vmem:[%s5] sm:$0x1]
    %v93 = vlaneseq
    %v94 = vshrl.u32 %v93, 7
    %v95 = vsub.s32 0, %v94
    %v96 = vrot.slane %v91, %v95
    %vm98 = vcmask 261120
    %v100 = vsel %vm98, %v83, 0
    %v103 = vsel %vm98, %v84, 0
    %105 = vmatprep.subr.mxu0 0.0
    %106 = vmatpush1.msra.mxu0 0.0
    %107 = vmatprep.subr.mxu0 0.0
    %108 = vmatpush1.msra.mxu0 0.0
    %109 = vmatprep.subr.mxu0 0.0
    %110 = vmatpush1.msra.mxu0 0.0
    %111 = vmatprep.subr.mxu0 0.0
    %112 = vmatpush1.msra.mxu0 0.0
    %113 = vmatprep.subr.mxu0 0.0
    %114 = vmatpush1.msra.mxu0 0.0
    %115 = vmatprep.subr.mxu0 0.0
    %116 = vmatpush1.msra.mxu0 0.0
    %117 = vmatprep.subr.mxu0 0.0
    %118 = vmatpush1.msra.mxu0 0.0
    %119 = vmatprep.subr.mxu0 0.0
    %120 = vmatpush1.msra.mxu0 0.0
    %121 = vmatprep.subr.mxu0 0.0
    %122 = vmatpush1.msra.mxu0 0.0
    %123 = vmatprep.subr.mxu0 0.0
    %124 = vmatpush1.msra.mxu0 0.0
    %125 = vmatprep.subr.mxu0 0.0
    %126 = vmatpush1.msra.mxu0 0.0
    %127 = vmatprep.subr.mxu0 0.0
    %128 = vmatpush1.msra.mxu0 0.0
    %129 = vmatprep.subr.mxu0 0.0
    %130 = vmatpush1.msra.mxu0 %v90
    %131 = vmatprep.subr.mxu0 0.0
    %132 = vmatpush1.msra.mxu0 %v89
    %133 = vmatprep.subr.mxu0 0.0
    %134 = vmatpush1.msra.mxu0 %v88
    %135 = vmatprep.subr.mxu0 0.0
    %136 = vmatpush1.msra.mxu0 %v87
    %137 = vmatprep.subr.mxu0 0.0
    %138 = vmatpush2.msra.mxu0 0.0
    %139 = vmatprep.subr.mxu0 0.0
    %140 = vmatpush2.msra.mxu0 0.0
    %141 = vmatprep.subr.mxu0 0.0
    %142 = vmatpush2.msra.mxu0 0.0
    %143 = vmatprep.subr.mxu0 0.0
    %144 = vmatpush2.msra.mxu0 0.0
    %145 = vmatprep.subr.mxu0 0.0
    %146 = vmatpush2.msra.mxu0 0.0
    %147 = vmatprep.subr.mxu0 0.0
    %148 = vmatpush2.msra.mxu0 0.0
    %149 = vmatprep.subr.mxu0 0.0
    %150 = vmatpush2.msra.mxu0 0.0
    %151 = vmatprep.subr.mxu0 0.0
    %152 = vmatpush2.msra.mxu0 0.0
    %153 = vmatprep.subr.mxu0 0.0
    %154 = vmatpush2.msra.mxu0 0.0
    %155 = vmatprep.subr.mxu0 0.0
    %156 = vmatpush2.msra.mxu0 0.0
    %157 = vmatprep.subr.mxu0 0.0
    %158 = vmatpush2.msra.mxu0 0.0
    %159 = vmatprep.subr.mxu0 0.0
    %160 = vmatpush2.msra.mxu0 0.0
    %161 = vmatprep.subr.mxu0 0.0
    %162 = vmatpush2.msra.mxu0 0.0
    %163 = vmatprep.subr.mxu0 0.0
    %164 = vmatpush2.msra.mxu0 0.0
    %165 = vmatprep.subr.mxu0 0.0
    %166 = vmatpush2.msra.mxu0 0.0
    %167 = vmatprep.subr.mxu0 0.0
    %168 = vmatpush2.msra.mxu0 0.0
    %169 = vmatprep.mubr.f32.mxu0 0.0
    %170 = vmatmul.mubr.f32.gmra.mxu0 %v100
    %v171 = vpop.f32.mrf.mxu0
    %v172 = vadd.f32 %v96, %v171
    %v173 = vpop.f32.mrf.mxu0
    %174 = vmatprep.mubr.f32.mxu0 0.0
    %175 = vmatmul.mubr.f32.gmra.mxu0 %v103
    %v176 = vpop.f32.mrf.mxu0
    %v177 = vadd.f32 %v96, %v176
    %v178 = vpop.f32.mrf.mxu0
    %179 = vdwg.mxu0
    %v180 = vld [vmem:[%s6] sm:$0xff]
    %v181 = vld [vmem:[%s6 + $0x8] sm:$0xff]
    %v182 = vld [vmem:[%s6 + $0x10] sm:$0xff]
    %v183 = vld [vmem:[%s6 + $0x18] sm:$0xff]
    %v184 = vld [vmem:[%s7] sm:$0x1]
    %v186 = vlaneseq
    %v187 = vshrl.u32 %v186, 7
    %v188 = vsub.s32 0, %v187
    %v189 = vrot.slane %v184, %v188
    %191 = vmatprep.subr.mxu0 0.0
    %192 = vmatpush1.msra.mxu0 0.0
    %193 = vmatprep.subr.mxu0 0.0
    %194 = vmatpush1.msra.mxu0 0.0
    %195 = vmatprep.subr.mxu0 0.0
    %196 = vmatpush1.msra.mxu0 0.0
    %197 = vmatprep.subr.mxu0 0.0
    %198 = vmatpush1.msra.mxu0 0.0
    %199 = vmatprep.subr.mxu0 0.0
    %200 = vmatpush1.msra.mxu0 0.0
    %201 = vmatprep.subr.mxu0 0.0
    %202 = vmatpush1.msra.mxu0 0.0
    %203 = vmatprep.subr.mxu0 0.0
    %204 = vmatpush1.msra.mxu0 0.0
    %205 = vmatprep.subr.mxu0 0.0
    %206 = vmatpush1.msra.mxu0 0.0
    %207 = vmatprep.subr.mxu0 0.0
    %208 = vmatpush1.msra.mxu0 0.0
    %209 = vmatprep.subr.mxu0 0.0
    %210 = vmatpush1.msra.mxu0 0.0
    %211 = vmatprep.subr.mxu0 0.0
    %212 = vmatpush1.msra.mxu0 0.0
    %213 = vmatprep.subr.mxu0 0.0
    %214 = vmatpush1.msra.mxu0 0.0
    %215 = vmatprep.subr.mxu0 0.0
    %216 = vmatpush1.msra.mxu0 %v183
    %217 = vmatprep.subr.mxu0 0.0
    %218 = vmatpush1.msra.mxu0 %v182
    %219 = vmatprep.subr.mxu0 0.0
    %220 = vmatpush1.msra.mxu0 %v181
    %221 = vmatprep.subr.mxu0 0.0
    %222 = vmatpush1.msra.mxu0 %v180
    %223 = vmatprep.subr.mxu0 0.0
    %224 = vmatpush2.msra.mxu0 0.0
    %225 = vmatprep.subr.mxu0 0.0
    %226 = vmatpush2.msra.mxu0 0.0
    %227 = vmatprep.subr.mxu0 0.0
    %228 = vmatpush2.msra.mxu0 0.0
    %229 = vmatprep.subr.mxu0 0.0
    %230 = vmatpush2.msra.mxu0 0.0
    %231 = vmatprep.subr.mxu0 0.0
    %232 = vmatpush2.msra.mxu0 0.0
    %233 = vmatprep.subr.mxu0 0.0
    %234 = vmatpush2.msra.mxu0 0.0
    %235 = vmatprep.subr.mxu0 0.0
    %236 = vmatpush2.msra.mxu0 0.0
    %237 = vmatprep.subr.mxu0 0.0
    %238 = vmatpush2.msra.mxu0 0.0
    %239 = vmatprep.subr.mxu0 0.0
    %240 = vmatpush2.msra.mxu0 0.0
    %241 = vmatprep.subr.mxu0 0.0
    %242 = vmatpush2.msra.mxu0 0.0
    %243 = vmatprep.subr.mxu0 0.0
    %244 = vmatpush2.msra.mxu0 0.0
    %245 = vmatprep.subr.mxu0 0.0
    %246 = vmatpush2.msra.mxu0 0.0
    %247 = vmatprep.subr.mxu0 0.0
    %248 = vmatpush2.msra.mxu0 0.0
    %249 = vmatprep.subr.mxu0 0.0
    %250 = vmatpush2.msra.mxu0 0.0
    %251 = vmatprep.subr.mxu0 0.0
    %252 = vmatpush2.msra.mxu0 0.0
    %253 = vmatprep.subr.mxu0 0.0
    %254 = vmatpush2.msra.mxu0 0.0
    %255 = vmatprep.mubr.f32.mxu0 0.0
    %256 = vmatmul.mubr.f32.gmra.mxu0 %v100
    %v257 = vpop.f32.mrf.mxu0
    %v258 = vadd.f32 %v189, %v257
    %v259 = vpop.f32.mrf.mxu0
    %260 = vmatprep.mubr.f32.mxu0 0.0
    %261 = vmatmul.mubr.f32.gmra.mxu0 %v103
    %v262 = vpop.f32.mrf.mxu0
    %v263 = vadd.f32 %v189, %v262
    %v264 = vpop.f32.mrf.mxu0
    %265 = vdwg.mxu0
    %v266 = vld [vmem:[%s8] sm:$0xff]
    %v267 = vld [vmem:[%s8 + $0x8] sm:$0xff]
    %v268 = vld [vmem:[%s8 + $0x10] sm:$0xff]
    %v269 = vld [vmem:[%s8 + $0x18] sm:$0xff]
    %v270 = vld [vmem:[%s9] sm:$0x1]
    %v272 = vlaneseq
    %v273 = vshrl.u32 %v272, 7
    %v274 = vsub.s32 0, %v273
    %v275 = vrot.slane %v270, %v274
    %277 = vmatprep.subr.mxu0 0.0
    %278 = vmatpush1.msra.mxu0 0.0
    %279 = vmatprep.subr.mxu0 0.0
    %280 = vmatpush1.msra.mxu0 0.0
    %281 = vmatprep.subr.mxu0 0.0
    %282 = vmatpush1.msra.mxu0 0.0
    %283 = vmatprep.subr.mxu0 0.0
    %284 = vmatpush1.msra.mxu0 0.0
    %285 = vmatprep.subr.mxu0 0.0
    %286 = vmatpush1.msra.mxu0 0.0
    %287 = vmatprep.subr.mxu0 0.0
    %288 = vmatpush1.msra.mxu0 0.0
    %289 = vmatprep.subr.mxu0 0.0
    %290 = vmatpush1.msra.mxu0 0.0
    %291 = vmatprep.subr.mxu0 0.0
    %292 = vmatpush1.msra.mxu0 0.0
    %293 = vmatprep.subr.mxu0 0.0
    %294 = vmatpush1.msra.mxu0 0.0
    %295 = vmatprep.subr.mxu0 0.0
    %296 = vmatpush1.msra.mxu0 0.0
    %297 = vmatprep.subr.mxu0 0.0
    %298 = vmatpush1.msra.mxu0 0.0
    %299 = vmatprep.subr.mxu0 0.0
    %300 = vmatpush1.msra.mxu0 0.0
    %301 = vmatprep.subr.mxu0 0.0
    %302 = vmatpush1.msra.mxu0 %v269
    %303 = vmatprep.subr.mxu0 0.0
    %304 = vmatpush1.msra.mxu0 %v268
    %305 = vmatprep.subr.mxu0 0.0
    %306 = vmatpush1.msra.mxu0 %v267
    %307 = vmatprep.subr.mxu0 0.0
    %308 = vmatpush1.msra.mxu0 %v266
    %309 = vmatprep.subr.mxu0 0.0
    %310 = vmatpush2.msra.mxu0 0.0
    %311 = vmatprep.subr.mxu0 0.0
    %312 = vmatpush2.msra.mxu0 0.0
    %313 = vmatprep.subr.mxu0 0.0
    %314 = vmatpush2.msra.mxu0 0.0
    %315 = vmatprep.subr.mxu0 0.0
    %316 = vmatpush2.msra.mxu0 0.0
    %317 = vmatprep.subr.mxu0 0.0
    %318 = vmatpush2.msra.mxu0 0.0
    %319 = vmatprep.subr.mxu0 0.0
    %320 = vmatpush2.msra.mxu0 0.0
    %321 = vmatprep.subr.mxu0 0.0
    %322 = vmatpush2.msra.mxu0 0.0
    %323 = vmatprep.subr.mxu0 0.0
    %324 = vmatpush2.msra.mxu0 0.0
    %325 = vmatprep.subr.mxu0 0.0
    %326 = vmatpush2.msra.mxu0 0.0
    %327 = vmatprep.subr.mxu0 0.0
    %328 = vmatpush2.msra.mxu0 0.0
    %329 = vmatprep.subr.mxu0 0.0
    %330 = vmatpush2.msra.mxu0 0.0
    %331 = vmatprep.subr.mxu0 0.0
    %332 = vmatpush2.msra.mxu0 0.0
    %333 = vmatprep.subr.mxu0 0.0
    %334 = vmatpush2.msra.mxu0 0.0
    %335 = vmatprep.subr.mxu0 0.0
    %336 = vmatpush2.msra.mxu0 0.0
    %337 = vmatprep.subr.mxu0 0.0
    %338 = vmatpush2.msra.mxu0 0.0
    %339 = vmatprep.subr.mxu0 0.0
    %340 = vmatpush2.msra.mxu0 0.0
    %341 = vmatprep.mubr.f32.mxu0 0.0
    %342 = vmatmul.mubr.f32.gmra.mxu0 %v100
    %v343 = vpop.f32.mrf.mxu0
    %v344 = vadd.f32 %v275, %v343
    %v345 = vpop.f32.mrf.mxu0
    %346 = vmatprep.mubr.f32.mxu0 0.0
    %347 = vmatmul.mubr.f32.gmra.mxu0 %v103
    %v348 = vpop.f32.mrf.mxu0
    %v349 = vadd.f32 %v275, %v348
    %v350 = vpop.f32.mrf.mxu0
    %351 = vdwg.mxu0
    %vm352 = vcmask 64512
    %v354 = vsel %vm352, %v172, 0
    %v357 = vsel %vm352, %v177, 0
    %v360 = vsel %vm352, %v258, 0
    %v363 = vsel %vm352, %v263, 0
    %365 = vmatprep.subr.mxu0 0.0
    %366 = vmatpush1.xpose.msra.mxu0 0.0
    %367 = vmatprep.subr.mxu0 0.0
    %368 = vmatpush1.xpose.msra.mxu0 0.0
    %369 = vmatprep.subr.mxu0 0.0
    %370 = vmatpush1.xpose.msra.mxu0 0.0
    %371 = vmatprep.subr.mxu0 0.0
    %372 = vmatpush1.xpose.msra.mxu0 0.0
    %373 = vmatprep.subr.mxu0 0.0
    %374 = vmatpush1.xpose.msra.mxu0 0.0
    %375 = vmatprep.subr.mxu0 0.0
    %376 = vmatpush1.xpose.msra.mxu0 0.0
    %377 = vmatprep.subr.mxu0 0.0
    %378 = vmatpush1.xpose.msra.mxu0 0.0
    %379 = vmatprep.subr.mxu0 0.0
    %380 = vmatpush1.xpose.msra.mxu0 0.0
    %381 = vmatprep.subr.mxu0 0.0
    %382 = vmatpush1.xpose.msra.mxu0 0.0
    %383 = vmatprep.subr.mxu0 0.0
    %384 = vmatpush1.xpose.msra.mxu0 0.0
    %385 = vmatprep.subr.mxu0 0.0
    %386 = vmatpush1.xpose.msra.mxu0 0.0
    %387 = vmatprep.subr.mxu0 0.0
    %388 = vmatpush1.xpose.msra.mxu0 0.0
    %389 = vmatprep.subr.mxu0 0.0
    %390 = vmatpush1.xpose.msra.mxu0 0.0
    %391 = vmatprep.subr.mxu0 0.0
    %392 = vmatpush1.xpose.msra.mxu0 0.0
    %393 = vmatprep.subr.mxu0 0.0
    %394 = vmatpush1.xpose.msra.mxu0 %v363
    %395 = vmatprep.subr.mxu0 0.0
    %396 = vmatpush1.xpose.msra.mxu0 %v360
    %397 = vmatprep.subr.mxu0 0.0
    %398 = vmatpush2.xpose.msra.mxu0 0.0
    %399 = vmatprep.subr.mxu0 0.0
    %400 = vmatpush2.xpose.msra.mxu0 0.0
    %401 = vmatprep.subr.mxu0 0.0
    %402 = vmatpush2.xpose.msra.mxu0 0.0
    %403 = vmatprep.subr.mxu0 0.0
    %404 = vmatpush2.xpose.msra.mxu0 0.0
    %405 = vmatprep.subr.mxu0 0.0
    %406 = vmatpush2.xpose.msra.mxu0 0.0
    %407 = vmatprep.subr.mxu0 0.0
    %408 = vmatpush2.xpose.msra.mxu0 0.0
    %409 = vmatprep.subr.mxu0 0.0
    %410 = vmatpush2.xpose.msra.mxu0 0.0
    %411 = vmatprep.subr.mxu0 0.0
    %412 = vmatpush2.xpose.msra.mxu0 0.0
    %413 = vmatprep.subr.mxu0 0.0
    %414 = vmatpush2.xpose.msra.mxu0 0.0
    %415 = vmatprep.subr.mxu0 0.0
    %416 = vmatpush2.xpose.msra.mxu0 0.0
    %417 = vmatprep.subr.mxu0 0.0
    %418 = vmatpush2.xpose.msra.mxu0 0.0
    %419 = vmatprep.subr.mxu0 0.0
    %420 = vmatpush2.xpose.msra.mxu0 0.0
    %421 = vmatprep.subr.mxu0 0.0
    %422 = vmatpush2.xpose.msra.mxu0 0.0
    %423 = vmatprep.subr.mxu0 0.0
    %424 = vmatpush2.xpose.msra.mxu0 0.0
    %425 = vmatprep.subr.mxu0 0.0
    %426 = vmatpush2.xpose.msra.mxu0 0.0
    %427 = vmatprep.subr.mxu0 0.0
    %428 = vmatpush2.xpose.msra.mxu0 0.0
    %429 = vmatprep.mubr.f32.mxu0 0.0
    %430 = vmatmul.mubr.f32.gmra.mxu0 %v354
    %v431 = vpop.f32.mrf.mxu0
    %v432 = vadd.f32 0.0, %v431
    %v433 = vpop.f32.mrf.mxu0
    %434 = vmatprep.mubr.f32.mxu0 0.0
    %435 = vmatmul.mubr.f32.gmra.mxu0 %v357
    %v436 = vpop.f32.mrf.mxu0
    %v437 = vadd.f32 0.0, %v436
    %v438 = vpop.f32.mrf.mxu0
    %439 = vdwg.mxu0
    %v440 = vmul.f32 %v432, 0.35355338
    %v441 = vmul.f32 %v437, 0.35355338
    %v442 = vadd.f32 %v440, %v81
    %v443 = vadd.f32 %v441, %v82
    %v444 = vmul.f32 %v442, 1.442695
    %v445 = vpow.pop %v444
    %v446 = vmul.f32 %v443, 1.442695
    %v447 = vpow.pop %v446
    %vm448 = vcmask 130048
    %v449 = vsel %vm448, %v445, 0.0
    %450 = vadd.xlane.f32.xlu0 %v449
    %v451 = vpop.xlane.xlu0 %450
    %v452 = vsel %vm448, %v447, 0.0
    %453 = vadd.xlane.f32.xlu0 %v452
    %v454 = vpop.xlane.xlu0 %453
    %v455 = vrcp.pop %v451
    %v456 = vrcp.pop %v454
    %v457 = vmul.f32 %v445, %v455
    %v458 = vmul.f32 %v447, %v456
    %v460 = vsel %vm448, %v457, 0
    %v463 = vsel %vm448, %v458, 0
    %465 = vmatprep.subr.mxu0 0.0
    %466 = vmatpush1.msra.mxu0 0.0
    %467 = vmatprep.subr.mxu0 0.0
    %468 = vmatpush1.msra.mxu0 0.0
    %469 = vmatprep.subr.mxu0 0.0
    %470 = vmatpush1.msra.mxu0 0.0
    %471 = vmatprep.subr.mxu0 0.0
    %472 = vmatpush1.msra.mxu0 0.0
    %473 = vmatprep.subr.mxu0 0.0
    %474 = vmatpush1.msra.mxu0 0.0
    %475 = vmatprep.subr.mxu0 0.0
    %476 = vmatpush1.msra.mxu0 0.0
    %477 = vmatprep.subr.mxu0 0.0
    %478 = vmatpush1.msra.mxu0 0.0
    %479 = vmatprep.subr.mxu0 0.0
    %480 = vmatpush1.msra.mxu0 0.0
    %481 = vmatprep.subr.mxu0 0.0
    %482 = vmatpush1.msra.mxu0 0.0
    %483 = vmatprep.subr.mxu0 0.0
    %484 = vmatpush1.msra.mxu0 0.0
    %485 = vmatprep.subr.mxu0 0.0
    %486 = vmatpush1.msra.mxu0 0.0
    %487 = vmatprep.subr.mxu0 0.0
    %488 = vmatpush1.msra.mxu0 0.0
    %489 = vmatprep.subr.mxu0 0.0
    %490 = vmatpush1.msra.mxu0 0.0
    %491 = vmatprep.subr.mxu0 0.0
    %492 = vmatpush1.msra.mxu0 0.0
    %493 = vmatprep.subr.mxu0 0.0
    %494 = vmatpush1.msra.mxu0 %v349
    %495 = vmatprep.subr.mxu0 0.0
    %496 = vmatpush1.msra.mxu0 %v344
    %497 = vmatprep.subr.mxu0 0.0
    %498 = vmatpush2.msra.mxu0 0.0
    %499 = vmatprep.subr.mxu0 0.0
    %500 = vmatpush2.msra.mxu0 0.0
    %501 = vmatprep.subr.mxu0 0.0
    %502 = vmatpush2.msra.mxu0 0.0
    %503 = vmatprep.subr.mxu0 0.0
    %504 = vmatpush2.msra.mxu0 0.0
    %505 = vmatprep.subr.mxu0 0.0
    %506 = vmatpush2.msra.mxu0 0.0
    %507 = vmatprep.subr.mxu0 0.0
    %508 = vmatpush2.msra.mxu0 0.0
    %509 = vmatprep.subr.mxu0 0.0
    %510 = vmatpush2.msra.mxu0 0.0
    %511 = vmatprep.subr.mxu0 0.0
    %512 = vmatpush2.msra.mxu0 0.0
    %513 = vmatprep.subr.mxu0 0.0
    %514 = vmatpush2.msra.mxu0 0.0
    %515 = vmatprep.subr.mxu0 0.0
    %516 = vmatpush2.msra.mxu0 0.0
    %517 = vmatprep.subr.mxu0 0.0
    %518 = vmatpush2.msra.mxu0 0.0
    %519 = vmatprep.subr.mxu0 0.0
    %520 = vmatpush2.msra.mxu0 0.0
    %521 = vmatprep.subr.mxu0 0.0
    %522 = vmatpush2.msra.mxu0 0.0
    %523 = vmatprep.subr.mxu0 0.0
    %524 = vmatpush2.msra.mxu0 0.0
    %525 = vmatprep.subr.mxu0 0.0
    %526 = vmatpush2.msra.mxu0 0.0
    %527 = vmatprep.subr.mxu0 0.0
    %528 = vmatpush2.msra.mxu0 0.0
    %529 = vmatprep.mubr.f32.mxu0 0.0
    %530 = vmatmul.mubr.f32.gmra.mxu0 %v460
    %v531 = vpop.f32.mrf.mxu0
    %v532 = vadd.f32 0.0, %v531
    %v533 = vpop.f32.mrf.mxu0
    %534 = vmatprep.mubr.f32.mxu0 0.0
    %535 = vmatmul.mubr.f32.gmra.mxu0 %v463
    %v536 = vpop.f32.mrf.mxu0
    %v537 = vadd.f32 0.0, %v536
    %v538 = vpop.f32.mrf.mxu0
    %539 = vdwg.mxu0
    %v540 = vld [vmem:[%s10] sm:$0xff]
    %v542 = vsel %vm352, %v532, 0
    %v545 = vsel %vm352, %v537, 0
    %547 = vmatprep.subr.mxu0 0.0
    %548 = vmatpush1.msra.mxu0 0.0
    %549 = vmatprep.subr.mxu0 0.0
    %550 = vmatpush1.msra.mxu0 0.0
    %551 = vmatprep.subr.mxu0 0.0
    %552 = vmatpush1.msra.mxu0 0.0
    %553 = vmatprep.subr.mxu0 0.0
    %554 = vmatpush1.msra.mxu0 0.0
    %555 = vmatprep.subr.mxu0 0.0
    %556 = vmatpush1.msra.mxu0 0.0
    %557 = vmatprep.subr.mxu0 0.0
    %558 = vmatpush1.msra.mxu0 0.0
    %559 = vmatprep.subr.mxu0 0.0
    %560 = vmatpush1.msra.mxu0 0.0
    %561 = vmatprep.subr.mxu0 0.0
    %562 = vmatpush1.msra.mxu0 0.0
    %563 = vmatprep.subr.mxu0 0.0
    %564 = vmatpush1.msra.mxu0 0.0
    %565 = vmatprep.subr.mxu0 0.0
    %566 = vmatpush1.msra.mxu0 0.0
    %567 = vmatprep.subr.mxu0 0.0
    %568 = vmatpush1.msra.mxu0 0.0
    %569 = vmatprep.subr.mxu0 0.0
    %570 = vmatpush1.msra.mxu0 0.0
    %571 = vmatprep.subr.mxu0 0.0
    %572 = vmatpush1.msra.mxu0 0.0
    %573 = vmatprep.subr.mxu0 0.0
    %574 = vmatpush1.msra.mxu0 0.0
    %575 = vmatprep.subr.mxu0 0.0
    %576 = vmatpush1.msra.mxu0 0.0
    %577 = vmatprep.subr.mxu0 0.0
    %578 = vmatpush1.msra.mxu0 %v540
    %579 = vmatprep.subr.mxu0 0.0
    %580 = vmatpush2.msra.mxu0 0.0
    %581 = vmatprep.subr.mxu0 0.0
    %582 = vmatpush2.msra.mxu0 0.0
    %583 = vmatprep.subr.mxu0 0.0
    %584 = vmatpush2.msra.mxu0 0.0
    %585 = vmatprep.subr.mxu0 0.0
    %586 = vmatpush2.msra.mxu0 0.0
    %587 = vmatprep.subr.mxu0 0.0
    %588 = vmatpush2.msra.mxu0 0.0
    %589 = vmatprep.subr.mxu0 0.0
    %590 = vmatpush2.msra.mxu0 0.0
    %591 = vmatprep.subr.mxu0 0.0
    %592 = vmatpush2.msra.mxu0 0.0
    %593 = vmatprep.subr.mxu0 0.0
    %594 = vmatpush2.msra.mxu0 0.0
    %595 = vmatprep.subr.mxu0 0.0
    %596 = vmatpush2.msra.mxu0 0.0
    %597 = vmatprep.subr.mxu0 0.0
    %598 = vmatpush2.msra.mxu0 0.0
    %599 = vmatprep.subr.mxu0 0.0
    %600 = vmatpush2.msra.mxu0 0.0
    %601 = vmatprep.subr.mxu0 0.0
    %602 = vmatpush2.msra.mxu0 0.0
    %603 = vmatprep.subr.mxu0 0.0
    %604 = vmatpush2.msra.mxu0 0.0
    %605 = vmatprep.subr.mxu0 0.0
    %606 = vmatpush2.msra.mxu0 0.0
    %607 = vmatprep.subr.mxu0 0.0
    %608 = vmatpush2.msra.mxu0 0.0
    %609 = vmatprep.subr.mxu0 0.0
    %610 = vmatpush2.msra.mxu0 0.0
    %611 = vmatprep.mubr.f32.mxu0 0.0
    %612 = vmatmul.mubr.f32.gmra.mxu0 %v542
    %v613 = vpop.f32.mrf.mxu0
    %v614 = vadd.f32 0.0, %v613
    %v615 = vpop.f32.mrf.mxu0
    %616 = vmatprep.mubr.f32.mxu0 0.0
    %617 = vmatmul.mubr.f32.gmra.mxu0 %v545
    %v618 = vpop.f32.mrf.mxu0
    %v619 = vadd.f32 0.0, %v618
    %v620 = vpop.f32.mrf.mxu0
    %621 = vdwg.mxu0
    %v623 = vlaneseq
    %v624 = vshrl.u32 %v623, 7
    %v625 = vsub.s32 0, %v624
    %v626 = vrot.slane %v86, %v625
    %v628 = vadd.f32 %v626, %v614
    %v629 = vadd.f32 %v626, %v619
    %s630 = scalar_lea.vmem %s4, 32
    %v631 = vld [vmem:[%s630] sm:$0xff]
    %v632 = vld [vmem:[%s630 + $0x8] sm:$0xff]
    %v633 = vld [vmem:[%s630 + $0x10] sm:$0xff]
    %v634 = vld [vmem:[%s630 + $0x18] sm:$0xff]
    %s635 = scalar_lea.vmem %s5, 1
    %v636 = vld [vmem:[%s635] sm:$0x1]
    %v638 = vlaneseq
    %v639 = vshrl.u32 %v638, 7
    %v640 = vsub.s32 0, %v639
    %v641 = vrot.slane %v636, %v640
    %643 = vmatprep.subr.mxu0 0.0
    %644 = vmatpush1.msra.mxu0 0.0
    %645 = vmatprep.subr.mxu0 0.0
    %646 = vmatpush1.msra.mxu0 0.0
    %647 = vmatprep.subr.mxu0 0.0
    %648 = vmatpush1.msra.mxu0 0.0
    %649 = vmatprep.subr.mxu0 0.0
    %650 = vmatpush1.msra.mxu0 0.0
    %651 = vmatprep.subr.mxu0 0.0
    %652 = vmatpush1.msra.mxu0 0.0
    %653 = vmatprep.subr.mxu0 0.0
    %654 = vmatpush1.msra.mxu0 0.0
    %655 = vmatprep.subr.mxu0 0.0
    %656 = vmatpush1.msra.mxu0 0.0
    %657 = vmatprep.subr.mxu0 0.0
    %658 = vmatpush1.msra.mxu0 0.0
    %659 = vmatprep.subr.mxu0 0.0
    %660 = vmatpush1.msra.mxu0 0.0
    %661 = vmatprep.subr.mxu0 0.0
    %662 = vmatpush1.msra.mxu0 0.0
    %663 = vmatprep.subr.mxu0 0.0
    %664 = vmatpush1.msra.mxu0 0.0
    %665 = vmatprep.subr.mxu0 0.0
    %666 = vmatpush1.msra.mxu0 0.0
    %667 = vmatprep.subr.mxu0 0.0
    %668 = vmatpush1.msra.mxu0 %v634
    %669 = vmatprep.subr.mxu0 0.0
    %670 = vmatpush1.msra.mxu0 %v633
    %671 = vmatprep.subr.mxu0 0.0
    %672 = vmatpush1.msra.mxu0 %v632
    %673 = vmatprep.subr.mxu0 0.0
    %674 = vmatpush1.msra.mxu0 %v631
    %675 = vmatprep.subr.mxu0 0.0
    %676 = vmatpush2.msra.mxu0 0.0
    %677 = vmatprep.subr.mxu0 0.0
    %678 = vmatpush2.msra.mxu0 0.0
    %679 = vmatprep.subr.mxu0 0.0
    %680 = vmatpush2.msra.mxu0 0.0
    %681 = vmatprep.subr.mxu0 0.0
    %682 = vmatpush2.msra.mxu0 0.0
    %683 = vmatprep.subr.mxu0 0.0
    %684 = vmatpush2.msra.mxu0 0.0
    %685 = vmatprep.subr.mxu0 0.0
    %686 = vmatpush2.msra.mxu0 0.0
    %687 = vmatprep.subr.mxu0 0.0
    %688 = vmatpush2.msra.mxu0 0.0
    %689 = vmatprep.subr.mxu0 0.0
    %690 = vmatpush2.msra.mxu0 0.0
    %691 = vmatprep.subr.mxu0 0.0
    %692 = vmatpush2.msra.mxu0 0.0
    %693 = vmatprep.subr.mxu0 0.0
    %694 = vmatpush2.msra.mxu0 0.0
    %695 = vmatprep.subr.mxu0 0.0
    %696 = vmatpush2.msra.mxu0 0.0
    %697 = vmatprep.subr.mxu0 0.0
    %698 = vmatpush2.msra.mxu0 0.0
    %699 = vmatprep.subr.mxu0 0.0
    %700 = vmatpush2.msra.mxu0 0.0
    %701 = vmatprep.subr.mxu0 0.0
    %702 = vmatpush2.msra.mxu0 0.0
    %703 = vmatprep.subr.mxu0 0.0
    %704 = vmatpush2.msra.mxu0 0.0
    %705 = vmatprep.subr.mxu0 0.0
    %706 = vmatpush2.msra.mxu0 0.0
    %707 = vmatprep.mubr.f32.mxu0 0.0
    %708 = vmatmul.mubr.f32.gmra.mxu0 %v100
    %v709 = vpop.f32.mrf.mxu0
    %v710 = vadd.f32 %v641, %v709
    %v711 = vpop.f32.mrf.mxu0
    %712 = vmatprep.mubr.f32.mxu0 0.0
    %713 = vmatmul.mubr.f32.gmra.mxu0 %v103
    %v714 = vpop.f32.mrf.mxu0
    %v715 = vadd.f32 %v641, %v714
    %v716 = vpop.f32.mrf.mxu0
    %717 = vdwg.mxu0
    %s718 = scalar_lea.vmem %s6, 32
    %v719 = vld [vmem:[%s718] sm:$0xff]
    %v720 = vld [vmem:[%s718 + $0x8] sm:$0xff]
    %v721 = vld [vmem:[%s718 + $0x10] sm:$0xff]
    %v722 = vld [vmem:[%s718 + $0x18] sm:$0xff]
    %s723 = scalar_lea.vmem %s7, 1
    %v724 = vld [vmem:[%s723] sm:$0x1]
    %v726 = vlaneseq
    %v727 = vshrl.u32 %v726, 7
    %v728 = vsub.s32 0, %v727
    %v729 = vrot.slane %v724, %v728
    %731 = vmatprep.subr.mxu0 0.0
    %732 = vmatpush1.msra.mxu0 0.0
    %733 = vmatprep.subr.mxu0 0.0
    %734 = vmatpush1.msra.mxu0 0.0
    %735 = vmatprep.subr.mxu0 0.0
    %736 = vmatpush1.msra.mxu0 0.0
    %737 = vmatprep.subr.mxu0 0.0
    %738 = vmatpush1.msra.mxu0 0.0
    %739 = vmatprep.subr.mxu0 0.0
    %740 = vmatpush1.msra.mxu0 0.0
    %741 = vmatprep.subr.mxu0 0.0
    %742 = vmatpush1.msra.mxu0 0.0
    %743 = vmatprep.subr.mxu0 0.0
    %744 = vmatpush1.msra.mxu0 0.0
    %745 = vmatprep.subr.mxu0 0.0
    %746 = vmatpush1.msra.mxu0 0.0
    %747 = vmatprep.subr.mxu0 0.0
    %748 = vmatpush1.msra.mxu0 0.0
    %749 = vmatprep.subr.mxu0 0.0
    %750 = vmatpush1.msra.mxu0 0.0
    %751 = vmatprep.subr.mxu0 0.0
    %752 = vmatpush1.msra.mxu0 0.0
    %753 = vmatprep.subr.mxu0 0.0
    %754 = vmatpush1.msra.mxu0 0.0
    %755 = vmatprep.subr.mxu0 0.0
    %756 = vmatpush1.msra.mxu0 %v722
    %757 = vmatprep.subr.mxu0 0.0
    %758 = vmatpush1.msra.mxu0 %v721
    %759 = vmatprep.subr.mxu0 0.0
    %760 = vmatpush1.msra.mxu0 %v720
    %761 = vmatprep.subr.mxu0 0.0
    %762 = vmatpush1.msra.mxu0 %v719
    %763 = vmatprep.subr.mxu0 0.0
    %764 = vmatpush2.msra.mxu0 0.0
    %765 = vmatprep.subr.mxu0 0.0
    %766 = vmatpush2.msra.mxu0 0.0
    %767 = vmatprep.subr.mxu0 0.0
    %768 = vmatpush2.msra.mxu0 0.0
    %769 = vmatprep.subr.mxu0 0.0
    %770 = vmatpush2.msra.mxu0 0.0
    %771 = vmatprep.subr.mxu0 0.0
    %772 = vmatpush2.msra.mxu0 0.0
    %773 = vmatprep.subr.mxu0 0.0
    %774 = vmatpush2.msra.mxu0 0.0
    %775 = vmatprep.subr.mxu0 0.0
    %776 = vmatpush2.msra.mxu0 0.0
    %777 = vmatprep.subr.mxu0 0.0
    %778 = vmatpush2.msra.mxu0 0.0
    %779 = vmatprep.subr.mxu0 0.0
    %780 = vmatpush2.msra.mxu0 0.0
    %781 = vmatprep.subr.mxu0 0.0
    %782 = vmatpush2.msra.mxu0 0.0
    %783 = vmatprep.subr.mxu0 0.0
    %784 = vmatpush2.msra.mxu0 0.0
    %785 = vmatprep.subr.mxu0 0.0
    %786 = vmatpush2.msra.mxu0 0.0
    %787 = vmatprep.subr.mxu0 0.0
    %788 = vmatpush2.msra.mxu0 0.0
    %789 = vmatprep.subr.mxu0 0.0
    %790 = vmatpush2.msra.mxu0 0.0
    %791 = vmatprep.subr.mxu0 0.0
    %792 = vmatpush2.msra.mxu0 0.0
    %793 = vmatprep.subr.mxu0 0.0
    %794 = vmatpush2.msra.mxu0 0.0
    %795 = vmatprep.mubr.f32.mxu0 0.0
    %796 = vmatmul.mubr.f32.gmra.mxu0 %v100
    %v797 = vpop.f32.mrf.mxu0
    %v798 = vadd.f32 %v729, %v797
    %v799 = vpop.f32.mrf.mxu0
    %800 = vmatprep.mubr.f32.mxu0 0.0
    %801 = vmatmul.mubr.f32.gmra.mxu0 %v103
    %v802 = vpop.f32.mrf.mxu0
    %v803 = vadd.f32 %v729, %v802
    %v804 = vpop.f32.mrf.mxu0
    %805 = vdwg.mxu0
    %s806 = scalar_lea.vmem %s8, 32
    %v807 = vld [vmem:[%s806] sm:$0xff]
    %v808 = vld [vmem:[%s806 + $0x8] sm:$0xff]
    %v809 = vld [vmem:[%s806 + $0x10] sm:$0xff]
    %v810 = vld [vmem:[%s806 + $0x18] sm:$0xff]
    %s811 = scalar_lea.vmem %s9, 1
    %v812 = vld [vmem:[%s811] sm:$0x1]
    %v814 = vlaneseq
    %v815 = vshrl.u32 %v814, 7
    %v816 = vsub.s32 0, %v815
    %v817 = vrot.slane %v812, %v816
    %819 = vmatprep.subr.mxu0 0.0
    %820 = vmatpush1.msra.mxu0 0.0
    %821 = vmatprep.subr.mxu0 0.0
    %822 = vmatpush1.msra.mxu0 0.0
    %823 = vmatprep.subr.mxu0 0.0
    %824 = vmatpush1.msra.mxu0 0.0
    %825 = vmatprep.subr.mxu0 0.0
    %826 = vmatpush1.msra.mxu0 0.0
    %827 = vmatprep.subr.mxu0 0.0
    %828 = vmatpush1.msra.mxu0 0.0
    %829 = vmatprep.subr.mxu0 0.0
    %830 = vmatpush1.msra.mxu0 0.0
    %831 = vmatprep.subr.mxu0 0.0
    %832 = vmatpush1.msra.mxu0 0.0
    %833 = vmatprep.subr.mxu0 0.0
    %834 = vmatpush1.msra.mxu0 0.0
    %835 = vmatprep.subr.mxu0 0.0
    %836 = vmatpush1.msra.mxu0 0.0
    %837 = vmatprep.subr.mxu0 0.0
    %838 = vmatpush1.msra.mxu0 0.0
    %839 = vmatprep.subr.mxu0 0.0
    %840 = vmatpush1.msra.mxu0 0.0
    %841 = vmatprep.subr.mxu0 0.0
    %842 = vmatpush1.msra.mxu0 0.0
    %843 = vmatprep.subr.mxu0 0.0
    %844 = vmatpush1.msra.mxu0 %v810
    %845 = vmatprep.subr.mxu0 0.0
    %846 = vmatpush1.msra.mxu0 %v809
    %847 = vmatprep.subr.mxu0 0.0
    %848 = vmatpush1.msra.mxu0 %v808
    %849 = vmatprep.subr.mxu0 0.0
    %850 = vmatpush1.msra.mxu0 %v807
    %851 = vmatprep.subr.mxu0 0.0
    %852 = vmatpush2.msra.mxu0 0.0
    %853 = vmatprep.subr.mxu0 0.0
    %854 = vmatpush2.msra.mxu0 0.0
    %855 = vmatprep.subr.mxu0 0.0
    %856 = vmatpush2.msra.mxu0 0.0
    %857 = vmatprep.subr.mxu0 0.0
    %858 = vmatpush2.msra.mxu0 0.0
    %859 = vmatprep.subr.mxu0 0.0
    %860 = vmatpush2.msra.mxu0 0.0
    %861 = vmatprep.subr.mxu0 0.0
    %862 = vmatpush2.msra.mxu0 0.0
    %863 = vmatprep.subr.mxu0 0.0
    %864 = vmatpush2.msra.mxu0 0.0
    %865 = vmatprep.subr.mxu0 0.0
    %866 = vmatpush2.msra.mxu0 0.0
    %867 = vmatprep.subr.mxu0 0.0
    %868 = vmatpush2.msra.mxu0 0.0
    %869 = vmatprep.subr.mxu0 0.0
    %870 = vmatpush2.msra.mxu0 0.0
    %871 = vmatprep.subr.mxu0 0.0
    %872 = vmatpush2.msra.mxu0 0.0
    %873 = vmatprep.subr.mxu0 0.0
    %874 = vmatpush2.msra.mxu0 0.0
    %875 = vmatprep.subr.mxu0 0.0
    %876 = vmatpush2.msra.mxu0 0.0
    %877 = vmatprep.subr.mxu0 0.0
    %878 = vmatpush2.msra.mxu0 0.0
    %879 = vmatprep.subr.mxu0 0.0
    %880 = vmatpush2.msra.mxu0 0.0
    %881 = vmatprep.subr.mxu0 0.0
    %882 = vmatpush2.msra.mxu0 0.0
    %883 = vmatprep.mubr.f32.mxu0 0.0
    %884 = vmatmul.mubr.f32.gmra.mxu0 %v100
    %v885 = vpop.f32.mrf.mxu0
    %v886 = vadd.f32 %v817, %v885
    %v887 = vpop.f32.mrf.mxu0
    %888 = vmatprep.mubr.f32.mxu0 0.0
    %889 = vmatmul.mubr.f32.gmra.mxu0 %v103
    %v890 = vpop.f32.mrf.mxu0
    %v891 = vadd.f32 %v817, %v890
    %v892 = vpop.f32.mrf.mxu0
    %893 = vdwg.mxu0
    %v895 = vsel %vm352, %v710, 0
    %v898 = vsel %vm352, %v715, 0
    %v901 = vsel %vm352, %v798, 0
    %v904 = vsel %vm352, %v803, 0
    %906 = vmatprep.subr.mxu0 0.0
    %907 = vmatpush1.xpose.msra.mxu0 0.0
    %908 = vmatprep.subr.mxu0 0.0
    %909 = vmatpush1.xpose.msra.mxu0 0.0
    %910 = vmatprep.subr.mxu0 0.0
    %911 = vmatpush1.xpose.msra.mxu0 0.0
    %912 = vmatprep.subr.mxu0 0.0
    %913 = vmatpush1.xpose.msra.mxu0 0.0
    %914 = vmatprep.subr.mxu0 0.0
    %915 = vmatpush1.xpose.msra.mxu0 0.0
    %916 = vmatprep.subr.mxu0 0.0
    %917 = vmatpush1.xpose.msra.mxu0 0.0
    %918 = vmatprep.subr.mxu0 0.0
    %919 = vmatpush1.xpose.msra.mxu0 0.0
    %920 = vmatprep.subr.mxu0 0.0
    %921 = vmatpush1.xpose.msra.mxu0 0.0
    %922 = vmatprep.subr.mxu0 0.0
    %923 = vmatpush1.xpose.msra.mxu0 0.0
    %924 = vmatprep.subr.mxu0 0.0
    %925 = vmatpush1.xpose.msra.mxu0 0.0
    %926 = vmatprep.subr.mxu0 0.0
    %927 = vmatpush1.xpose.msra.mxu0 0.0
    %928 = vmatprep.subr.mxu0 0.0
    %929 = vmatpush1.xpose.msra.mxu0 0.0
    %930 = vmatprep.subr.mxu0 0.0
    %931 = vmatpush1.xpose.msra.mxu0 0.0
    %932 = vmatprep.subr.mxu0 0.0
    %933 = vmatpush1.xpose.msra.mxu0 0.0
    %934 = vmatprep.subr.mxu0 0.0
    %935 = vmatpush1.xpose.msra.mxu0 %v904
    %936 = vmatprep.subr.mxu0 0.0
    %937 = vmatpush1.xpose.msra.mxu0 %v901
    %938 = vmatprep.subr.mxu0 0.0
    %939 = vmatpush2.xpose.msra.mxu0 0.0
    %940 = vmatprep.subr.mxu0 0.0
    %941 = vmatpush2.xpose.msra.mxu0 0.0
    %942 = vmatprep.subr.mxu0 0.0
    %943 = vmatpush2.xpose.msra.mxu0 0.0
    %944 = vmatprep.subr.mxu0 0.0
    %945 = vmatpush2.xpose.msra.mxu0 0.0
    %946 = vmatprep.subr.mxu0 0.0
    %947 = vmatpush2.xpose.msra.mxu0 0.0
    %948 = vmatprep.subr.mxu0 0.0
    %949 = vmatpush2.xpose.msra.mxu0 0.0
    %950 = vmatprep.subr.mxu0 0.0
    %951 = vmatpush2.xpose.msra.mxu0 0.0
    %952 = vmatprep.subr.mxu0 0.0
    %953 = vmatpush2.xpose.msra.mxu0 0.0
    %954 = vmatprep.subr.mxu0 0.0
    %955 = vmatpush2.xpose.msra.mxu0 0.0
    %956 = vmatprep.subr.mxu0 0.0
    %957 = vmatpush2.xpose.msra.mxu0 0.0
    %958 = vmatprep.subr.mxu0 0.0
    %959 = vmatpush2.xpose.msra.mxu0 0.0
    %960 = vmatprep.subr.mxu0 0.0
    %961 = vmatpush2.xpose.msra.mxu0 0.0
    %962 = vmatprep.subr.mxu0 0.0
    %963 = vmatpush2.xpose.msra.mxu0 0.0
    %964 = vmatprep.subr.mxu0 0.0
    %965 = vmatpush2.xpose.msra.mxu0 0.0
    %966 = vmatprep.subr.mxu0 0.0
    %967 = vmatpush2.xpose.msra.mxu0 0.0
    %968 = vmatprep.subr.mxu0 0.0
    %969 = vmatpush2.xpose.msra.mxu0 0.0
    %970 = vmatprep.mubr.f32.mxu0 0.0
    %971 = vmatmul.mubr.f32.gmra.mxu0 %v895
    %v972 = vpop.f32.mrf.mxu0
    %v973 = vadd.f32 0.0, %v972
    %v974 = vpop.f32.mrf.mxu0
    %975 = vmatprep.mubr.f32.mxu0 0.0
    %976 = vmatmul.mubr.f32.gmra.mxu0 %v898
    %v977 = vpop.f32.mrf.mxu0
    %v978 = vadd.f32 0.0, %v977
    %v979 = vpop.f32.mrf.mxu0
    %980 = vdwg.mxu0
    %v981 = vmul.f32 %v973, 0.35355338
    %v982 = vmul.f32 %v978, 0.35355338
    %v983 = vadd.f32 %v981, %v81
    %v984 = vadd.f32 %v982, %v82
    %v985 = vmul.f32 %v983, 1.442695
    %v986 = vpow.pop %v985
    %v987 = vmul.f32 %v984, 1.442695
    %v988 = vpow.pop %v987
    %v989 = vsel %vm448, %v986, 0.0
    %990 = vadd.xlane.f32.xlu0 %v989
    %v991 = vpop.xlane.xlu0 %990
    %v992 = vsel %vm448, %v988, 0.0
    %993 = vadd.xlane.f32.xlu0 %v992
    %v994 = vpop.xlane.xlu0 %993
    %v995 = vrcp.pop %v991
    %v996 = vrcp.pop %v994
    %v997 = vmul.f32 %v986, %v995
    %v998 = vmul.f32 %v988, %v996
    %v1000 = vsel %vm448, %v997, 0
    %v1003 = vsel %vm448, %v998, 0
    %1005 = vmatprep.subr.mxu0 0.0
    %1006 = vmatpush1.msra.mxu0 0.0
    %1007 = vmatprep.subr.mxu0 0.0
    %1008 = vmatpush1.msra.mxu0 0.0
    %1009 = vmatprep.subr.mxu0 0.0
    %1010 = vmatpush1.msra.mxu0 0.0
    %1011 = vmatprep.subr.mxu0 0.0
    %1012 = vmatpush1.msra.mxu0 0.0
    %1013 = vmatprep.subr.mxu0 0.0
    %1014 = vmatpush1.msra.mxu0 0.0
    %1015 = vmatprep.subr.mxu0 0.0
    %1016 = vmatpush1.msra.mxu0 0.0
    %1017 = vmatprep.subr.mxu0 0.0
    %1018 = vmatpush1.msra.mxu0 0.0
    %1019 = vmatprep.subr.mxu0 0.0
    %1020 = vmatpush1.msra.mxu0 0.0
    %1021 = vmatprep.subr.mxu0 0.0
    %1022 = vmatpush1.msra.mxu0 0.0
    %1023 = vmatprep.subr.mxu0 0.0
    %1024 = vmatpush1.msra.mxu0 0.0
    %1025 = vmatprep.subr.mxu0 0.0
    %1026 = vmatpush1.msra.mxu0 0.0
    %1027 = vmatprep.subr.mxu0 0.0
    %1028 = vmatpush1.msra.mxu0 0.0
    %1029 = vmatprep.subr.mxu0 0.0
    %1030 = vmatpush1.msra.mxu0 0.0
    %1031 = vmatprep.subr.mxu0 0.0
    %1032 = vmatpush1.msra.mxu0 0.0
    %1033 = vmatprep.subr.mxu0 0.0
    %1034 = vmatpush1.msra.mxu0 %v891
    %1035 = vmatprep.subr.mxu0 0.0
    %1036 = vmatpush1.msra.mxu0 %v886
    %1037 = vmatprep.subr.mxu0 0.0
    %1038 = vmatpush2.msra.mxu0 0.0
    %1039 = vmatprep.subr.mxu0 0.0
    %1040 = vmatpush2.msra.mxu0 0.0
    %1041 = vmatprep.subr.mxu0 0.0
    %1042 = vmatpush2.msra.mxu0 0.0
    %1043 = vmatprep.subr.mxu0 0.0
    %1044 = vmatpush2.msra.mxu0 0.0
    %1045 = vmatprep.subr.mxu0 0.0
    %1046 = vmatpush2.msra.mxu0 0.0
    %1047 = vmatprep.subr.mxu0 0.0
    %1048 = vmatpush2.msra.mxu0 0.0
    %1049 = vmatprep.subr.mxu0 0.0
    %1050 = vmatpush2.msra.mxu0 0.0
    %1051 = vmatprep.subr.mxu0 0.0
    %1052 = vmatpush2.msra.mxu0 0.0
    %1053 = vmatprep.subr.mxu0 0.0
    %1054 = vmatpush2.msra.mxu0 0.0
    %1055 = vmatprep.subr.mxu0 0.0
    %1056 = vmatpush2.msra.mxu0 0.0
    %1057 = vmatprep.subr.mxu0 0.0
    %1058 = vmatpush2.msra.mxu0 0.0
    %1059 = vmatprep.subr.mxu0 0.0
    %1060 = vmatpush2.msra.mxu0 0.0
    %1061 = vmatprep.subr.mxu0 0.0
    %1062 = vmatpush2.msra.mxu0 0.0
    %1063 = vmatprep.subr.mxu0 0.0
    %1064 = vmatpush2.msra.mxu0 0.0
    %1065 = vmatprep.subr.mxu0 0.0
    %1066 = vmatpush2.msra.mxu0 0.0
    %1067 = vmatprep.subr.mxu0 0.0
    %1068 = vmatpush2.msra.mxu0 0.0
    %1069 = vmatprep.mubr.f32.mxu0 0.0
    %1070 = vmatmul.mubr.f32.gmra.mxu0 %v1000
    %v1071 = vpop.f32.mrf.mxu0
    %v1072 = vadd.f32 0.0, %v1071
    %v1073 = vpop.f32.mrf.mxu0
    %1074 = vmatprep.mubr.f32.mxu0 0.0
    %1075 = vmatmul.mubr.f32.gmra.mxu0 %v1003
    %v1076 = vpop.f32.mrf.mxu0
    %v1077 = vadd.f32 0.0, %v1076
    %v1078 = vpop.f32.mrf.mxu0
    %1079 = vdwg.mxu0
    %s1080 = scalar_lea.vmem %s10, 8
    %v1081 = vld [vmem:[%s1080] sm:$0xff]
    %v1083 = vsel %vm352, %v1072, 0
    %v1086 = vsel %vm352, %v1077, 0
    %1088 = vmatprep.subr.mxu0 0.0
    %1089 = vmatpush1.msra.mxu0 0.0
    %1090 = vmatprep.subr.mxu0 0.0
    %1091 = vmatpush1.msra.mxu0 0.0
    %1092 = vmatprep.subr.mxu0 0.0
    %1093 = vmatpush1.msra.mxu0 0.0
    %1094 = vmatprep.subr.mxu0 0.0
    %1095 = vmatpush1.msra.mxu0 0.0
    %1096 = vmatprep.subr.mxu0 0.0
    %1097 = vmatpush1.msra.mxu0 0.0
    %1098 = vmatprep.subr.mxu0 0.0
    %1099 = vmatpush1.msra.mxu0 0.0
    %1100 = vmatprep.subr.mxu0 0.0
    %1101 = vmatpush1.msra.mxu0 0.0
    %1102 = vmatprep.subr.mxu0 0.0
    %1103 = vmatpush1.msra.mxu0 0.0
    %1104 = vmatprep.subr.mxu0 0.0
    %1105 = vmatpush1.msra.mxu0 0.0
    %1106 = vmatprep.subr.mxu0 0.0
    %1107 = vmatpush1.msra.mxu0 0.0
    %1108 = vmatprep.subr.mxu0 0.0
    %1109 = vmatpush1.msra.mxu0 0.0
    %1110 = vmatprep.subr.mxu0 0.0
    %1111 = vmatpush1.msra.mxu0 0.0
    %1112 = vmatprep.subr.mxu0 0.0
    %1113 = vmatpush1.msra.mxu0 0.0
    %1114 = vmatprep.subr.mxu0 0.0
    %1115 = vmatpush1.msra.mxu0 0.0
    %1116 = vmatprep.subr.mxu0 0.0
    %1117 = vmatpush1.msra.mxu0 0.0
    %1118 = vmatprep.subr.mxu0 0.0
    %1119 = vmatpush1.msra.mxu0 %v1081
    %1120 = vmatprep.subr.mxu0 0.0
    %1121 = vmatpush2.msra.mxu0 0.0
    %1122 = vmatprep.subr.mxu0 0.0
    %1123 = vmatpush2.msra.mxu0 0.0
    %1124 = vmatprep.subr.mxu0 0.0
    %1125 = vmatpush2.msra.mxu0 0.0
    %1126 = vmatprep.subr.mxu0 0.0
    %1127 = vmatpush2.msra.mxu0 0.0
    %1128 = vmatprep.subr.mxu0 0.0
    %1129 = vmatpush2.msra.mxu0 0.0
    %1130 = vmatprep.subr.mxu0 0.0
    %1131 = vmatpush2.msra.mxu0 0.0
    %1132 = vmatprep.subr.mxu0 0.0
    %1133 = vmatpush2.msra.mxu0 0.0
    %1134 = vmatprep.subr.mxu0 0.0
    %1135 = vmatpush2.msra.mxu0 0.0
    %1136 = vmatprep.subr.mxu0 0.0
    %1137 = vmatpush2.msra.mxu0 0.0
    %1138 = vmatprep.subr.mxu0 0.0
    %1139 = vmatpush2.msra.mxu0 0.0
    %1140 = vmatprep.subr.mxu0 0.0
    %1141 = vmatpush2.msra.mxu0 0.0
    %1142 = vmatprep.subr.mxu0 0.0
    %1143 = vmatpush2.msra.mxu0 0.0
    %1144 = vmatprep.subr.mxu0 0.0
    %1145 = vmatpush2.msra.mxu0 0.0
    %1146 = vmatprep.subr.mxu0 0.0
    %1147 = vmatpush2.msra.mxu0 0.0
    %1148 = vmatprep.subr.mxu0 0.0
    %1149 = vmatpush2.msra.mxu0 0.0
    %1150 = vmatprep.subr.mxu0 0.0
    %1151 = vmatpush2.msra.mxu0 0.0
    %1152 = vmatprep.mubr.f32.mxu0 0.0
    %1153 = vmatmul.mubr.f32.gmra.mxu0 %v1083
    %v1154 = vpop.f32.mrf.mxu0
    %v1155 = vadd.f32 0.0, %v1154
    %v1156 = vpop.f32.mrf.mxu0
    %1157 = vmatprep.mubr.f32.mxu0 0.0
    %1158 = vmatmul.mubr.f32.gmra.mxu0 %v1086
    %v1159 = vpop.f32.mrf.mxu0
    %v1160 = vadd.f32 0.0, %v1159
    %v1161 = vpop.f32.mrf.mxu0
    %1162 = vdwg.mxu0
    %v1163 = vadd.f32 %v628, %v1155
    %v1164 = vadd.f32 %v629, %v1160
    %s1165 = scalar_lea.vmem %s4, 64
    %v1166 = vld [vmem:[%s1165] sm:$0xff]
    %v1167 = vld [vmem:[%s1165 + $0x8] sm:$0xff]
    %v1168 = vld [vmem:[%s1165 + $0x10] sm:$0xff]
    %v1169 = vld [vmem:[%s1165 + $0x18] sm:$0xff]
    %s1170 = scalar_lea.vmem %s5, 2
    %v1171 = vld [vmem:[%s1170] sm:$0x1]
    %v1173 = vlaneseq
    %v1174 = vshrl.u32 %v1173, 7
    %v1175 = vsub.s32 0, %v1174
    %v1176 = vrot.slane %v1171, %v1175
    %1178 = vmatprep.subr.mxu0 0.0
    %1179 = vmatpush1.msra.mxu0 0.0
    %1180 = vmatprep.subr.mxu0 0.0
    %1181 = vmatpush1.msra.mxu0 0.0
    %1182 = vmatprep.subr.mxu0 0.0
    %1183 = vmatpush1.msra.mxu0 0.0
    %1184 = vmatprep.subr.mxu0 0.0
    %1185 = vmatpush1.msra.mxu0 0.0
    %1186 = vmatprep.subr.mxu0 0.0
    %1187 = vmatpush1.msra.mxu0 0.0
    %1188 = vmatprep.subr.mxu0 0.0
    %1189 = vmatpush1.msra.mxu0 0.0
    %1190 = vmatprep.subr.mxu0 0.0
    %1191 = vmatpush1.msra.mxu0 0.0
    %1192 = vmatprep.subr.mxu0 0.0
    %1193 = vmatpush1.msra.mxu0 0.0
    %1194 = vmatprep.subr.mxu0 0.0
    %1195 = vmatpush1.msra.mxu0 0.0
    %1196 = vmatprep.subr.mxu0 0.0
    %1197 = vmatpush1.msra.mxu0 0.0
    %1198 = vmatprep.subr.mxu0 0.0
    %1199 = vmatpush1.msra.mxu0 0.0
    %1200 = vmatprep.subr.mxu0 0.0
    %1201 = vmatpush1.msra.mxu0 0.0
    %1202 = vmatprep.subr.mxu0 0.0
    %1203 = vmatpush1.msra.mxu0 %v1169
    %1204 = vmatprep.subr.mxu0 0.0
    %1205 = vmatpush1.msra.mxu0 %v1168
    %1206 = vmatprep.subr.mxu0 0.0
    %1207 = vmatpush1.msra.mxu0 %v1167
    %1208 = vmatprep.subr.mxu0 0.0
    %1209 = vmatpush1.msra.mxu0 %v1166
    %1210 = vmatprep.subr.mxu0 0.0
    %1211 = vmatpush2.msra.mxu0 0.0
    %1212 = vmatprep.subr.mxu0 0.0
    %1213 = vmatpush2.msra.mxu0 0.0
    %1214 = vmatprep.subr.mxu0 0.0
    %1215 = vmatpush2.msra.mxu0 0.0
    %1216 = vmatprep.subr.mxu0 0.0
    %1217 = vmatpush2.msra.mxu0 0.0
    %1218 = vmatprep.subr.mxu0 0.0
    %1219 = vmatpush2.msra.mxu0 0.0
    %1220 = vmatprep.subr.mxu0 0.0
    %1221 = vmatpush2.msra.mxu0 0.0
    %1222 = vmatprep.subr.mxu0 0.0
    %1223 = vmatpush2.msra.mxu0 0.0
    %1224 = vmatprep.subr.mxu0 0.0
    %1225 = vmatpush2.msra.mxu0 0.0
    %1226 = vmatprep.subr.mxu0 0.0
    %1227 = vmatpush2.msra.mxu0 0.0
    %1228 = vmatprep.subr.mxu0 0.0
    %1229 = vmatpush2.msra.mxu0 0.0
    %1230 = vmatprep.subr.mxu0 0.0
    %1231 = vmatpush2.msra.mxu0 0.0
    %1232 = vmatprep.subr.mxu0 0.0
    %1233 = vmatpush2.msra.mxu0 0.0
    %1234 = vmatprep.subr.mxu0 0.0
    %1235 = vmatpush2.msra.mxu0 0.0
    %1236 = vmatprep.subr.mxu0 0.0
    %1237 = vmatpush2.msra.mxu0 0.0
    %1238 = vmatprep.subr.mxu0 0.0
    %1239 = vmatpush2.msra.mxu0 0.0
    %1240 = vmatprep.subr.mxu0 0.0
    %1241 = vmatpush2.msra.mxu0 0.0
    %1242 = vmatprep.mubr.f32.mxu0 0.0
    %1243 = vmatmul.mubr.f32.gmra.mxu0 %v100
    %v1244 = vpop.f32.mrf.mxu0
    %v1245 = vadd.f32 %v1176, %v1244
    %v1246 = vpop.f32.mrf.mxu0
    %1247 = vmatprep.mubr.f32.mxu0 0.0
    %1248 = vmatmul.mubr.f32.gmra.mxu0 %v103
    %v1249 = vpop.f32.mrf.mxu0
    %v1250 = vadd.f32 %v1176, %v1249
    %v1251 = vpop.f32.mrf.mxu0
    %1252 = vdwg.mxu0
    %s1253 = scalar_lea.vmem %s6, 64
    %v1254 = vld [vmem:[%s1253] sm:$0xff]
    %v1255 = vld [vmem:[%s1253 + $0x8] sm:$0xff]
    %v1256 = vld [vmem:[%s1253 + $0x10] sm:$0xff]
    %v1257 = vld [vmem:[%s1253 + $0x18] sm:$0xff]
    %s1258 = scalar_lea.vmem %s7, 2
    %v1259 = vld [vmem:[%s1258] sm:$0x1]
    %v1261 = vlaneseq
    %v1262 = vshrl.u32 %v1261, 7
    %v1263 = vsub.s32 0, %v1262
    %v1264 = vrot.slane %v1259, %v1263
    %1266 = vmatprep.subr.mxu0 0.0
    %1267 = vmatpush1.msra.mxu0 0.0
    %1268 = vmatprep.subr.mxu0 0.0
    %1269 = vmatpush1.msra.mxu0 0.0
    %1270 = vmatprep.subr.mxu0 0.0
    %1271 = vmatpush1.msra.mxu0 0.0
    %1272 = vmatprep.subr.mxu0 0.0
    %1273 = vmatpush1.msra.mxu0 0.0
    %1274 = vmatprep.subr.mxu0 0.0
    %1275 = vmatpush1.msra.mxu0 0.0
    %1276 = vmatprep.subr.mxu0 0.0
    %1277 = vmatpush1.msra.mxu0 0.0
    %1278 = vmatprep.subr.mxu0 0.0
    %1279 = vmatpush1.msra.mxu0 0.0
    %1280 = vmatprep.subr.mxu0 0.0
    %1281 = vmatpush1.msra.mxu0 0.0
    %1282 = vmatprep.subr.mxu0 0.0
    %1283 = vmatpush1.msra.mxu0 0.0
    %1284 = vmatprep.subr.mxu0 0.0
    %1285 = vmatpush1.msra.mxu0 0.0
    %1286 = vmatprep.subr.mxu0 0.0
    %1287 = vmatpush1.msra.mxu0 0.0
    %1288 = vmatprep.subr.mxu0 0.0
    %1289 = vmatpush1.msra.mxu0 0.0
    %1290 = vmatprep.subr.mxu0 0.0
    %1291 = vmatpush1.msra.mxu0 %v1257
    %1292 = vmatprep.subr.mxu0 0.0
    %1293 = vmatpush1.msra.mxu0 %v1256
    %1294 = vmatprep.subr.mxu0 0.0
    %1295 = vmatpush1.msra.mxu0 %v1255
    %1296 = vmatprep.subr.mxu0 0.0
    %1297 = vmatpush1.msra.mxu0 %v1254
    %1298 = vmatprep.subr.mxu0 0.0
    %1299 = vmatpush2.msra.mxu0 0.0
    %1300 = vmatprep.subr.mxu0 0.0
    %1301 = vmatpush2.msra.mxu0 0.0
    %1302 = vmatprep.subr.mxu0 0.0
    %1303 = vmatpush2.msra.mxu0 0.0
    %1304 = vmatprep.subr.mxu0 0.0
    %1305 = vmatpush2.msra.mxu0 0.0
    %1306 = vmatprep.subr.mxu0 0.0
    %1307 = vmatpush2.msra.mxu0 0.0
    %1308 = vmatprep.subr.mxu0 0.0
    %1309 = vmatpush2.msra.mxu0 0.0
    %1310 = vmatprep.subr.mxu0 0.0
    %1311 = vmatpush2.msra.mxu0 0.0
    %1312 = vmatprep.subr.mxu0 0.0
    %1313 = vmatpush2.msra.mxu0 0.0
    %1314 = vmatprep.subr.mxu0 0.0
    %1315 = vmatpush2.msra.mxu0 0.0
    %1316 = vmatprep.subr.mxu0 0.0
    %1317 = vmatpush2.msra.mxu0 0.0
    %1318 = vmatprep.subr.mxu0 0.0
    %1319 = vmatpush2.msra.mxu0 0.0
    %1320 = vmatprep.subr.mxu0 0.0
    %1321 = vmatpush2.msra.mxu0 0.0
    %1322 = vmatprep.subr.mxu0 0.0
    %1323 = vmatpush2.msra.mxu0 0.0
    %1324 = vmatprep.subr.mxu0 0.0
    %1325 = vmatpush2.msra.mxu0 0.0
    %1326 = vmatprep.subr.mxu0 0.0
    %1327 = vmatpush2.msra.mxu0 0.0
    %1328 = vmatprep.subr.mxu0 0.0
    %1329 = vmatpush2.msra.mxu0 0.0
    %1330 = vmatprep.mubr.f32.mxu0 0.0
    %1331 = vmatmul.mubr.f32.gmra.mxu0 %v100
    %v1332 = vpop.f32.mrf.mxu0
    %v1333 = vadd.f32 %v1264, %v1332
    %v1334 = vpop.f32.mrf.mxu0
    %1335 = vmatprep.mubr.f32.mxu0 0.0
    %1336 = vmatmul.mubr.f32.gmra.mxu0 %v103
    %v1337 = vpop.f32.mrf.mxu0
    %v1338 = vadd.f32 %v1264, %v1337
    %v1339 = vpop.f32.mrf.mxu0
    %1340 = vdwg.mxu0
    %s1341 = scalar_lea.vmem %s8, 64
    %v1342 = vld [vmem:[%s1341] sm:$0xff]
    %v1343 = vld [vmem:[%s1341 + $0x8] sm:$0xff]
    %v1344 = vld [vmem:[%s1341 + $0x10] sm:$0xff]
    %v1345 = vld [vmem:[%s1341 + $0x18] sm:$0xff]
    %s1346 = scalar_lea.vmem %s9, 2
    %v1347 = vld [vmem:[%s1346] sm:$0x1]
    %v1349 = vlaneseq
    %v1350 = vshrl.u32 %v1349, 7
    %v1351 = vsub.s32 0, %v1350
    %v1352 = vrot.slane %v1347, %v1351
    %1354 = vmatprep.subr.mxu0 0.0
    %1355 = vmatpush1.msra.mxu0 0.0
    %1356 = vmatprep.subr.mxu0 0.0
    %1357 = vmatpush1.msra.mxu0 0.0
    %1358 = vmatprep.subr.mxu0 0.0
    %1359 = vmatpush1.msra.mxu0 0.0
    %1360 = vmatprep.subr.mxu0 0.0
    %1361 = vmatpush1.msra.mxu0 0.0
    %1362 = vmatprep.subr.mxu0 0.0
    %1363 = vmatpush1.msra.mxu0 0.0
    %1364 = vmatprep.subr.mxu0 0.0
    %1365 = vmatpush1.msra.mxu0 0.0
    %1366 = vmatprep.subr.mxu0 0.0
    %1367 = vmatpush1.msra.mxu0 0.0
    %1368 = vmatprep.subr.mxu0 0.0
    %1369 = vmatpush1.msra.mxu0 0.0
    %1370 = vmatprep.subr.mxu0 0.0
    %1371 = vmatpush1.msra.mxu0 0.0
    %1372 = vmatprep.subr.mxu0 0.0
    %1373 = vmatpush1.msra.mxu0 0.0
    %1374 = vmatprep.subr.mxu0 0.0
    %1375 = vmatpush1.msra.mxu0 0.0
    %1376 = vmatprep.subr.mxu0 0.0
    %1377 = vmatpush1.msra.mxu0 0.0
    %1378 = vmatprep.subr.mxu0 0.0
    %1379 = vmatpush1.msra.mxu0 %v1345
    %1380 = vmatprep.subr.mxu0 0.0
    %1381 = vmatpush1.msra.mxu0 %v1344
    %1382 = vmatprep.subr.mxu0 0.0
    %1383 = vmatpush1.msra.mxu0 %v1343
    %1384 = vmatprep.subr.mxu0 0.0
    %1385 = vmatpush1.msra.mxu0 %v1342
    %1386 = vmatprep.subr.mxu0 0.0
    %1387 = vmatpush2.msra.mxu0 0.0
    %1388 = vmatprep.subr.mxu0 0.0
    %1389 = vmatpush2.msra.mxu0 0.0
    %1390 = vmatprep.subr.mxu0 0.0
    %1391 = vmatpush2.msra.mxu0 0.0
    %1392 = vmatprep.subr.mxu0 0.0
    %1393 = vmatpush2.msra.mxu0 0.0
    %1394 = vmatprep.subr.mxu0 0.0
    %1395 = vmatpush2.msra.mxu0 0.0
    %1396 = vmatprep.subr.mxu0 0.0
    %1397 = vmatpush2.msra.mxu0 0.0
    %1398 = vmatprep.subr.mxu0 0.0
    %1399 = vmatpush2.msra.mxu0 0.0
    %1400 = vmatprep.subr.mxu0 0.0
    %1401 = vmatpush2.msra.mxu0 0.0
    %1402 = vmatprep.subr.mxu0 0.0
    %1403 = vmatpush2.msra.mxu0 0.0
    %1404 = vmatprep.subr.mxu0 0.0
    %1405 = vmatpush2.msra.mxu0 0.0
    %1406 = vmatprep.subr.mxu0 0.0
    %1407 = vmatpush2.msra.mxu0 0.0
    %1408 = vmatprep.subr.mxu0 0.0
    %1409 = vmatpush2.msra.mxu0 0.0
    %1410 = vmatprep.subr.mxu0 0.0
    %1411 = vmatpush2.msra.mxu0 0.0
    %1412 = vmatprep.subr.mxu0 0.0
    %1413 = vmatpush2.msra.mxu0 0.0
    %1414 = vmatprep.subr.mxu0 0.0
    %1415 = vmatpush2.msra.mxu0 0.0
    %1416 = vmatprep.subr.mxu0 0.0
    %1417 = vmatpush2.msra.mxu0 0.0
    %1418 = vmatprep.mubr.f32.mxu0 0.0
    %1419 = vmatmul.mubr.f32.gmra.mxu0 %v100
    %v1420 = vpop.f32.mrf.mxu0
    %v1421 = vadd.f32 %v1352, %v1420
    %v1422 = vpop.f32.mrf.mxu0
    %1423 = vmatprep.mubr.f32.mxu0 0.0
    %1424 = vmatmul.mubr.f32.gmra.mxu0 %v103
    %v1425 = vpop.f32.mrf.mxu0
    %v1426 = vadd.f32 %v1352, %v1425
    %v1427 = vpop.f32.mrf.mxu0
    %1428 = vdwg.mxu0
    %v1430 = vsel %vm352, %v1245, 0
    %v1433 = vsel %vm352, %v1250, 0
    %v1436 = vsel %vm352, %v1333, 0
    %v1439 = vsel %vm352, %v1338, 0
    %1441 = vmatprep.subr.mxu0 0.0
    %1442 = vmatpush1.xpose.msra.mxu0 0.0
    %1443 = vmatprep.subr.mxu0 0.0
    %1444 = vmatpush1.xpose.msra.mxu0 0.0
    %1445 = vmatprep.subr.mxu0 0.0
    %1446 = vmatpush1.xpose.msra.mxu0 0.0
    %1447 = vmatprep.subr.mxu0 0.0
    %1448 = vmatpush1.xpose.msra.mxu0 0.0
    %1449 = vmatprep.subr.mxu0 0.0
    %1450 = vmatpush1.xpose.msra.mxu0 0.0
    %1451 = vmatprep.subr.mxu0 0.0
    %1452 = vmatpush1.xpose.msra.mxu0 0.0
    %1453 = vmatprep.subr.mxu0 0.0
    %1454 = vmatpush1.xpose.msra.mxu0 0.0
    %1455 = vmatprep.subr.mxu0 0.0
    %1456 = vmatpush1.xpose.msra.mxu0 0.0
    %1457 = vmatprep.subr.mxu0 0.0
    %1458 = vmatpush1.xpose.msra.mxu0 0.0
    %1459 = vmatprep.subr.mxu0 0.0
    %1460 = vmatpush1.xpose.msra.mxu0 0.0
    %1461 = vmatprep.subr.mxu0 0.0
    %1462 = vmatpush1.xpose.msra.mxu0 0.0
    %1463 = vmatprep.subr.mxu0 0.0
    %1464 = vmatpush1.xpose.msra.mxu0 0.0
    %1465 = vmatprep.subr.mxu0 0.0
    %1466 = vmatpush1.xpose.msra.mxu0 0.0
    %1467 = vmatprep.subr.mxu0 0.0
    %1468 = vmatpush1.xpose.msra.mxu0 0.0
    %1469 = vmatprep.subr.mxu0 0.0
    %1470 = vmatpush1.xpose.msra.mxu0 %v1439
    %1471 = vmatprep.subr.mxu0 0.0
    %1472 = vmatpush1.xpose.msra.mxu0 %v1436
    %1473 = vmatprep.subr.mxu0 0.0
    %1474 = vmatpush2.xpose.msra.mxu0 0.0
    %1475 = vmatprep.subr.mxu0 0.0
    %1476 = vmatpush2.xpose.msra.mxu0 0.0
    %1477 = vmatprep.subr.mxu0 0.0
    %1478 = vmatpush2.xpose.msra.mxu0 0.0
    %1479 = vmatprep.subr.mxu0 0.0
    %1480 = vmatpush2.xpose.msra.mxu0 0.0
    %1481 = vmatprep.subr.mxu0 0.0
    %1482 = vmatpush2.xpose.msra.mxu0 0.0
    %1483 = vmatprep.subr.mxu0 0.0
    %1484 = vmatpush2.xpose.msra.mxu0 0.0
    %1485 = vmatprep.subr.mxu0 0.0
    %1486 = vmatpush2.xpose.msra.mxu0 0.0
    %1487 = vmatprep.subr.mxu0 0.0
    %1488 = vmatpush2.xpose.msra.mxu0 0.0
    %1489 = vmatprep.subr.mxu0 0.0
    %1490 = vmatpush2.xpose.msra.mxu0 0.0
    %1491 = vmatprep.subr.mxu0 0.0
    %1492 = vmatpush2.xpose.msra.mxu0 0.0
    %1493 = vmatprep.subr.mxu0 0.0
    %1494 = vmatpush2.xpose.msra.mxu0 0.0
    %1495 = vmatprep.subr.mxu0 0.0
    %1496 = vmatpush2.xpose.msra.mxu0 0.0
    %1497 = vmatprep.subr.mxu0 0.0
    %1498 = vmatpush2.xpose.msra.mxu0 0.0
    %1499 = vmatprep.subr.mxu0 0.0
    %1500 = vmatpush2.xpose.msra.mxu0 0.0
    %1501 = vmatprep.subr.mxu0 0.0
    %1502 = vmatpush2.xpose.msra.mxu0 0.0
    %1503 = vmatprep.subr.mxu0 0.0
    %1504 = vmatpush2.xpose.msra.mxu0 0.0
    %1505 = vmatprep.mubr.f32.mxu0 0.0
    %1506 = vmatmul.mubr.f32.gmra.mxu0 %v1430
    %v1507 = vpop.f32.mrf.mxu0
    %v1508 = vadd.f32 0.0, %v1507
    %v1509 = vpop.f32.mrf.mxu0
    %1510 = vmatprep.mubr.f32.mxu0 0.0
    %1511 = vmatmul.mubr.f32.gmra.mxu0 %v1433
    %v1512 = vpop.f32.mrf.mxu0
    %v1513 = vadd.f32 0.0, %v1512
    %v1514 = vpop.f32.mrf.mxu0
    %1515 = vdwg.mxu0
    %v1516 = vmul.f32 %v1508, 0.35355338
    %v1517 = vmul.f32 %v1513, 0.35355338
    %v1518 = vadd.f32 %v1516, %v81
    %v1519 = vadd.f32 %v1517, %v82
    %v1520 = vmul.f32 %v1518, 1.442695
    %v1521 = vpow.pop %v1520
    %v1522 = vmul.f32 %v1519, 1.442695
    %v1523 = vpow.pop %v1522
    %v1524 = vsel %vm448, %v1521, 0.0
    %1525 = vadd.xlane.f32.xlu0 %v1524
    %v1526 = vpop.xlane.xlu0 %1525
    %v1527 = vsel %vm448, %v1523, 0.0
    %1528 = vadd.xlane.f32.xlu0 %v1527
    %v1529 = vpop.xlane.xlu0 %1528
    %v1530 = vrcp.pop %v1526
    %v1531 = vrcp.pop %v1529
    %v1532 = vmul.f32 %v1521, %v1530
    %v1533 = vmul.f32 %v1523, %v1531
    %v1535 = vsel %vm448, %v1532, 0
    %v1538 = vsel %vm448, %v1533, 0
    %1540 = vmatprep.subr.mxu0 0.0
    %1541 = vmatpush1.msra.mxu0 0.0
    %1542 = vmatprep.subr.mxu0 0.0
    %1543 = vmatpush1.msra.mxu0 0.0
    %1544 = vmatprep.subr.mxu0 0.0
    %1545 = vmatpush1.msra.mxu0 0.0
    %1546 = vmatprep.subr.mxu0 0.0
    %1547 = vmatpush1.msra.mxu0 0.0
    %1548 = vmatprep.subr.mxu0 0.0
    %1549 = vmatpush1.msra.mxu0 0.0
    %1550 = vmatprep.subr.mxu0 0.0
    %1551 = vmatpush1.msra.mxu0 0.0
    %1552 = vmatprep.subr.mxu0 0.0
    %1553 = vmatpush1.msra.mxu0 0.0
    %1554 = vmatprep.subr.mxu0 0.0
    %1555 = vmatpush1.msra.mxu0 0.0
    %1556 = vmatprep.subr.mxu0 0.0
    %1557 = vmatpush1.msra.mxu0 0.0
    %1558 = vmatprep.subr.mxu0 0.0
    %1559 = vmatpush1.msra.mxu0 0.0
    %1560 = vmatprep.subr.mxu0 0.0
    %1561 = vmatpush1.msra.mxu0 0.0
    %1562 = vmatprep.subr.mxu0 0.0
    %1563 = vmatpush1.msra.mxu0 0.0
    %1564 = vmatprep.subr.mxu0 0.0
    %1565 = vmatpush1.msra.mxu0 0.0
    %1566 = vmatprep.subr.mxu0 0.0
    %1567 = vmatpush1.msra.mxu0 0.0
    %1568 = vmatprep.subr.mxu0 0.0
    %1569 = vmatpush1.msra.mxu0 %v1426
    %1570 = vmatprep.subr.mxu0 0.0
    %1571 = vmatpush1.msra.mxu0 %v1421
    %1572 = vmatprep.subr.mxu0 0.0
    %1573 = vmatpush2.msra.mxu0 0.0
    %1574 = vmatprep.subr.mxu0 0.0
    %1575 = vmatpush2.msra.mxu0 0.0
    %1576 = vmatprep.subr.mxu0 0.0
    %1577 = vmatpush2.msra.mxu0 0.0
    %1578 = vmatprep.subr.mxu0 0.0
    %1579 = vmatpush2.msra.mxu0 0.0
    %1580 = vmatprep.subr.mxu0 0.0
    %1581 = vmatpush2.msra.mxu0 0.0
    %1582 = vmatprep.subr.mxu0 0.0
    %1583 = vmatpush2.msra.mxu0 0.0
    %1584 = vmatprep.subr.mxu0 0.0
    %1585 = vmatpush2.msra.mxu0 0.0
    %1586 = vmatprep.subr.mxu0 0.0
    %1587 = vmatpush2.msra.mxu0 0.0
    %1588 = vmatprep.subr.mxu0 0.0
    %1589 = vmatpush2.msra.mxu0 0.0
    %1590 = vmatprep.subr.mxu0 0.0
    %1591 = vmatpush2.msra.mxu0 0.0
    %1592 = vmatprep.subr.mxu0 0.0
    %1593 = vmatpush2.msra.mxu0 0.0
    %1594 = vmatprep.subr.mxu0 0.0
    %1595 = vmatpush2.msra.mxu0 0.0
    %1596 = vmatprep.subr.mxu0 0.0
    %1597 = vmatpush2.msra.mxu0 0.0
    %1598 = vmatprep.subr.mxu0 0.0
    %1599 = vmatpush2.msra.mxu0 0.0
    %1600 = vmatprep.subr.mxu0 0.0
    %1601 = vmatpush2.msra.mxu0 0.0
    %1602 = vmatprep.subr.mxu0 0.0
    %1603 = vmatpush2.msra.mxu0 0.0
    %1604 = vmatprep.mubr.f32.mxu0 0.0
    %1605 = vmatmul.mubr.f32.gmra.mxu0 %v1535
    %v1606 = vpop.f32.mrf.mxu0
    %v1607 = vadd.f32 0.0, %v1606
    %v1608 = vpop.f32.mrf.mxu0
    %1609 = vmatprep.mubr.f32.mxu0 0.0
    %1610 = vmatmul.mubr.f32.gmra.mxu0 %v1538
    %v1611 = vpop.f32.mrf.mxu0
    %v1612 = vadd.f32 0.0, %v1611
    %v1613 = vpop.f32.mrf.mxu0
    %1614 = vdwg.mxu0
    %s1615 = scalar_lea.vmem %s10, 16
    %v1616 = vld [vmem:[%s1615] sm:$0xff]
    %v1618 = vsel %vm352, %v1607, 0
    %v1621 = vsel %vm352, %v1612, 0
    %1623 = vmatprep.subr.mxu0 0.0
    %1624 = vmatpush1.msra.mxu0 0.0
    %1625 = vmatprep.subr.mxu0 0.0
    %1626 = vmatpush1.msra.mxu0 0.0
    %1627 = vmatprep.subr.mxu0 0.0
    %1628 = vmatpush1.msra.mxu0 0.0
    %1629 = vmatprep.subr.mxu0 0.0
    %1630 = vmatpush1.msra.mxu0 0.0
    %1631 = vmatprep.subr.mxu0 0.0
    %1632 = vmatpush1.msra.mxu0 0.0
    %1633 = vmatprep.subr.mxu0 0.0
    %1634 = vmatpush1.msra.mxu0 0.0
    %1635 = vmatprep.subr.mxu0 0.0
    %1636 = vmatpush1.msra.mxu0 0.0
    %1637 = vmatprep.subr.mxu0 0.0
    %1638 = vmatpush1.msra.mxu0 0.0
    %1639 = vmatprep.subr.mxu0 0.0
    %1640 = vmatpush1.msra.mxu0 0.0
    %1641 = vmatprep.subr.mxu0 0.0
    %1642 = vmatpush1.msra.mxu0 0.0
    %1643 = vmatprep.subr.mxu0 0.0
    %1644 = vmatpush1.msra.mxu0 0.0
    %1645 = vmatprep.subr.mxu0 0.0
    %1646 = vmatpush1.msra.mxu0 0.0
    %1647 = vmatprep.subr.mxu0 0.0
    %1648 = vmatpush1.msra.mxu0 0.0
    %1649 = vmatprep.subr.mxu0 0.0
    %1650 = vmatpush1.msra.mxu0 0.0
    %1651 = vmatprep.subr.mxu0 0.0
    %1652 = vmatpush1.msra.mxu0 0.0
    %1653 = vmatprep.subr.mxu0 0.0
    %1654 = vmatpush1.msra.mxu0 %v1616
    %1655 = vmatprep.subr.mxu0 0.0
    %1656 = vmatpush2.msra.mxu0 0.0
    %1657 = vmatprep.subr.mxu0 0.0
    %1658 = vmatpush2.msra.mxu0 0.0
    %1659 = vmatprep.subr.mxu0 0.0
    %1660 = vmatpush2.msra.mxu0 0.0
    %1661 = vmatprep.subr.mxu0 0.0
    %1662 = vmatpush2.msra.mxu0 0.0
    %1663 = vmatprep.subr.mxu0 0.0
    %1664 = vmatpush2.msra.mxu0 0.0
    %1665 = vmatprep.subr.mxu0 0.0
    %1666 = vmatpush2.msra.mxu0 0.0
    %1667 = vmatprep.subr.mxu0 0.0
    %1668 = vmatpush2.msra.mxu0 0.0
    %1669 = vmatprep.subr.mxu0 0.0
    %1670 = vmatpush2.msra.mxu0 0.0
    %1671 = vmatprep.subr.mxu0 0.0
    %1672 = vmatpush2.msra.mxu0 0.0
    %1673 = vmatprep.subr.mxu0 0.0
    %1674 = vmatpush2.msra.mxu0 0.0
    %1675 = vmatprep.subr.mxu0 0.0
    %1676 = vmatpush2.msra.mxu0 0.0
    %1677 = vmatprep.subr.mxu0 0.0
    %1678 = vmatpush2.msra.mxu0 0.0
    %1679 = vmatprep.subr.mxu0 0.0
    %1680 = vmatpush2.msra.mxu0 0.0
    %1681 = vmatprep.subr.mxu0 0.0
    %1682 = vmatpush2.msra.mxu0 0.0
    %1683 = vmatprep.subr.mxu0 0.0
    %1684 = vmatpush2.msra.mxu0 0.0
    %1685 = vmatprep.subr.mxu0 0.0
    %1686 = vmatpush2.msra.mxu0 0.0
    %1687 = vmatprep.mubr.f32.mxu0 0.0
    %1688 = vmatmul.mubr.f32.gmra.mxu0 %v1618
    %v1689 = vpop.f32.mrf.mxu0
    %v1690 = vadd.f32 0.0, %v1689
    %v1691 = vpop.f32.mrf.mxu0
    %1692 = vmatprep.mubr.f32.mxu0 0.0
    %1693 = vmatmul.mubr.f32.gmra.mxu0 %v1621
    %v1694 = vpop.f32.mrf.mxu0
    %v1695 = vadd.f32 0.0, %v1694
    %v1696 = vpop.f32.mrf.mxu0
    %1697 = vdwg.mxu0
    %v1698 = vadd.f32 %v1163, %v1690
    %v1699 = vadd.f32 %v1164, %v1695
    %s1700 = scalar_lea.vmem %s4, 96
    %v1701 = vld [vmem:[%s1700] sm:$0xff]
    %v1702 = vld [vmem:[%s1700 + $0x8] sm:$0xff]
    %v1703 = vld [vmem:[%s1700 + $0x10] sm:$0xff]
    %v1704 = vld [vmem:[%s1700 + $0x18] sm:$0xff]
    %s1705 = scalar_lea.vmem %s5, 3
    %v1706 = vld [vmem:[%s1705] sm:$0x1]
    %v1708 = vlaneseq
    %v1709 = vshrl.u32 %v1708, 7
    %v1710 = vsub.s32 0, %v1709
    %v1711 = vrot.slane %v1706, %v1710
    %1713 = vmatprep.subr.mxu0 0.0
    %1714 = vmatpush1.msra.mxu0 0.0
    %1715 = vmatprep.subr.mxu0 0.0
    %1716 = vmatpush1.msra.mxu0 0.0
    %1717 = vmatprep.subr.mxu0 0.0
    %1718 = vmatpush1.msra.mxu0 0.0
    %1719 = vmatprep.subr.mxu0 0.0
    %1720 = vmatpush1.msra.mxu0 0.0
    %1721 = vmatprep.subr.mxu0 0.0
    %1722 = vmatpush1.msra.mxu0 0.0
    %1723 = vmatprep.subr.mxu0 0.0
    %1724 = vmatpush1.msra.mxu0 0.0
    %1725 = vmatprep.subr.mxu0 0.0
    %1726 = vmatpush1.msra.mxu0 0.0
    %1727 = vmatprep.subr.mxu0 0.0
    %1728 = vmatpush1.msra.mxu0 0.0
    %1729 = vmatprep.subr.mxu0 0.0
    %1730 = vmatpush1.msra.mxu0 0.0
    %1731 = vmatprep.subr.mxu0 0.0
    %1732 = vmatpush1.msra.mxu0 0.0
    %1733 = vmatprep.subr.mxu0 0.0
    %1734 = vmatpush1.msra.mxu0 0.0
    %1735 = vmatprep.subr.mxu0 0.0
    %1736 = vmatpush1.msra.mxu0 0.0
    %1737 = vmatprep.subr.mxu0 0.0
    %1738 = vmatpush1.msra.mxu0 %v1704
    %1739 = vmatprep.subr.mxu0 0.0
    %1740 = vmatpush1.msra.mxu0 %v1703
    %1741 = vmatprep.subr.mxu0 0.0
    %1742 = vmatpush1.msra.mxu0 %v1702
    %1743 = vmatprep.subr.mxu0 0.0
    %1744 = vmatpush1.msra.mxu0 %v1701
    %1745 = vmatprep.subr.mxu0 0.0
    %1746 = vmatpush2.msra.mxu0 0.0
    %1747 = vmatprep.subr.mxu0 0.0
    %1748 = vmatpush2.msra.mxu0 0.0
    %1749 = vmatprep.subr.mxu0 0.0
    %1750 = vmatpush2.msra.mxu0 0.0
    %1751 = vmatprep.subr.mxu0 0.0
    %1752 = vmatpush2.msra.mxu0 0.0
    %1753 = vmatprep.subr.mxu0 0.0
    %1754 = vmatpush2.msra.mxu0 0.0
    %1755 = vmatprep.subr.mxu0 0.0
    %1756 = vmatpush2.msra.mxu0 0.0
    %1757 = vmatprep.subr.mxu0 0.0
    %1758 = vmatpush2.msra.mxu0 0.0
    %1759 = vmatprep.subr.mxu0 0.0
    %1760 = vmatpush2.msra.mxu0 0.0
    %1761 = vmatprep.subr.mxu0 0.0
    %1762 = vmatpush2.msra.mxu0 0.0
    %1763 = vmatprep.subr.mxu0 0.0
    %1764 = vmatpush2.msra.mxu0 0.0
    %1765 = vmatprep.subr.mxu0 0.0
    %1766 = vmatpush2.msra.mxu0 0.0
    %1767 = vmatprep.subr.mxu0 0.0
    %1768 = vmatpush2.msra.mxu0 0.0
    %1769 = vmatprep.subr.mxu0 0.0
    %1770 = vmatpush2.msra.mxu0 0.0
    %1771 = vmatprep.subr.mxu0 0.0
    %1772 = vmatpush2.msra.mxu0 0.0
    %1773 = vmatprep.subr.mxu0 0.0
    %1774 = vmatpush2.msra.mxu0 0.0
    %1775 = vmatprep.subr.mxu0 0.0
    %1776 = vmatpush2.msra.mxu0 0.0
    %1777 = vmatprep.mubr.f32.mxu0 0.0
    %1778 = vmatmul.mubr.f32.gmra.mxu0 %v100
    %v1779 = vpop.f32.mrf.mxu0
    %v1780 = vadd.f32 %v1711, %v1779
    %v1781 = vpop.f32.mrf.mxu0
    %1782 = vmatprep.mubr.f32.mxu0 0.0
    %1783 = vmatmul.mubr.f32.gmra.mxu0 %v103
    %v1784 = vpop.f32.mrf.mxu0
    %v1785 = vadd.f32 %v1711, %v1784
    %v1786 = vpop.f32.mrf.mxu0
    %1787 = vdwg.mxu0
    %s1788 = scalar_lea.vmem %s6, 96
    %v1789 = vld [vmem:[%s1788] sm:$0xff]
    %v1790 = vld [vmem:[%s1788 + $0x8] sm:$0xff]
    %v1791 = vld [vmem:[%s1788 + $0x10] sm:$0xff]
    %v1792 = vld [vmem:[%s1788 + $0x18] sm:$0xff]
    %s1793 = scalar_lea.vmem %s7, 3
    %v1794 = vld [vmem:[%s1793] sm:$0x1]
    %v1796 = vlaneseq
    %v1797 = vshrl.u32 %v1796, 7
    %v1798 = vsub.s32 0, %v1797
    %v1799 = vrot.slane %v1794, %v1798
    %1801 = vmatprep.subr.mxu0 0.0
    %1802 = vmatpush1.msra.mxu0 0.0
    %1803 = vmatprep.subr.mxu0 0.0
    %1804 = vmatpush1.msra.mxu0 0.0
    %1805 = vmatprep.subr.mxu0 0.0
    %1806 = vmatpush1.msra.mxu0 0.0
    %1807 = vmatprep.subr.mxu0 0.0
    %1808 = vmatpush1.msra.mxu0 0.0
    %1809 = vmatprep.subr.mxu0 0.0
    %1810 = vmatpush1.msra.mxu0 0.0
    %1811 = vmatprep.subr.mxu0 0.0
    %1812 = vmatpush1.msra.mxu0 0.0
    %1813 = vmatprep.subr.mxu0 0.0
    %1814 = vmatpush1.msra.mxu0 0.0
    %1815 = vmatprep.subr.mxu0 0.0
    %1816 = vmatpush1.msra.mxu0 0.0
    %1817 = vmatprep.subr.mxu0 0.0
    %1818 = vmatpush1.msra.mxu0 0.0
    %1819 = vmatprep.subr.mxu0 0.0
    %1820 = vmatpush1.msra.mxu0 0.0
    %1821 = vmatprep.subr.mxu0 0.0
    %1822 = vmatpush1.msra.mxu0 0.0
    %1823 = vmatprep.subr.mxu0 0.0
    %1824 = vmatpush1.msra.mxu0 0.0
    %1825 = vmatprep.subr.mxu0 0.0
    %1826 = vmatpush1.msra.mxu0 %v1792
    %1827 = vmatprep.subr.mxu0 0.0
    %1828 = vmatpush1.msra.mxu0 %v1791
    %1829 = vmatprep.subr.mxu0 0.0
    %1830 = vmatpush1.msra.mxu0 %v1790
    %1831 = vmatprep.subr.mxu0 0.0
    %1832 = vmatpush1.msra.mxu0 %v1789
    %1833 = vmatprep.subr.mxu0 0.0
    %1834 = vmatpush2.msra.mxu0 0.0
    %1835 = vmatprep.subr.mxu0 0.0
    %1836 = vmatpush2.msra.mxu0 0.0
    %1837 = vmatprep.subr.mxu0 0.0
    %1838 = vmatpush2.msra.mxu0 0.0
    %1839 = vmatprep.subr.mxu0 0.0
    %1840 = vmatpush2.msra.mxu0 0.0
    %1841 = vmatprep.subr.mxu0 0.0
    %1842 = vmatpush2.msra.mxu0 0.0
    %1843 = vmatprep.subr.mxu0 0.0
    %1844 = vmatpush2.msra.mxu0 0.0
    %1845 = vmatprep.subr.mxu0 0.0
    %1846 = vmatpush2.msra.mxu0 0.0
    %1847 = vmatprep.subr.mxu0 0.0
    %1848 = vmatpush2.msra.mxu0 0.0
    %1849 = vmatprep.subr.mxu0 0.0
    %1850 = vmatpush2.msra.mxu0 0.0
    %1851 = vmatprep.subr.mxu0 0.0
    %1852 = vmatpush2.msra.mxu0 0.0
    %1853 = vmatprep.subr.mxu0 0.0
    %1854 = vmatpush2.msra.mxu0 0.0
    %1855 = vmatprep.subr.mxu0 0.0
    %1856 = vmatpush2.msra.mxu0 0.0
    %1857 = vmatprep.subr.mxu0 0.0
    %1858 = vmatpush2.msra.mxu0 0.0
    %1859 = vmatprep.subr.mxu0 0.0
    %1860 = vmatpush2.msra.mxu0 0.0
    %1861 = vmatprep.subr.mxu0 0.0
    %1862 = vmatpush2.msra.mxu0 0.0
    %1863 = vmatprep.subr.mxu0 0.0
    %1864 = vmatpush2.msra.mxu0 0.0
    %1865 = vmatprep.mubr.f32.mxu0 0.0
    %1866 = vmatmul.mubr.f32.gmra.mxu0 %v100
    %v1867 = vpop.f32.mrf.mxu0
    %v1868 = vadd.f32 %v1799, %v1867
    %v1869 = vpop.f32.mrf.mxu0
    %1870 = vmatprep.mubr.f32.mxu0 0.0
    %1871 = vmatmul.mubr.f32.gmra.mxu0 %v103
    %v1872 = vpop.f32.mrf.mxu0
    %v1873 = vadd.f32 %v1799, %v1872
    %v1874 = vpop.f32.mrf.mxu0
    %1875 = vdwg.mxu0
    %s1876 = scalar_lea.vmem %s8, 96
    %v1877 = vld [vmem:[%s1876] sm:$0xff]
    %v1878 = vld [vmem:[%s1876 + $0x8] sm:$0xff]
    %v1879 = vld [vmem:[%s1876 + $0x10] sm:$0xff]
    %v1880 = vld [vmem:[%s1876 + $0x18] sm:$0xff]
    %s1881 = scalar_lea.vmem %s9, 3
    %v1882 = vld [vmem:[%s1881] sm:$0x1]
    %v1884 = vlaneseq
    %v1885 = vshrl.u32 %v1884, 7
    %v1886 = vsub.s32 0, %v1885
    %v1887 = vrot.slane %v1882, %v1886
    %1889 = vmatprep.subr.mxu0 0.0
    %1890 = vmatpush1.msra.mxu0 0.0
    %1891 = vmatprep.subr.mxu0 0.0
    %1892 = vmatpush1.msra.mxu0 0.0
    %1893 = vmatprep.subr.mxu0 0.0
    %1894 = vmatpush1.msra.mxu0 0.0
    %1895 = vmatprep.subr.mxu0 0.0
    %1896 = vmatpush1.msra.mxu0 0.0
    %1897 = vmatprep.subr.mxu0 0.0
    %1898 = vmatpush1.msra.mxu0 0.0
    %1899 = vmatprep.subr.mxu0 0.0
    %1900 = vmatpush1.msra.mxu0 0.0
    %1901 = vmatprep.subr.mxu0 0.0
    %1902 = vmatpush1.msra.mxu0 0.0
    %1903 = vmatprep.subr.mxu0 0.0
    %1904 = vmatpush1.msra.mxu0 0.0
    %1905 = vmatprep.subr.mxu0 0.0
    %1906 = vmatpush1.msra.mxu0 0.0
    %1907 = vmatprep.subr.mxu0 0.0
    %1908 = vmatpush1.msra.mxu0 0.0
    %1909 = vmatprep.subr.mxu0 0.0
    %1910 = vmatpush1.msra.mxu0 0.0
    %1911 = vmatprep.subr.mxu0 0.0
    %1912 = vmatpush1.msra.mxu0 0.0
    %1913 = vmatprep.subr.mxu0 0.0
    %1914 = vmatpush1.msra.mxu0 %v1880
    %1915 = vmatprep.subr.mxu0 0.0
    %1916 = vmatpush1.msra.mxu0 %v1879
    %1917 = vmatprep.subr.mxu0 0.0
    %1918 = vmatpush1.msra.mxu0 %v1878
    %1919 = vmatprep.subr.mxu0 0.0
    %1920 = vmatpush1.msra.mxu0 %v1877
    %1921 = vmatprep.subr.mxu0 0.0
    %1922 = vmatpush2.msra.mxu0 0.0
    %1923 = vmatprep.subr.mxu0 0.0
    %1924 = vmatpush2.msra.mxu0 0.0
    %1925 = vmatprep.subr.mxu0 0.0
    %1926 = vmatpush2.msra.mxu0 0.0
    %1927 = vmatprep.subr.mxu0 0.0
    %1928 = vmatpush2.msra.mxu0 0.0
    %1929 = vmatprep.subr.mxu0 0.0
    %1930 = vmatpush2.msra.mxu0 0.0
    %1931 = vmatprep.subr.mxu0 0.0
    %1932 = vmatpush2.msra.mxu0 0.0
    %1933 = vmatprep.subr.mxu0 0.0
    %1934 = vmatpush2.msra.mxu0 0.0
    %1935 = vmatprep.subr.mxu0 0.0
    %1936 = vmatpush2.msra.mxu0 0.0
    %1937 = vmatprep.subr.mxu0 0.0
    %1938 = vmatpush2.msra.mxu0 0.0
    %1939 = vmatprep.subr.mxu0 0.0
    %1940 = vmatpush2.msra.mxu0 0.0
    %1941 = vmatprep.subr.mxu0 0.0
    %1942 = vmatpush2.msra.mxu0 0.0
    %1943 = vmatprep.subr.mxu0 0.0
    %1944 = vmatpush2.msra.mxu0 0.0
    %1945 = vmatprep.subr.mxu0 0.0
    %1946 = vmatpush2.msra.mxu0 0.0
    %1947 = vmatprep.subr.mxu0 0.0
    %1948 = vmatpush2.msra.mxu0 0.0
    %1949 = vmatprep.subr.mxu0 0.0
    %1950 = vmatpush2.msra.mxu0 0.0
    %1951 = vmatprep.subr.mxu0 0.0
    %1952 = vmatpush2.msra.mxu0 0.0
    %1953 = vmatprep.mubr.f32.mxu0 0.0
    %1954 = vmatmul.mubr.f32.gmra.mxu0 %v100
    %v1955 = vpop.f32.mrf.mxu0
    %v1956 = vadd.f32 %v1887, %v1955
    %v1957 = vpop.f32.mrf.mxu0
    %1958 = vmatprep.mubr.f32.mxu0 0.0
    %1959 = vmatmul.mubr.f32.gmra.mxu0 %v103
    %v1960 = vpop.f32.mrf.mxu0
    %v1961 = vadd.f32 %v1887, %v1960
    %v1962 = vpop.f32.mrf.mxu0
    %1963 = vdwg.mxu0
    %v1965 = vsel %vm352, %v1780, 0
    %v1968 = vsel %vm352, %v1785, 0
    %v1971 = vsel %vm352, %v1868, 0
    %v1974 = vsel %vm352, %v1873, 0
    %1976 = vmatprep.subr.mxu0 0.0
    %1977 = vmatpush1.xpose.msra.mxu0 0.0
    %1978 = vmatprep.subr.mxu0 0.0
    %1979 = vmatpush1.xpose.msra.mxu0 0.0
    %1980 = vmatprep.subr.mxu0 0.0
    %1981 = vmatpush1.xpose.msra.mxu0 0.0
    %1982 = vmatprep.subr.mxu0 0.0
    %1983 = vmatpush1.xpose.msra.mxu0 0.0
    %1984 = vmatprep.subr.mxu0 0.0
    %1985 = vmatpush1.xpose.msra.mxu0 0.0
    %1986 = vmatprep.subr.mxu0 0.0
    %1987 = vmatpush1.xpose.msra.mxu0 0.0
    %1988 = vmatprep.subr.mxu0 0.0
    %1989 = vmatpush1.xpose.msra.mxu0 0.0
    %1990 = vmatprep.subr.mxu0 0.0
    %1991 = vmatpush1.xpose.msra.mxu0 0.0
    %1992 = vmatprep.subr.mxu0 0.0
    %1993 = vmatpush1.xpose.msra.mxu0 0.0
    %1994 = vmatprep.subr.mxu0 0.0
    %1995 = vmatpush1.xpose.msra.mxu0 0.0
    %1996 = vmatprep.subr.mxu0 0.0
    %1997 = vmatpush1.xpose.msra.mxu0 0.0
    %1998 = vmatprep.subr.mxu0 0.0
    %1999 = vmatpush1.xpose.msra.mxu0 0.0
    %2000 = vmatprep.subr.mxu0 0.0
    %2001 = vmatpush1.xpose.msra.mxu0 0.0
    %2002 = vmatprep.subr.mxu0 0.0
    %2003 = vmatpush1.xpose.msra.mxu0 0.0
    %2004 = vmatprep.subr.mxu0 0.0
    %2005 = vmatpush1.xpose.msra.mxu0 %v1974
    %2006 = vmatprep.subr.mxu0 0.0
    %2007 = vmatpush1.xpose.msra.mxu0 %v1971
    %2008 = vmatprep.subr.mxu0 0.0
    %2009 = vmatpush2.xpose.msra.mxu0 0.0
    %2010 = vmatprep.subr.mxu0 0.0
    %2011 = vmatpush2.xpose.msra.mxu0 0.0
    %2012 = vmatprep.subr.mxu0 0.0
    %2013 = vmatpush2.xpose.msra.mxu0 0.0
    %2014 = vmatprep.subr.mxu0 0.0
    %2015 = vmatpush2.xpose.msra.mxu0 0.0
    %2016 = vmatprep.subr.mxu0 0.0
    %2017 = vmatpush2.xpose.msra.mxu0 0.0
    %2018 = vmatprep.subr.mxu0 0.0
    %2019 = vmatpush2.xpose.msra.mxu0 0.0
    %2020 = vmatprep.subr.mxu0 0.0
    %2021 = vmatpush2.xpose.msra.mxu0 0.0
    %2022 = vmatprep.subr.mxu0 0.0
    %2023 = vmatpush2.xpose.msra.mxu0 0.0
    %2024 = vmatprep.subr.mxu0 0.0
    %2025 = vmatpush2.xpose.msra.mxu0 0.0
    %2026 = vmatprep.subr.mxu0 0.0
    %2027 = vmatpush2.xpose.msra.mxu0 0.0
    %2028 = vmatprep.subr.mxu0 0.0
    %2029 = vmatpush2.xpose.msra.mxu0 0.0
    %2030 = vmatprep.subr.mxu0 0.0
    %2031 = vmatpush2.xpose.msra.mxu0 0.0
    %2032 = vmatprep.subr.mxu0 0.0
    %2033 = vmatpush2.xpose.msra.mxu0 0.0
    %2034 = vmatprep.subr.mxu0 0.0
    %2035 = vmatpush2.xpose.msra.mxu0 0.0
    %2036 = vmatprep.subr.mxu0 0.0
    %2037 = vmatpush2.xpose.msra.mxu0 0.0
    %2038 = vmatprep.subr.mxu0 0.0
    %2039 = vmatpush2.xpose.msra.mxu0 0.0
    %2040 = vmatprep.mubr.f32.mxu0 0.0
    %2041 = vmatmul.mubr.f32.gmra.mxu0 %v1965
    %v2042 = vpop.f32.mrf.mxu0
    %v2043 = vadd.f32 0.0, %v2042
    %v2044 = vpop.f32.mrf.mxu0
    %2045 = vmatprep.mubr.f32.mxu0 0.0
    %2046 = vmatmul.mubr.f32.gmra.mxu0 %v1968
    %v2047 = vpop.f32.mrf.mxu0
    %v2048 = vadd.f32 0.0, %v2047
    %v2049 = vpop.f32.mrf.mxu0
    %2050 = vdwg.mxu0
    %v2051 = vmul.f32 %v2043, 0.35355338
    %v2052 = vmul.f32 %v2048, 0.35355338
    %v2053 = vadd.f32 %v2051, %v81
    %v2054 = vadd.f32 %v2052, %v82
    %v2055 = vmul.f32 %v2053, 1.442695
    %v2056 = vpow.pop %v2055
    %v2057 = vmul.f32 %v2054, 1.442695
    %v2058 = vpow.pop %v2057
    %v2059 = vsel %vm448, %v2056, 0.0
    %2060 = vadd.xlane.f32.xlu0 %v2059
    %v2061 = vpop.xlane.xlu0 %2060
    %v2062 = vsel %vm448, %v2058, 0.0
    %2063 = vadd.xlane.f32.xlu0 %v2062
    %v2064 = vpop.xlane.xlu0 %2063
    %v2065 = vrcp.pop %v2061
    %v2066 = vrcp.pop %v2064
    %v2067 = vmul.f32 %v2056, %v2065
    %v2068 = vmul.f32 %v2058, %v2066
    %v2070 = vsel %vm448, %v2067, 0
    %v2073 = vsel %vm448, %v2068, 0
    %2075 = vmatprep.subr.mxu0 0.0
    %2076 = vmatpush1.msra.mxu0 0.0
    %2077 = vmatprep.subr.mxu0 0.0
    %2078 = vmatpush1.msra.mxu0 0.0
    %2079 = vmatprep.subr.mxu0 0.0
    %2080 = vmatpush1.msra.mxu0 0.0
    %2081 = vmatprep.subr.mxu0 0.0
    %2082 = vmatpush1.msra.mxu0 0.0
    %2083 = vmatprep.subr.mxu0 0.0
    %2084 = vmatpush1.msra.mxu0 0.0
    %2085 = vmatprep.subr.mxu0 0.0
    %2086 = vmatpush1.msra.mxu0 0.0
    %2087 = vmatprep.subr.mxu0 0.0
    %2088 = vmatpush1.msra.mxu0 0.0
    %2089 = vmatprep.subr.mxu0 0.0
    %2090 = vmatpush1.msra.mxu0 0.0
    %2091 = vmatprep.subr.mxu0 0.0
    %2092 = vmatpush1.msra.mxu0 0.0
    %2093 = vmatprep.subr.mxu0 0.0
    %2094 = vmatpush1.msra.mxu0 0.0
    %2095 = vmatprep.subr.mxu0 0.0
    %2096 = vmatpush1.msra.mxu0 0.0
    %2097 = vmatprep.subr.mxu0 0.0
    %2098 = vmatpush1.msra.mxu0 0.0
    %2099 = vmatprep.subr.mxu0 0.0
    %2100 = vmatpush1.msra.mxu0 0.0
    %2101 = vmatprep.subr.mxu0 0.0
    %2102 = vmatpush1.msra.mxu0 0.0
    %2103 = vmatprep.subr.mxu0 0.0
    %2104 = vmatpush1.msra.mxu0 %v1961
    %2105 = vmatprep.subr.mxu0 0.0
    %2106 = vmatpush1.msra.mxu0 %v1956
    %2107 = vmatprep.subr.mxu0 0.0
    %2108 = vmatpush2.msra.mxu0 0.0
    %2109 = vmatprep.subr.mxu0 0.0
    %2110 = vmatpush2.msra.mxu0 0.0
    %2111 = vmatprep.subr.mxu0 0.0
    %2112 = vmatpush2.msra.mxu0 0.0
    %2113 = vmatprep.subr.mxu0 0.0
    %2114 = vmatpush2.msra.mxu0 0.0
    %2115 = vmatprep.subr.mxu0 0.0
    %2116 = vmatpush2.msra.mxu0 0.0
    %2117 = vmatprep.subr.mxu0 0.0
    %2118 = vmatpush2.msra.mxu0 0.0
    %2119 = vmatprep.subr.mxu0 0.0
    %2120 = vmatpush2.msra.mxu0 0.0
    %2121 = vmatprep.subr.mxu0 0.0
    %2122 = vmatpush2.msra.mxu0 0.0
    %2123 = vmatprep.subr.mxu0 0.0
    %2124 = vmatpush2.msra.mxu0 0.0
    %2125 = vmatprep.subr.mxu0 0.0
    %2126 = vmatpush2.msra.mxu0 0.0
    %2127 = vmatprep.subr.mxu0 0.0
    %2128 = vmatpush2.msra.mxu0 0.0
    %2129 = vmatprep.subr.mxu0 0.0
    %2130 = vmatpush2.msra.mxu0 0.0
    %2131 = vmatprep.subr.mxu0 0.0
    %2132 = vmatpush2.msra.mxu0 0.0
    %2133 = vmatprep.subr.mxu0 0.0
    %2134 = vmatpush2.msra.mxu0 0.0
    %2135 = vmatprep.subr.mxu0 0.0
    %2136 = vmatpush2.msra.mxu0 0.0
    %2137 = vmatprep.subr.mxu0 0.0
    %2138 = vmatpush2.msra.mxu0 0.0
    %2139 = vmatprep.mubr.f32.mxu0 0.0
    %2140 = vmatmul.mubr.f32.gmra.mxu0 %v2070
    %v2141 = vpop.f32.mrf.mxu0
    %v2142 = vadd.f32 0.0, %v2141
    %v2143 = vpop.f32.mrf.mxu0
    %2144 = vmatprep.mubr.f32.mxu0 0.0
    %2145 = vmatmul.mubr.f32.gmra.mxu0 %v2073
    %v2146 = vpop.f32.mrf.mxu0
    %v2147 = vadd.f32 0.0, %v2146
    %v2148 = vpop.f32.mrf.mxu0
    %2149 = vdwg.mxu0
    %s2150 = scalar_lea.vmem %s10, 24
    %v2151 = vld [vmem:[%s2150] sm:$0xff]
    %v2153 = vsel %vm352, %v2142, 0
    %v2156 = vsel %vm352, %v2147, 0
    %2158 = vmatprep.subr.mxu0 0.0
    %2159 = vmatpush1.msra.mxu0 0.0
    %2160 = vmatprep.subr.mxu0 0.0
    %2161 = vmatpush1.msra.mxu0 0.0
    %2162 = vmatprep.subr.mxu0 0.0
    %2163 = vmatpush1.msra.mxu0 0.0
    %2164 = vmatprep.subr.mxu0 0.0
    %2165 = vmatpush1.msra.mxu0 0.0
    %2166 = vmatprep.subr.mxu0 0.0
    %2167 = vmatpush1.msra.mxu0 0.0
    %2168 = vmatprep.subr.mxu0 0.0
    %2169 = vmatpush1.msra.mxu0 0.0
    %2170 = vmatprep.subr.mxu0 0.0
    %2171 = vmatpush1.msra.mxu0 0.0
    %2172 = vmatprep.subr.mxu0 0.0
    %2173 = vmatpush1.msra.mxu0 0.0
    %2174 = vmatprep.subr.mxu0 0.0
    %2175 = vmatpush1.msra.mxu0 0.0
    %2176 = vmatprep.subr.mxu0 0.0
    %2177 = vmatpush1.msra.mxu0 0.0
    %2178 = vmatprep.subr.mxu0 0.0
    %2179 = vmatpush1.msra.mxu0 0.0
    %2180 = vmatprep.subr.mxu0 0.0
    %2181 = vmatpush1.msra.mxu0 0.0
    %2182 = vmatprep.subr.mxu0 0.0
    %2183 = vmatpush1.msra.mxu0 0.0
    %2184 = vmatprep.subr.mxu0 0.0
    %2185 = vmatpush1.msra.mxu0 0.0
    %2186 = vmatprep.subr.mxu0 0.0
    %2187 = vmatpush1.msra.mxu0 0.0
    %2188 = vmatprep.subr.mxu0 0.0
    %2189 = vmatpush1.msra.mxu0 %v2151
    %2190 = vmatprep.subr.mxu0 0.0
    %2191 = vmatpush2.msra.mxu0 0.0
    %2192 = vmatprep.subr.mxu0 0.0
    %2193 = vmatpush2.msra.mxu0 0.0
    %2194 = vmatprep.subr.mxu0 0.0
    %2195 = vmatpush2.msra.mxu0 0.0
    %2196 = vmatprep.subr.mxu0 0.0
    %2197 = vmatpush2.msra.mxu0 0.0
    %2198 = vmatprep.subr.mxu0 0.0
    %2199 = vmatpush2.msra.mxu0 0.0
    %2200 = vmatprep.subr.mxu0 0.0
    %2201 = vmatpush2.msra.mxu0 0.0
    %2202 = vmatprep.subr.mxu0 0.0
    %2203 = vmatpush2.msra.mxu0 0.0
    %2204 = vmatprep.subr.mxu0 0.0
    %2205 = vmatpush2.msra.mxu0 0.0
    %2206 = vmatprep.subr.mxu0 0.0
    %2207 = vmatpush2.msra.mxu0 0.0
    %2208 = vmatprep.subr.mxu0 0.0
    %2209 = vmatpush2.msra.mxu0 0.0
    %2210 = vmatprep.subr.mxu0 0.0
    %2211 = vmatpush2.msra.mxu0 0.0
    %2212 = vmatprep.subr.mxu0 0.0
    %2213 = vmatpush2.msra.mxu0 0.0
    %2214 = vmatprep.subr.mxu0 0.0
    %2215 = vmatpush2.msra.mxu0 0.0
    %2216 = vmatprep.subr.mxu0 0.0
    %2217 = vmatpush2.msra.mxu0 0.0
    %2218 = vmatprep.subr.mxu0 0.0
    %2219 = vmatpush2.msra.mxu0 0.0
    %2220 = vmatprep.subr.mxu0 0.0
    %2221 = vmatpush2.msra.mxu0 0.0
    %2222 = vmatprep.mubr.f32.mxu0 0.0
    %2223 = vmatmul.mubr.f32.gmra.mxu0 %v2153
    %v2224 = vpop.f32.mrf.mxu0
    %v2225 = vadd.f32 0.0, %v2224
    %v2226 = vpop.f32.mrf.mxu0
    %2227 = vmatprep.mubr.f32.mxu0 0.0
    %2228 = vmatmul.mubr.f32.gmra.mxu0 %v2156
    %v2229 = vpop.f32.mrf.mxu0
    %v2230 = vadd.f32 0.0, %v2229
    %v2231 = vpop.f32.mrf.mxu0
    %2232 = vdwg.mxu0
    %v2233 = vadd.f32 %v1698, %v2225
    %v2234 = vadd.f32 %v1699, %v2230
    %v2235 = vadd.f32 %v2233, %v83
    %v2236 = vadd.f32 %v2234, %v84
    %v2237 = vld [vmem:[%s12] sm:$0x1]
    %v2238 = vld [vmem:[%s13] sm:$0x1]
    %v2239 = vsel %vm98, %v2235, 0.0
    %2240 = vadd.xlane.f32.xlu0 %v2239
    %v2241 = vpop.xlane.xlu0 %2240
    %v2242 = vsel %vm98, %v2236, 0.0
    %2243 = vadd.xlane.f32.xlu0 %v2242
    %v2244 = vpop.xlane.xlu0 %2243
    %v2245 = vrcp.pop 32.0
    %v2246 = vmul.f32 %v2241, %v2245
    %v2247 = vmul.f32 %v2244, %v2245
    %v2248 = vsub.f32 %v2235, %v2246
    %v2249 = vsub.f32 %v2236, %v2247
    %v2250 = vmul.f32 %v2248, %v2248
    %v2251 = vmul.f32 %v2249, %v2249
    %v2252 = vsel %vm98, %v2250, 0.0
    %2253 = vadd.xlane.f32.xlu0 %v2252
    %v2254 = vpop.xlane.xlu0 %2253
    %v2255 = vsel %vm98, %v2251, 0.0
    %2256 = vadd.xlane.f32.xlu0 %v2255
    %v2257 = vpop.xlane.xlu0 %2256
    %v2258 = vmul.f32 %v2254, %v2245
    %v2259 = vmul.f32 %v2257, %v2245
    %v2260 = vadd.f32 %v2258, 1e-05
    %v2261 = vadd.f32 %v2259, 1e-05
    %v2262 = vrsqrt.pop %v2260
    %v2263 = vrsqrt.pop %v2261
    %v2264 = vmul.f32 %v2248, %v2262
    %v2265 = vmul.f32 %v2249, %v2263
    %v2267 = vlaneseq
    %v2268 = vshrl.u32 %v2267, 7
    %v2269 = vsub.s32 0, %v2268
    %v2270 = vrot.slane %v2237, %v2269
    %v2272 = vmul.f32 %v2264, %v2270
    %v2273 = vmul.f32 %v2265, %v2270
    %v2275 = vlaneseq
    %v2276 = vshrl.u32 %v2275, 7
    %v2277 = vsub.s32 0, %v2276
    %v2278 = vrot.slane %v2238, %v2277
    %v2280 = vadd.f32 %v2272, %v2278
    %v2281 = vadd.f32 %v2273, %v2278
    %v2282 = vld [vmem:[%s14] sm:$0xff]
    %v2283 = vld [vmem:[%s14 + $0x8] sm:$0xff]
    %v2284 = vld [vmem:[%s14 + $0x10] sm:$0xff]
    %v2285 = vld [vmem:[%s14 + $0x18] sm:$0xff]
    %v2286 = vld [vmem:[%s15] sm:$0x1]
    %v2288 = vlaneseq
    %v2289 = vshrl.u32 %v2288, 7
    %v2290 = vsub.s32 0, %v2289
    %v2291 = vrot.slane %v2286, %v2290
    %v2294 = vsel %vm98, %v2280, 0
    %v2297 = vsel %vm98, %v2281, 0
    %2299 = vmatprep.subr.mxu0 0.0
    %2300 = vmatpush1.msra.mxu0 0.0
    %2301 = vmatprep.subr.mxu0 0.0
    %2302 = vmatpush1.msra.mxu0 0.0
    %2303 = vmatprep.subr.mxu0 0.0
    %2304 = vmatpush1.msra.mxu0 0.0
    %2305 = vmatprep.subr.mxu0 0.0
    %2306 = vmatpush1.msra.mxu0 0.0
    %2307 = vmatprep.subr.mxu0 0.0
    %2308 = vmatpush1.msra.mxu0 0.0
    %2309 = vmatprep.subr.mxu0 0.0
    %2310 = vmatpush1.msra.mxu0 0.0
    %2311 = vmatprep.subr.mxu0 0.0
    %2312 = vmatpush1.msra.mxu0 0.0
    %2313 = vmatprep.subr.mxu0 0.0
    %2314 = vmatpush1.msra.mxu0 0.0
    %2315 = vmatprep.subr.mxu0 0.0
    %2316 = vmatpush1.msra.mxu0 0.0
    %2317 = vmatprep.subr.mxu0 0.0
    %2318 = vmatpush1.msra.mxu0 0.0
    %2319 = vmatprep.subr.mxu0 0.0
    %2320 = vmatpush1.msra.mxu0 0.0
    %2321 = vmatprep.subr.mxu0 0.0
    %2322 = vmatpush1.msra.mxu0 0.0
    %2323 = vmatprep.subr.mxu0 0.0
    %2324 = vmatpush1.msra.mxu0 %v2285
    %2325 = vmatprep.subr.mxu0 0.0
    %2326 = vmatpush1.msra.mxu0 %v2284
    %2327 = vmatprep.subr.mxu0 0.0
    %2328 = vmatpush1.msra.mxu0 %v2283
    %2329 = vmatprep.subr.mxu0 0.0
    %2330 = vmatpush1.msra.mxu0 %v2282
    %2331 = vmatprep.subr.mxu0 0.0
    %2332 = vmatpush2.msra.mxu0 0.0
    %2333 = vmatprep.subr.mxu0 0.0
    %2334 = vmatpush2.msra.mxu0 0.0
    %2335 = vmatprep.subr.mxu0 0.0
    %2336 = vmatpush2.msra.mxu0 0.0
    %2337 = vmatprep.subr.mxu0 0.0
    %2338 = vmatpush2.msra.mxu0 0.0
    %2339 = vmatprep.subr.mxu0 0.0
    %2340 = vmatpush2.msra.mxu0 0.0
    %2341 = vmatprep.subr.mxu0 0.0
    %2342 = vmatpush2.msra.mxu0 0.0
    %2343 = vmatprep.subr.mxu0 0.0
    %2344 = vmatpush2.msra.mxu0 0.0
    %2345 = vmatprep.subr.mxu0 0.0
    %2346 = vmatpush2.msra.mxu0 0.0
    %2347 = vmatprep.subr.mxu0 0.0
    %2348 = vmatpush2.msra.mxu0 0.0
    %2349 = vmatprep.subr.mxu0 0.0
    %2350 = vmatpush2.msra.mxu0 0.0
    %2351 = vmatprep.subr.mxu0 0.0
    %2352 = vmatpush2.msra.mxu0 0.0
    %2353 = vmatprep.subr.mxu0 0.0
    %2354 = vmatpush2.msra.mxu0 0.0
    %2355 = vmatprep.subr.mxu0 0.0
    %2356 = vmatpush2.msra.mxu0 0.0
    %2357 = vmatprep.subr.mxu0 0.0
    %2358 = vmatpush2.msra.mxu0 0.0
    %2359 = vmatprep.subr.mxu0 0.0
    %2360 = vmatpush2.msra.mxu0 0.0
    %2361 = vmatprep.subr.mxu0 0.0
    %2362 = vmatpush2.msra.mxu0 0.0
    %2363 = vmatprep.mubr.f32.mxu0 0.0
    %2364 = vmatmul.mubr.f32.gmra.mxu0 %v2294
    %v2365 = vpop.f32.mrf.mxu0
    %v2366 = vadd.f32 %v2291, %v2365
    %v2367 = vpop.f32.mrf.mxu0
    %2368 = vmatprep.mubr.f32.mxu0 0.0
    %2369 = vmatmul.mubr.f32.gmra.mxu0 %v2297
    %v2370 = vpop.f32.mrf.mxu0
    %v2371 = vadd.f32 %v2291, %v2370
    %v2372 = vpop.f32.mrf.mxu0
    %2373 = vdwg.mxu0
    %v2374 = vmul.f32 %v2366, 0.5
    %v2375 = vmul.f32 %v2371, 0.5
    %v2376 = vmul.f32 %v2366, 0.70710677
    %v2377 = vmul.f32 %v2371, 0.70710677
    %v2378 = verf.f32.pop %v2376
    %v2379 = verf.f32.pop %v2377
    %v2380 = vadd.f32 %v2378, 1.0
    %v2381 = vadd.f32 %v2379, 1.0
    %v2382 = vmul.f32 %v2374, %v2380
    %v2383 = vmul.f32 %v2375, %v2381
    %v2384 = vld [vmem:[%s16] sm:$0xff]
    %v2385 = vld [vmem:[%s16 + $0x8] sm:$0xff]
    %v2386 = vld [vmem:[%s16 + $0x10] sm:$0xff]
    %v2387 = vld [vmem:[%s16 + $0x18] sm:$0xff]
    %v2388 = vld [vmem:[%s16 + $0x20] sm:$0xff]
    %v2389 = vld [vmem:[%s16 + $0x28] sm:$0xff]
    %v2390 = vld [vmem:[%s16 + $0x30] sm:$0xff]
    %v2391 = vld [vmem:[%s16 + $0x38] sm:$0xff]
    %v2392 = vld [vmem:[%s17] sm:$0x1]
    %v2394 = vlaneseq
    %v2395 = vshrl.u32 %v2394, 7
    %v2396 = vsub.s32 0, %v2395
    %v2397 = vrot.slane %v2392, %v2396
    %vm2399 = vcmask 523264
    %v2401 = vsel %vm2399, %v2382, 0
    %v2404 = vsel %vm2399, %v2383, 0
    %2406 = vmatprep.subr.mxu0 0.0
    %2407 = vmatpush1.msra.mxu0 0.0
    %2408 = vmatprep.subr.mxu0 0.0
    %2409 = vmatpush1.msra.mxu0 0.0
    %2410 = vmatprep.subr.mxu0 0.0
    %2411 = vmatpush1.msra.mxu0 0.0
    %2412 = vmatprep.subr.mxu0 0.0
    %2413 = vmatpush1.msra.mxu0 0.0
    %2414 = vmatprep.subr.mxu0 0.0
    %2415 = vmatpush1.msra.mxu0 0.0
    %2416 = vmatprep.subr.mxu0 0.0
    %2417 = vmatpush1.msra.mxu0 0.0
    %2418 = vmatprep.subr.mxu0 0.0
    %2419 = vmatpush1.msra.mxu0 0.0
    %2420 = vmatprep.subr.mxu0 0.0
    %2421 = vmatpush1.msra.mxu0 0.0
    %2422 = vmatprep.subr.mxu0 0.0
    %2423 = vmatpush1.msra.mxu0 %v2391
    %2424 = vmatprep.subr.mxu0 0.0
    %2425 = vmatpush1.msra.mxu0 %v2390
    %2426 = vmatprep.subr.mxu0 0.0
    %2427 = vmatpush1.msra.mxu0 %v2389
    %2428 = vmatprep.subr.mxu0 0.0
    %2429 = vmatpush1.msra.mxu0 %v2388
    %2430 = vmatprep.subr.mxu0 0.0
    %2431 = vmatpush1.msra.mxu0 %v2387
    %2432 = vmatprep.subr.mxu0 0.0
    %2433 = vmatpush1.msra.mxu0 %v2386
    %2434 = vmatprep.subr.mxu0 0.0
    %2435 = vmatpush1.msra.mxu0 %v2385
    %2436 = vmatprep.subr.mxu0 0.0
    %2437 = vmatpush1.msra.mxu0 %v2384
    %2438 = vmatprep.subr.mxu0 0.0
    %2439 = vmatpush2.msra.mxu0 0.0
    %2440 = vmatprep.subr.mxu0 0.0
    %2441 = vmatpush2.msra.mxu0 0.0
    %2442 = vmatprep.subr.mxu0 0.0
    %2443 = vmatpush2.msra.mxu0 0.0
    %2444 = vmatprep.subr.mxu0 0.0
    %2445 = vmatpush2.msra.mxu0 0.0
    %2446 = vmatprep.subr.mxu0 0.0
    %2447 = vmatpush2.msra.mxu0 0.0
    %2448 = vmatprep.subr.mxu0 0.0
    %2449 = vmatpush2.msra.mxu0 0.0
    %2450 = vmatprep.subr.mxu0 0.0
    %2451 = vmatpush2.msra.mxu0 0.0
    %2452 = vmatprep.subr.mxu0 0.0
    %2453 = vmatpush2.msra.mxu0 0.0
    %2454 = vmatprep.subr.mxu0 0.0
    %2455 = vmatpush2.msra.mxu0 0.0
    %2456 = vmatprep.subr.mxu0 0.0
    %2457 = vmatpush2.msra.mxu0 0.0
    %2458 = vmatprep.subr.mxu0 0.0
    %2459 = vmatpush2.msra.mxu0 0.0
    %2460 = vmatprep.subr.mxu0 0.0
    %2461 = vmatpush2.msra.mxu0 0.0
    %2462 = vmatprep.subr.mxu0 0.0
    %2463 = vmatpush2.msra.mxu0 0.0
    %2464 = vmatprep.subr.mxu0 0.0
    %2465 = vmatpush2.msra.mxu0 0.0
    %2466 = vmatprep.subr.mxu0 0.0
    %2467 = vmatpush2.msra.mxu0 0.0
    %2468 = vmatprep.subr.mxu0 0.0
    %2469 = vmatpush2.msra.mxu0 0.0
    %2470 = vmatprep.mubr.f32.mxu0 0.0
    %2471 = vmatmul.mubr.f32.gmra.mxu0 %v2401
    %v2472 = vpop.f32.mrf.mxu0
    %v2473 = vadd.f32 %v2397, %v2472
    %v2474 = vpop.f32.mrf.mxu0
    %2475 = vmatprep.mubr.f32.mxu0 0.0
    %2476 = vmatmul.mubr.f32.gmra.mxu0 %v2404
    %v2477 = vpop.f32.mrf.mxu0
    %v2478 = vadd.f32 %v2397, %v2477
    %v2479 = vpop.f32.mrf.mxu0
    %2480 = vdwg.mxu0
    %v2481 = vadd.f32 %v2473, %v2280
    %v2482 = vadd.f32 %v2478, %v2281
    %v2483 = vld [vmem:[%s18] sm:$0x1]
    %v2484 = vld [vmem:[%s19] sm:$0x1]
    %v2485 = vsel %vm98, %v2481, 0.0
    %2486 = vadd.xlane.f32.xlu0 %v2485
    %v2487 = vpop.xlane.xlu0 %2486
    %v2488 = vsel %vm98, %v2482, 0.0
    %2489 = vadd.xlane.f32.xlu0 %v2488
    %v2490 = vpop.xlane.xlu0 %2489
    %v2491 = vmul.f32 %v2487, %v2245
    %v2492 = vmul.f32 %v2490, %v2245
    %v2493 = vsub.f32 %v2481, %v2491
    %v2494 = vsub.f32 %v2482, %v2492
    %v2495 = vmul.f32 %v2493, %v2493
    %v2496 = vmul.f32 %v2494, %v2494
    %v2497 = vsel %vm98, %v2495, 0.0
    %2498 = vadd.xlane.f32.xlu0 %v2497
    %v2499 = vpop.xlane.xlu0 %2498
    %v2500 = vsel %vm98, %v2496, 0.0
    %2501 = vadd.xlane.f32.xlu0 %v2500
    %v2502 = vpop.xlane.xlu0 %2501
    %v2503 = vmul.f32 %v2499, %v2245
    %v2504 = vmul.f32 %v2502, %v2245
    %v2505 = vadd.f32 %v2503, 1e-05
    %v2506 = vadd.f32 %v2504, 1e-05
    %v2507 = vrsqrt.pop %v2505
    %v2508 = vrsqrt.pop %v2506
    %v2509 = vmul.f32 %v2493, %v2507
    %v2510 = vmul.f32 %v2494, %v2508
    %v2512 = vlaneseq
    %v2513 = vshrl.u32 %v2512, 7
    %v2514 = vsub.s32 0, %v2513
    %v2515 = vrot.slane %v2483, %v2514
    %v2517 = vmul.f32 %v2509, %v2515
    %v2518 = vmul.f32 %v2510, %v2515
    %v2520 = vlaneseq
    %v2521 = vshrl.u32 %v2520, 7
    %v2522 = vsub.s32 0, %v2521
    %v2523 = vrot.slane %v2484, %v2522
    %v2525 = vadd.f32 %v2517, %v2523
    %v2526 = vadd.f32 %v2518, %v2523
    %v2528 = vlaneseq
    %v2529 = vshrl.u32 %v2528, 7
    %v2530 = vsub.s32 0, %v2529
    %v2531 = vrot.slane %v85, %v2530
    %v2533 = vmul.f32 %v2525, %v2531
    %v2534 = vmul.f32 %v2526, %v2531
    %s2535 = scalar_lea.vmem %s11, 1
    %v2536 = vld [vmem:[%s2535] sm:$0x1]
    %s2537 = scalar_lea.vmem %s4, 128
    %v2538 = vld [vmem:[%s2537] sm:$0xff]
    %v2539 = vld [vmem:[%s2537 + $0x8] sm:$0xff]
    %v2540 = vld [vmem:[%s2537 + $0x10] sm:$0xff]
    %v2541 = vld [vmem:[%s2537 + $0x18] sm:$0xff]
    %s2542 = scalar_lea.vmem %s5, 4
    %v2543 = vld [vmem:[%s2542] sm:$0x1]
    %v2545 = vlaneseq
    %v2546 = vshrl.u32 %v2545, 7
    %v2547 = vsub.s32 0, %v2546
    %v2548 = vrot.slane %v2543, %v2547
    %v2551 = vsel %vm98, %v2533, 0
    %v2554 = vsel %vm98, %v2534, 0
    %2556 = vmatprep.subr.mxu0 0.0
    %2557 = vmatpush1.msra.mxu0 0.0
    %2558 = vmatprep.subr.mxu0 0.0
    %2559 = vmatpush1.msra.mxu0 0.0
    %2560 = vmatprep.subr.mxu0 0.0
    %2561 = vmatpush1.msra.mxu0 0.0
    %2562 = vmatprep.subr.mxu0 0.0
    %2563 = vmatpush1.msra.mxu0 0.0
    %2564 = vmatprep.subr.mxu0 0.0
    %2565 = vmatpush1.msra.mxu0 0.0
    %2566 = vmatprep.subr.mxu0 0.0
    %2567 = vmatpush1.msra.mxu0 0.0
    %2568 = vmatprep.subr.mxu0 0.0
    %2569 = vmatpush1.msra.mxu0 0.0
    %2570 = vmatprep.subr.mxu0 0.0
    %2571 = vmatpush1.msra.mxu0 0.0
    %2572 = vmatprep.subr.mxu0 0.0
    %2573 = vmatpush1.msra.mxu0 0.0
    %2574 = vmatprep.subr.mxu0 0.0
    %2575 = vmatpush1.msra.mxu0 0.0
    %2576 = vmatprep.subr.mxu0 0.0
    %2577 = vmatpush1.msra.mxu0 0.0
    %2578 = vmatprep.subr.mxu0 0.0
    %2579 = vmatpush1.msra.mxu0 0.0
    %2580 = vmatprep.subr.mxu0 0.0
    %2581 = vmatpush1.msra.mxu0 %v2541
    %2582 = vmatprep.subr.mxu0 0.0
    %2583 = vmatpush1.msra.mxu0 %v2540
    %2584 = vmatprep.subr.mxu0 0.0
    %2585 = vmatpush1.msra.mxu0 %v2539
    %2586 = vmatprep.subr.mxu0 0.0
    %2587 = vmatpush1.msra.mxu0 %v2538
    %2588 = vmatprep.subr.mxu0 0.0
    %2589 = vmatpush2.msra.mxu0 0.0
    %2590 = vmatprep.subr.mxu0 0.0
    %2591 = vmatpush2.msra.mxu0 0.0
    %2592 = vmatprep.subr.mxu0 0.0
    %2593 = vmatpush2.msra.mxu0 0.0
    %2594 = vmatprep.subr.mxu0 0.0
    %2595 = vmatpush2.msra.mxu0 0.0
    %2596 = vmatprep.subr.mxu0 0.0
    %2597 = vmatpush2.msra.mxu0 0.0
    %2598 = vmatprep.subr.mxu0 0.0
    %2599 = vmatpush2.msra.mxu0 0.0
    %2600 = vmatprep.subr.mxu0 0.0
    %2601 = vmatpush2.msra.mxu0 0.0
    %2602 = vmatprep.subr.mxu0 0.0
    %2603 = vmatpush2.msra.mxu0 0.0
    %2604 = vmatprep.subr.mxu0 0.0
    %2605 = vmatpush2.msra.mxu0 0.0
    %2606 = vmatprep.subr.mxu0 0.0
    %2607 = vmatpush2.msra.mxu0 0.0
    %2608 = vmatprep.subr.mxu0 0.0
    %2609 = vmatpush2.msra.mxu0 0.0
    %2610 = vmatprep.subr.mxu0 0.0
    %2611 = vmatpush2.msra.mxu0 0.0
    %2612 = vmatprep.subr.mxu0 0.0
    %2613 = vmatpush2.msra.mxu0 0.0
    %2614 = vmatprep.subr.mxu0 0.0
    %2615 = vmatpush2.msra.mxu0 0.0
    %2616 = vmatprep.subr.mxu0 0.0
    %2617 = vmatpush2.msra.mxu0 0.0
    %2618 = vmatprep.subr.mxu0 0.0
    %2619 = vmatpush2.msra.mxu0 0.0
    %2620 = vmatprep.mubr.f32.mxu0 0.0
    %2621 = vmatmul.mubr.f32.gmra.mxu0 %v2551
    %v2622 = vpop.f32.mrf.mxu0
    %v2623 = vadd.f32 %v2548, %v2622
    %v2624 = vpop.f32.mrf.mxu0
    %2625 = vmatprep.mubr.f32.mxu0 0.0
    %2626 = vmatmul.mubr.f32.gmra.mxu0 %v2554
    %v2627 = vpop.f32.mrf.mxu0
    %v2628 = vadd.f32 %v2548, %v2627
    %v2629 = vpop.f32.mrf.mxu0
    %2630 = vdwg.mxu0
    %s2631 = scalar_lea.vmem %s6, 128
    %v2632 = vld [vmem:[%s2631] sm:$0xff]
    %v2633 = vld [vmem:[%s2631 + $0x8] sm:$0xff]
    %v2634 = vld [vmem:[%s2631 + $0x10] sm:$0xff]
    %v2635 = vld [vmem:[%s2631 + $0x18] sm:$0xff]
    %s2636 = scalar_lea.vmem %s7, 4
    %v2637 = vld [vmem:[%s2636] sm:$0x1]
    %v2639 = vlaneseq
    %v2640 = vshrl.u32 %v2639, 7
    %v2641 = vsub.s32 0, %v2640
    %v2642 = vrot.slane %v2637, %v2641
    %2644 = vmatprep.subr.mxu0 0.0
    %2645 = vmatpush1.msra.mxu0 0.0
    %2646 = vmatprep.subr.mxu0 0.0
    %2647 = vmatpush1.msra.mxu0 0.0
    %2648 = vmatprep.subr.mxu0 0.0
    %2649 = vmatpush1.msra.mxu0 0.0
    %2650 = vmatprep.subr.mxu0 0.0
    %2651 = vmatpush1.msra.mxu0 0.0
    %2652 = vmatprep.subr.mxu0 0.0
    %2653 = vmatpush1.msra.mxu0 0.0
    %2654 = vmatprep.subr.mxu0 0.0
    %2655 = vmatpush1.msra.mxu0 0.0
    %2656 = vmatprep.subr.mxu0 0.0
    %2657 = vmatpush1.msra.mxu0 0.0
    %2658 = vmatprep.subr.mxu0 0.0
    %2659 = vmatpush1.msra.mxu0 0.0
    %2660 = vmatprep.subr.mxu0 0.0
    %2661 = vmatpush1.msra.mxu0 0.0
    %2662 = vmatprep.subr.mxu0 0.0
    %2663 = vmatpush1.msra.mxu0 0.0
    %2664 = vmatprep.subr.mxu0 0.0
    %2665 = vmatpush1.msra.mxu0 0.0
    %2666 = vmatprep.subr.mxu0 0.0
    %2667 = vmatpush1.msra.mxu0 0.0
    %2668 = vmatprep.subr.mxu0 0.0
    %2669 = vmatpush1.msra.mxu0 %v2635
    %2670 = vmatprep.subr.mxu0 0.0
    %2671 = vmatpush1.msra.mxu0 %v2634
    %2672 = vmatprep.subr.mxu0 0.0
    %2673 = vmatpush1.msra.mxu0 %v2633
    %2674 = vmatprep.subr.mxu0 0.0
    %2675 = vmatpush1.msra.mxu0 %v2632
    %2676 = vmatprep.subr.mxu0 0.0
    %2677 = vmatpush2.msra.mxu0 0.0
    %2678 = vmatprep.subr.mxu0 0.0
    %2679 = vmatpush2.msra.mxu0 0.0
    %2680 = vmatprep.subr.mxu0 0.0
    %2681 = vmatpush2.msra.mxu0 0.0
    %2682 = vmatprep.subr.mxu0 0.0
    %2683 = vmatpush2.msra.mxu0 0.0
    %2684 = vmatprep.subr.mxu0 0.0
    %2685 = vmatpush2.msra.mxu0 0.0
    %2686 = vmatprep.subr.mxu0 0.0
    %2687 = vmatpush2.msra.mxu0 0.0
    %2688 = vmatprep.subr.mxu0 0.0
    %2689 = vmatpush2.msra.mxu0 0.0
    %2690 = vmatprep.subr.mxu0 0.0
    %2691 = vmatpush2.msra.mxu0 0.0
    %2692 = vmatprep.subr.mxu0 0.0
    %2693 = vmatpush2.msra.mxu0 0.0
    %2694 = vmatprep.subr.mxu0 0.0
    %2695 = vmatpush2.msra.mxu0 0.0
    %2696 = vmatprep.subr.mxu0 0.0
    %2697 = vmatpush2.msra.mxu0 0.0
    %2698 = vmatprep.subr.mxu0 0.0
    %2699 = vmatpush2.msra.mxu0 0.0
    %2700 = vmatprep.subr.mxu0 0.0
    %2701 = vmatpush2.msra.mxu0 0.0
    %2702 = vmatprep.subr.mxu0 0.0
    %2703 = vmatpush2.msra.mxu0 0.0
    %2704 = vmatprep.subr.mxu0 0.0
    %2705 = vmatpush2.msra.mxu0 0.0
    %2706 = vmatprep.subr.mxu0 0.0
    %2707 = vmatpush2.msra.mxu0 0.0
    %2708 = vmatprep.mubr.f32.mxu0 0.0
    %2709 = vmatmul.mubr.f32.gmra.mxu0 %v2551
    %v2710 = vpop.f32.mrf.mxu0
    %v2711 = vadd.f32 %v2642, %v2710
    %v2712 = vpop.f32.mrf.mxu0
    %2713 = vmatprep.mubr.f32.mxu0 0.0
    %2714 = vmatmul.mubr.f32.gmra.mxu0 %v2554
    %v2715 = vpop.f32.mrf.mxu0
    %v2716 = vadd.f32 %v2642, %v2715
    %v2717 = vpop.f32.mrf.mxu0
    %2718 = vdwg.mxu0
    %s2719 = scalar_lea.vmem %s8, 128
    %v2720 = vld [vmem:[%s2719] sm:$0xff]
    %v2721 = vld [vmem:[%s2719 + $0x8] sm:$0xff]
    %v2722 = vld [vmem:[%s2719 + $0x10] sm:$0xff]
    %v2723 = vld [vmem:[%s2719 + $0x18] sm:$0xff]
    %s2724 = scalar_lea.vmem %s9, 4
    %v2725 = vld [vmem:[%s2724] sm:$0x1]
    %v2727 = vlaneseq
    %v2728 = vshrl.u32 %v2727, 7
    %v2729 = vsub.s32 0, %v2728
    %v2730 = vrot.slane %v2725, %v2729
    %2732 = vmatprep.subr.mxu0 0.0
    %2733 = vmatpush1.msra.mxu0 0.0
    %2734 = vmatprep.subr.mxu0 0.0
    %2735 = vmatpush1.msra.mxu0 0.0
    %2736 = vmatprep.subr.mxu0 0.0
    %2737 = vmatpush1.msra.mxu0 0.0
    %2738 = vmatprep.subr.mxu0 0.0
    %2739 = vmatpush1.msra.mxu0 0.0
    %2740 = vmatprep.subr.mxu0 0.0
    %2741 = vmatpush1.msra.mxu0 0.0
    %2742 = vmatprep.subr.mxu0 0.0
    %2743 = vmatpush1.msra.mxu0 0.0
    %2744 = vmatprep.subr.mxu0 0.0
    %2745 = vmatpush1.msra.mxu0 0.0
    %2746 = vmatprep.subr.mxu0 0.0
    %2747 = vmatpush1.msra.mxu0 0.0
    %2748 = vmatprep.subr.mxu0 0.0
    %2749 = vmatpush1.msra.mxu0 0.0
    %2750 = vmatprep.subr.mxu0 0.0
    %2751 = vmatpush1.msra.mxu0 0.0
    %2752 = vmatprep.subr.mxu0 0.0
    %2753 = vmatpush1.msra.mxu0 0.0
    %2754 = vmatprep.subr.mxu0 0.0
    %2755 = vmatpush1.msra.mxu0 0.0
    %2756 = vmatprep.subr.mxu0 0.0
    %2757 = vmatpush1.msra.mxu0 %v2723
    %2758 = vmatprep.subr.mxu0 0.0
    %2759 = vmatpush1.msra.mxu0 %v2722
    %2760 = vmatprep.subr.mxu0 0.0
    %2761 = vmatpush1.msra.mxu0 %v2721
    %2762 = vmatprep.subr.mxu0 0.0
    %2763 = vmatpush1.msra.mxu0 %v2720
    %2764 = vmatprep.subr.mxu0 0.0
    %2765 = vmatpush2.msra.mxu0 0.0
    %2766 = vmatprep.subr.mxu0 0.0
    %2767 = vmatpush2.msra.mxu0 0.0
    %2768 = vmatprep.subr.mxu0 0.0
    %2769 = vmatpush2.msra.mxu0 0.0
    %2770 = vmatprep.subr.mxu0 0.0
    %2771 = vmatpush2.msra.mxu0 0.0
    %2772 = vmatprep.subr.mxu0 0.0
    %2773 = vmatpush2.msra.mxu0 0.0
    %2774 = vmatprep.subr.mxu0 0.0
    %2775 = vmatpush2.msra.mxu0 0.0
    %2776 = vmatprep.subr.mxu0 0.0
    %2777 = vmatpush2.msra.mxu0 0.0
    %2778 = vmatprep.subr.mxu0 0.0
    %2779 = vmatpush2.msra.mxu0 0.0
    %2780 = vmatprep.subr.mxu0 0.0
    %2781 = vmatpush2.msra.mxu0 0.0
    %2782 = vmatprep.subr.mxu0 0.0
    %2783 = vmatpush2.msra.mxu0 0.0
    %2784 = vmatprep.subr.mxu0 0.0
    %2785 = vmatpush2.msra.mxu0 0.0
    %2786 = vmatprep.subr.mxu0 0.0
    %2787 = vmatpush2.msra.mxu0 0.0
    %2788 = vmatprep.subr.mxu0 0.0
    %2789 = vmatpush2.msra.mxu0 0.0
    %2790 = vmatprep.subr.mxu0 0.0
    %2791 = vmatpush2.msra.mxu0 0.0
    %2792 = vmatprep.subr.mxu0 0.0
    %2793 = vmatpush2.msra.mxu0 0.0
    %2794 = vmatprep.subr.mxu0 0.0
    %2795 = vmatpush2.msra.mxu0 0.0
    %2796 = vmatprep.mubr.f32.mxu0 0.0
    %2797 = vmatmul.mubr.f32.gmra.mxu0 %v2551
    %v2798 = vpop.f32.mrf.mxu0
    %v2799 = vadd.f32 %v2730, %v2798
    %v2800 = vpop.f32.mrf.mxu0
    %2801 = vmatprep.mubr.f32.mxu0 0.0
    %2802 = vmatmul.mubr.f32.gmra.mxu0 %v2554
    %v2803 = vpop.f32.mrf.mxu0
    %v2804 = vadd.f32 %v2730, %v2803
    %v2805 = vpop.f32.mrf.mxu0
    %2806 = vdwg.mxu0
    %v2808 = vsel %vm352, %v2623, 0
    %v2811 = vsel %vm352, %v2628, 0
    %v2814 = vsel %vm352, %v2711, 0
    %v2817 = vsel %vm352, %v2716, 0
    %2819 = vmatprep.subr.mxu0 0.0
    %2820 = vmatpush1.xpose.msra.mxu0 0.0
    %2821 = vmatprep.subr.mxu0 0.0
    %2822 = vmatpush1.xpose.msra.mxu0 0.0
    %2823 = vmatprep.subr.mxu0 0.0
    %2824 = vmatpush1.xpose.msra.mxu0 0.0
    %2825 = vmatprep.subr.mxu0 0.0
    %2826 = vmatpush1.xpose.msra.mxu0 0.0
    %2827 = vmatprep.subr.mxu0 0.0
    %2828 = vmatpush1.xpose.msra.mxu0 0.0
    %2829 = vmatprep.subr.mxu0 0.0
    %2830 = vmatpush1.xpose.msra.mxu0 0.0
    %2831 = vmatprep.subr.mxu0 0.0
    %2832 = vmatpush1.xpose.msra.mxu0 0.0
    %2833 = vmatprep.subr.mxu0 0.0
    %2834 = vmatpush1.xpose.msra.mxu0 0.0
    %2835 = vmatprep.subr.mxu0 0.0
    %2836 = vmatpush1.xpose.msra.mxu0 0.0
    %2837 = vmatprep.subr.mxu0 0.0
    %2838 = vmatpush1.xpose.msra.mxu0 0.0
    %2839 = vmatprep.subr.mxu0 0.0
    %2840 = vmatpush1.xpose.msra.mxu0 0.0
    %2841 = vmatprep.subr.mxu0 0.0
    %2842 = vmatpush1.xpose.msra.mxu0 0.0
    %2843 = vmatprep.subr.mxu0 0.0
    %2844 = vmatpush1.xpose.msra.mxu0 0.0
    %2845 = vmatprep.subr.mxu0 0.0
    %2846 = vmatpush1.xpose.msra.mxu0 0.0
    %2847 = vmatprep.subr.mxu0 0.0
    %2848 = vmatpush1.xpose.msra.mxu0 %v2817
    %2849 = vmatprep.subr.mxu0 0.0
    %2850 = vmatpush1.xpose.msra.mxu0 %v2814
    %2851 = vmatprep.subr.mxu0 0.0
    %2852 = vmatpush2.xpose.msra.mxu0 0.0
    %2853 = vmatprep.subr.mxu0 0.0
    %2854 = vmatpush2.xpose.msra.mxu0 0.0
    %2855 = vmatprep.subr.mxu0 0.0
    %2856 = vmatpush2.xpose.msra.mxu0 0.0
    %2857 = vmatprep.subr.mxu0 0.0
    %2858 = vmatpush2.xpose.msra.mxu0 0.0
    %2859 = vmatprep.subr.mxu0 0.0
    %2860 = vmatpush2.xpose.msra.mxu0 0.0
    %2861 = vmatprep.subr.mxu0 0.0
    %2862 = vmatpush2.xpose.msra.mxu0 0.0
    %2863 = vmatprep.subr.mxu0 0.0
    %2864 = vmatpush2.xpose.msra.mxu0 0.0
    %2865 = vmatprep.subr.mxu0 0.0
    %2866 = vmatpush2.xpose.msra.mxu0 0.0
    %2867 = vmatprep.subr.mxu0 0.0
    %2868 = vmatpush2.xpose.msra.mxu0 0.0
    %2869 = vmatprep.subr.mxu0 0.0
    %2870 = vmatpush2.xpose.msra.mxu0 0.0
    %2871 = vmatprep.subr.mxu0 0.0
    %2872 = vmatpush2.xpose.msra.mxu0 0.0
    %2873 = vmatprep.subr.mxu0 0.0
    %2874 = vmatpush2.xpose.msra.mxu0 0.0
    %2875 = vmatprep.subr.mxu0 0.0
    %2876 = vmatpush2.xpose.msra.mxu0 0.0
    %2877 = vmatprep.subr.mxu0 0.0
    %2878 = vmatpush2.xpose.msra.mxu0 0.0
    %2879 = vmatprep.subr.mxu0 0.0
    %2880 = vmatpush2.xpose.msra.mxu0 0.0
    %2881 = vmatprep.subr.mxu0 0.0
    %2882 = vmatpush2.xpose.msra.mxu0 0.0
    %2883 = vmatprep.mubr.f32.mxu0 0.0
    %2884 = vmatmul.mubr.f32.gmra.mxu0 %v2808
    %v2885 = vpop.f32.mrf.mxu0
    %v2886 = vadd.f32 0.0, %v2885
    %v2887 = vpop.f32.mrf.mxu0
    %2888 = vmatprep.mubr.f32.mxu0 0.0
    %2889 = vmatmul.mubr.f32.gmra.mxu0 %v2811
    %v2890 = vpop.f32.mrf.mxu0
    %v2891 = vadd.f32 0.0, %v2890
    %v2892 = vpop.f32.mrf.mxu0
    %2893 = vdwg.mxu0
    %v2894 = vmul.f32 %v2886, 0.35355338
    %v2895 = vmul.f32 %v2891, 0.35355338
    %v2896 = vadd.f32 %v2894, %v81
    %v2897 = vadd.f32 %v2895, %v82
    %v2898 = vmul.f32 %v2896, 1.442695
    %v2899 = vpow.pop %v2898
    %v2900 = vmul.f32 %v2897, 1.442695
    %v2901 = vpow.pop %v2900
    %v2902 = vsel %vm448, %v2899, 0.0
    %2903 = vadd.xlane.f32.xlu0 %v2902
    %v2904 = vpop.xlane.xlu0 %2903
    %v2905 = vsel %vm448, %v2901, 0.0
    %2906 = vadd.xlane.f32.xlu0 %v2905
    %v2907 = vpop.xlane.xlu0 %2906
    %v2908 = vrcp.pop %v2904
    %v2909 = vrcp.pop %v2907
    %v2910 = vmul.f32 %v2899, %v2908
    %v2911 = vmul.f32 %v2901, %v2909
    %v2913 = vsel %vm448, %v2910, 0
    %v2916 = vsel %vm448, %v2911, 0
    %2918 = vmatprep.subr.mxu0 0.0
    %2919 = vmatpush1.msra.mxu0 0.0
    %2920 = vmatprep.subr.mxu0 0.0
    %2921 = vmatpush1.msra.mxu0 0.0
    %2922 = vmatprep.subr.mxu0 0.0
    %2923 = vmatpush1.msra.mxu0 0.0
    %2924 = vmatprep.subr.mxu0 0.0
    %2925 = vmatpush1.msra.mxu0 0.0
    %2926 = vmatprep.subr.mxu0 0.0
    %2927 = vmatpush1.msra.mxu0 0.0
    %2928 = vmatprep.subr.mxu0 0.0
    %2929 = vmatpush1.msra.mxu0 0.0
    %2930 = vmatprep.subr.mxu0 0.0
    %2931 = vmatpush1.msra.mxu0 0.0
    %2932 = vmatprep.subr.mxu0 0.0
    %2933 = vmatpush1.msra.mxu0 0.0
    %2934 = vmatprep.subr.mxu0 0.0
    %2935 = vmatpush1.msra.mxu0 0.0
    %2936 = vmatprep.subr.mxu0 0.0
    %2937 = vmatpush1.msra.mxu0 0.0
    %2938 = vmatprep.subr.mxu0 0.0
    %2939 = vmatpush1.msra.mxu0 0.0
    %2940 = vmatprep.subr.mxu0 0.0
    %2941 = vmatpush1.msra.mxu0 0.0
    %2942 = vmatprep.subr.mxu0 0.0
    %2943 = vmatpush1.msra.mxu0 0.0
    %2944 = vmatprep.subr.mxu0 0.0
    %2945 = vmatpush1.msra.mxu0 0.0
    %2946 = vmatprep.subr.mxu0 0.0
    %2947 = vmatpush1.msra.mxu0 %v2804
    %2948 = vmatprep.subr.mxu0 0.0
    %2949 = vmatpush1.msra.mxu0 %v2799
    %2950 = vmatprep.subr.mxu0 0.0
    %2951 = vmatpush2.msra.mxu0 0.0
    %2952 = vmatprep.subr.mxu0 0.0
    %2953 = vmatpush2.msra.mxu0 0.0
    %2954 = vmatprep.subr.mxu0 0.0
    %2955 = vmatpush2.msra.mxu0 0.0
    %2956 = vmatprep.subr.mxu0 0.0
    %2957 = vmatpush2.msra.mxu0 0.0
    %2958 = vmatprep.subr.mxu0 0.0
    %2959 = vmatpush2.msra.mxu0 0.0
    %2960 = vmatprep.subr.mxu0 0.0
    %2961 = vmatpush2.msra.mxu0 0.0
    %2962 = vmatprep.subr.mxu0 0.0
    %2963 = vmatpush2.msra.mxu0 0.0
    %2964 = vmatprep.subr.mxu0 0.0
    %2965 = vmatpush2.msra.mxu0 0.0
    %2966 = vmatprep.subr.mxu0 0.0
    %2967 = vmatpush2.msra.mxu0 0.0
    %2968 = vmatprep.subr.mxu0 0.0
    %2969 = vmatpush2.msra.mxu0 0.0
    %2970 = vmatprep.subr.mxu0 0.0
    %2971 = vmatpush2.msra.mxu0 0.0
    %2972 = vmatprep.subr.mxu0 0.0
    %2973 = vmatpush2.msra.mxu0 0.0
    %2974 = vmatprep.subr.mxu0 0.0
    %2975 = vmatpush2.msra.mxu0 0.0
    %2976 = vmatprep.subr.mxu0 0.0
    %2977 = vmatpush2.msra.mxu0 0.0
    %2978 = vmatprep.subr.mxu0 0.0
    %2979 = vmatpush2.msra.mxu0 0.0
    %2980 = vmatprep.subr.mxu0 0.0
    %2981 = vmatpush2.msra.mxu0 0.0
    %2982 = vmatprep.mubr.f32.mxu0 0.0
    %2983 = vmatmul.mubr.f32.gmra.mxu0 %v2913
    %v2984 = vpop.f32.mrf.mxu0
    %v2985 = vadd.f32 0.0, %v2984
    %v2986 = vpop.f32.mrf.mxu0
    %2987 = vmatprep.mubr.f32.mxu0 0.0
    %2988 = vmatmul.mubr.f32.gmra.mxu0 %v2916
    %v2989 = vpop.f32.mrf.mxu0
    %v2990 = vadd.f32 0.0, %v2989
    %v2991 = vpop.f32.mrf.mxu0
    %2992 = vdwg.mxu0
    %s2993 = scalar_lea.vmem %s10, 32
    %v2994 = vld [vmem:[%s2993] sm:$0xff]
    %v2996 = vsel %vm352, %v2985, 0
    %v2999 = vsel %vm352, %v2990, 0
    %3001 = vmatprep.subr.mxu0 0.0
    %3002 = vmatpush1.msra.mxu0 0.0
    %3003 = vmatprep.subr.mxu0 0.0
    %3004 = vmatpush1.msra.mxu0 0.0
    %3005 = vmatprep.subr.mxu0 0.0
    %3006 = vmatpush1.msra.mxu0 0.0
    %3007 = vmatprep.subr.mxu0 0.0
    %3008 = vmatpush1.msra.mxu0 0.0
    %3009 = vmatprep.subr.mxu0 0.0
    %3010 = vmatpush1.msra.mxu0 0.0
    %3011 = vmatprep.subr.mxu0 0.0
    %3012 = vmatpush1.msra.mxu0 0.0
    %3013 = vmatprep.subr.mxu0 0.0
    %3014 = vmatpush1.msra.mxu0 0.0
    %3015 = vmatprep.subr.mxu0 0.0
    %3016 = vmatpush1.msra.mxu0 0.0
    %3017 = vmatprep.subr.mxu0 0.0
    %3018 = vmatpush1.msra.mxu0 0.0
    %3019 = vmatprep.subr.mxu0 0.0
    %3020 = vmatpush1.msra.mxu0 0.0
    %3021 = vmatprep.subr.mxu0 0.0
    %3022 = vmatpush1.msra.mxu0 0.0
    %3023 = vmatprep.subr.mxu0 0.0
    %3024 = vmatpush1.msra.mxu0 0.0
    %3025 = vmatprep.subr.mxu0 0.0
    %3026 = vmatpush1.msra.mxu0 0.0
    %3027 = vmatprep.subr.mxu0 0.0
    %3028 = vmatpush1.msra.mxu0 0.0
    %3029 = vmatprep.subr.mxu0 0.0
    %3030 = vmatpush1.msra.mxu0 0.0
    %3031 = vmatprep.subr.mxu0 0.0
    %3032 = vmatpush1.msra.mxu0 %v2994
    %3033 = vmatprep.subr.mxu0 0.0
    %3034 = vmatpush2.msra.mxu0 0.0
    %3035 = vmatprep.subr.mxu0 0.0
    %3036 = vmatpush2.msra.mxu0 0.0
    %3037 = vmatprep.subr.mxu0 0.0
    %3038 = vmatpush2.msra.mxu0 0.0
    %3039 = vmatprep.subr.mxu0 0.0
    %3040 = vmatpush2.msra.mxu0 0.0
    %3041 = vmatprep.subr.mxu0 0.0
    %3042 = vmatpush2.msra.mxu0 0.0
    %3043 = vmatprep.subr.mxu0 0.0
    %3044 = vmatpush2.msra.mxu0 0.0
    %3045 = vmatprep.subr.mxu0 0.0
    %3046 = vmatpush2.msra.mxu0 0.0
    %3047 = vmatprep.subr.mxu0 0.0
    %3048 = vmatpush2.msra.mxu0 0.0
    %3049 = vmatprep.subr.mxu0 0.0
    %3050 = vmatpush2.msra.mxu0 0.0
    %3051 = vmatprep.subr.mxu0 0.0
    %3052 = vmatpush2.msra.mxu0 0.0
    %3053 = vmatprep.subr.mxu0 0.0
    %3054 = vmatpush2.msra.mxu0 0.0
    %3055 = vmatprep.subr.mxu0 0.0
    %3056 = vmatpush2.msra.mxu0 0.0
    %3057 = vmatprep.subr.mxu0 0.0
    %3058 = vmatpush2.msra.mxu0 0.0
    %3059 = vmatprep.subr.mxu0 0.0
    %3060 = vmatpush2.msra.mxu0 0.0
    %3061 = vmatprep.subr.mxu0 0.0
    %3062 = vmatpush2.msra.mxu0 0.0
    %3063 = vmatprep.subr.mxu0 0.0
    %3064 = vmatpush2.msra.mxu0 0.0
    %3065 = vmatprep.mubr.f32.mxu0 0.0
    %3066 = vmatmul.mubr.f32.gmra.mxu0 %v2996
    %v3067 = vpop.f32.mrf.mxu0
    %v3068 = vadd.f32 0.0, %v3067
    %v3069 = vpop.f32.mrf.mxu0
    %3070 = vmatprep.mubr.f32.mxu0 0.0
    %3071 = vmatmul.mubr.f32.gmra.mxu0 %v2999
    %v3072 = vpop.f32.mrf.mxu0
    %v3073 = vadd.f32 0.0, %v3072
    %v3074 = vpop.f32.mrf.mxu0
    %3075 = vdwg.mxu0
    %v3077 = vlaneseq
    %v3078 = vshrl.u32 %v3077, 7
    %v3079 = vsub.s32 0, %v3078
    %v3080 = vrot.slane %v2536, %v3079
    %v3082 = vadd.f32 %v3080, %v3068
    %v3083 = vadd.f32 %v3080, %v3073
    %s3084 = scalar_lea.vmem %s4, 160
    %v3085 = vld [vmem:[%s3084] sm:$0xff]
    %v3086 = vld [vmem:[%s3084 + $0x8] sm:$0xff]
    %v3087 = vld [vmem:[%s3084 + $0x10] sm:$0xff]
    %v3088 = vld [vmem:[%s3084 + $0x18] sm:$0xff]
    %s3089 = scalar_lea.vmem %s5, 5
    %v3090 = vld [vmem:[%s3089] sm:$0x1]
    %v3092 = vlaneseq
    %v3093 = vshrl.u32 %v3092, 7
    %v3094 = vsub.s32 0, %v3093
    %v3095 = vrot.slane %v3090, %v3094
    %3097 = vmatprep.subr.mxu0 0.0
    %3098 = vmatpush1.msra.mxu0 0.0
    %3099 = vmatprep.subr.mxu0 0.0
    %3100 = vmatpush1.msra.mxu0 0.0
    %3101 = vmatprep.subr.mxu0 0.0
    %3102 = vmatpush1.msra.mxu0 0.0
    %3103 = vmatprep.subr.mxu0 0.0
    %3104 = vmatpush1.msra.mxu0 0.0
    %3105 = vmatprep.subr.mxu0 0.0
    %3106 = vmatpush1.msra.mxu0 0.0
    %3107 = vmatprep.subr.mxu0 0.0
    %3108 = vmatpush1.msra.mxu0 0.0
    %3109 = vmatprep.subr.mxu0 0.0
    %3110 = vmatpush1.msra.mxu0 0.0
    %3111 = vmatprep.subr.mxu0 0.0
    %3112 = vmatpush1.msra.mxu0 0.0
    %3113 = vmatprep.subr.mxu0 0.0
    %3114 = vmatpush1.msra.mxu0 0.0
    %3115 = vmatprep.subr.mxu0 0.0
    %3116 = vmatpush1.msra.mxu0 0.0
    %3117 = vmatprep.subr.mxu0 0.0
    %3118 = vmatpush1.msra.mxu0 0.0
    %3119 = vmatprep.subr.mxu0 0.0
    %3120 = vmatpush1.msra.mxu0 0.0
    %3121 = vmatprep.subr.mxu0 0.0
    %3122 = vmatpush1.msra.mxu0 %v3088
    %3123 = vmatprep.subr.mxu0 0.0
    %3124 = vmatpush1.msra.mxu0 %v3087
    %3125 = vmatprep.subr.mxu0 0.0
    %3126 = vmatpush1.msra.mxu0 %v3086
    %3127 = vmatprep.subr.mxu0 0.0
    %3128 = vmatpush1.msra.mxu0 %v3085
    %3129 = vmatprep.subr.mxu0 0.0
    %3130 = vmatpush2.msra.mxu0 0.0
    %3131 = vmatprep.subr.mxu0 0.0
    %3132 = vmatpush2.msra.mxu0 0.0
    %3133 = vmatprep.subr.mxu0 0.0
    %3134 = vmatpush2.msra.mxu0 0.0
    %3135 = vmatprep.subr.mxu0 0.0
    %3136 = vmatpush2.msra.mxu0 0.0
    %3137 = vmatprep.subr.mxu0 0.0
    %3138 = vmatpush2.msra.mxu0 0.0
    %3139 = vmatprep.subr.mxu0 0.0
    %3140 = vmatpush2.msra.mxu0 0.0
    %3141 = vmatprep.subr.mxu0 0.0
    %3142 = vmatpush2.msra.mxu0 0.0
    %3143 = vmatprep.subr.mxu0 0.0
    %3144 = vmatpush2.msra.mxu0 0.0
    %3145 = vmatprep.subr.mxu0 0.0
    %3146 = vmatpush2.msra.mxu0 0.0
    %3147 = vmatprep.subr.mxu0 0.0
    %3148 = vmatpush2.msra.mxu0 0.0
    %3149 = vmatprep.subr.mxu0 0.0
    %3150 = vmatpush2.msra.mxu0 0.0
    %3151 = vmatprep.subr.mxu0 0.0
    %3152 = vmatpush2.msra.mxu0 0.0
    %3153 = vmatprep.subr.mxu0 0.0
    %3154 = vmatpush2.msra.mxu0 0.0
    %3155 = vmatprep.subr.mxu0 0.0
    %3156 = vmatpush2.msra.mxu0 0.0
    %3157 = vmatprep.subr.mxu0 0.0
    %3158 = vmatpush2.msra.mxu0 0.0
    %3159 = vmatprep.subr.mxu0 0.0
    %3160 = vmatpush2.msra.mxu0 0.0
    %3161 = vmatprep.mubr.f32.mxu0 0.0
    %3162 = vmatmul.mubr.f32.gmra.mxu0 %v2551
    %v3163 = vpop.f32.mrf.mxu0
    %v3164 = vadd.f32 %v3095, %v3163
    %v3165 = vpop.f32.mrf.mxu0
    %3166 = vmatprep.mubr.f32.mxu0 0.0
    %3167 = vmatmul.mubr.f32.gmra.mxu0 %v2554
    %v3168 = vpop.f32.mrf.mxu0
    %v3169 = vadd.f32 %v3095, %v3168
    %v3170 = vpop.f32.mrf.mxu0
    %3171 = vdwg.mxu0
    %s3172 = scalar_lea.vmem %s6, 160
    %v3173 = vld [vmem:[%s3172] sm:$0xff]
    %v3174 = vld [vmem:[%s3172 + $0x8] sm:$0xff]
    %v3175 = vld [vmem:[%s3172 + $0x10] sm:$0xff]
    %v3176 = vld [vmem:[%s3172 + $0x18] sm:$0xff]
    %s3177 = scalar_lea.vmem %s7, 5
    %v3178 = vld [vmem:[%s3177] sm:$0x1]
    %v3180 = vlaneseq
    %v3181 = vshrl.u32 %v3180, 7
    %v3182 = vsub.s32 0, %v3181
    %v3183 = vrot.slane %v3178, %v3182
    %3185 = vmatprep.subr.mxu0 0.0
    %3186 = vmatpush1.msra.mxu0 0.0
    %3187 = vmatprep.subr.mxu0 0.0
    %3188 = vmatpush1.msra.mxu0 0.0
    %3189 = vmatprep.subr.mxu0 0.0
    %3190 = vmatpush1.msra.mxu0 0.0
    %3191 = vmatprep.subr.mxu0 0.0
    %3192 = vmatpush1.msra.mxu0 0.0
    %3193 = vmatprep.subr.mxu0 0.0
    %3194 = vmatpush1.msra.mxu0 0.0
    %3195 = vmatprep.subr.mxu0 0.0
    %3196 = vmatpush1.msra.mxu0 0.0
    %3197 = vmatprep.subr.mxu0 0.0
    %3198 = vmatpush1.msra.mxu0 0.0
    %3199 = vmatprep.subr.mxu0 0.0
    %3200 = vmatpush1.msra.mxu0 0.0
    %3201 = vmatprep.subr.mxu0 0.0
    %3202 = vmatpush1.msra.mxu0 0.0
    %3203 = vmatprep.subr.mxu0 0.0
    %3204 = vmatpush1.msra.mxu0 0.0
    %3205 = vmatprep.subr.mxu0 0.0
    %3206 = vmatpush1.msra.mxu0 0.0
    %3207 = vmatprep.subr.mxu0 0.0
    %3208 = vmatpush1.msra.mxu0 0.0
    %3209 = vmatprep.subr.mxu0 0.0
    %3210 = vmatpush1.msra.mxu0 %v3176
    %3211 = vmatprep.subr.mxu0 0.0
    %3212 = vmatpush1.msra.mxu0 %v3175
    %3213 = vmatprep.subr.mxu0 0.0
    %3214 = vmatpush1.msra.mxu0 %v3174
    %3215 = vmatprep.subr.mxu0 0.0
    %3216 = vmatpush1.msra.mxu0 %v3173
    %3217 = vmatprep.subr.mxu0 0.0
    %3218 = vmatpush2.msra.mxu0 0.0
    %3219 = vmatprep.subr.mxu0 0.0
    %3220 = vmatpush2.msra.mxu0 0.0
    %3221 = vmatprep.subr.mxu0 0.0
    %3222 = vmatpush2.msra.mxu0 0.0
    %3223 = vmatprep.subr.mxu0 0.0
    %3224 = vmatpush2.msra.mxu0 0.0
    %3225 = vmatprep.subr.mxu0 0.0
    %3226 = vmatpush2.msra.mxu0 0.0
    %3227 = vmatprep.subr.mxu0 0.0
    %3228 = vmatpush2.msra.mxu0 0.0
    %3229 = vmatprep.subr.mxu0 0.0
    %3230 = vmatpush2.msra.mxu0 0.0
    %3231 = vmatprep.subr.mxu0 0.0
    %3232 = vmatpush2.msra.mxu0 0.0
    %3233 = vmatprep.subr.mxu0 0.0
    %3234 = vmatpush2.msra.mxu0 0.0
    %3235 = vmatprep.subr.mxu0 0.0
    %3236 = vmatpush2.msra.mxu0 0.0
    %3237 = vmatprep.subr.mxu0 0.0
    %3238 = vmatpush2.msra.mxu0 0.0
    %3239 = vmatprep.subr.mxu0 0.0
    %3240 = vmatpush2.msra.mxu0 0.0
    %3241 = vmatprep.subr.mxu0 0.0
    %3242 = vmatpush2.msra.mxu0 0.0
    %3243 = vmatprep.subr.mxu0 0.0
    %3244 = vmatpush2.msra.mxu0 0.0
    %3245 = vmatprep.subr.mxu0 0.0
    %3246 = vmatpush2.msra.mxu0 0.0
    %3247 = vmatprep.subr.mxu0 0.0
    %3248 = vmatpush2.msra.mxu0 0.0
    %3249 = vmatprep.mubr.f32.mxu0 0.0
    %3250 = vmatmul.mubr.f32.gmra.mxu0 %v2551
    %v3251 = vpop.f32.mrf.mxu0
    %v3252 = vadd.f32 %v3183, %v3251
    %v3253 = vpop.f32.mrf.mxu0
    %3254 = vmatprep.mubr.f32.mxu0 0.0
    %3255 = vmatmul.mubr.f32.gmra.mxu0 %v2554
    %v3256 = vpop.f32.mrf.mxu0
    %v3257 = vadd.f32 %v3183, %v3256
    %v3258 = vpop.f32.mrf.mxu0
    %3259 = vdwg.mxu0
    %s3260 = scalar_lea.vmem %s8, 160
    %v3261 = vld [vmem:[%s3260] sm:$0xff]
    %v3262 = vld [vmem:[%s3260 + $0x8] sm:$0xff]
    %v3263 = vld [vmem:[%s3260 + $0x10] sm:$0xff]
    %v3264 = vld [vmem:[%s3260 + $0x18] sm:$0xff]
    %s3265 = scalar_lea.vmem %s9, 5
    %v3266 = vld [vmem:[%s3265] sm:$0x1]
    %v3268 = vlaneseq
    %v3269 = vshrl.u32 %v3268, 7
    %v3270 = vsub.s32 0, %v3269
    %v3271 = vrot.slane %v3266, %v3270
    %3273 = vmatprep.subr.mxu0 0.0
    %3274 = vmatpush1.msra.mxu0 0.0
    %3275 = vmatprep.subr.mxu0 0.0
    %3276 = vmatpush1.msra.mxu0 0.0
    %3277 = vmatprep.subr.mxu0 0.0
    %3278 = vmatpush1.msra.mxu0 0.0
    %3279 = vmatprep.subr.mxu0 0.0
    %3280 = vmatpush1.msra.mxu0 0.0
    %3281 = vmatprep.subr.mxu0 0.0
    %3282 = vmatpush1.msra.mxu0 0.0
    %3283 = vmatprep.subr.mxu0 0.0
    %3284 = vmatpush1.msra.mxu0 0.0
    %3285 = vmatprep.subr.mxu0 0.0
    %3286 = vmatpush1.msra.mxu0 0.0
    %3287 = vmatprep.subr.mxu0 0.0
    %3288 = vmatpush1.msra.mxu0 0.0
    %3289 = vmatprep.subr.mxu0 0.0
    %3290 = vmatpush1.msra.mxu0 0.0
    %3291 = vmatprep.subr.mxu0 0.0
    %3292 = vmatpush1.msra.mxu0 0.0
    %3293 = vmatprep.subr.mxu0 0.0
    %3294 = vmatpush1.msra.mxu0 0.0
    %3295 = vmatprep.subr.mxu0 0.0
    %3296 = vmatpush1.msra.mxu0 0.0
    %3297 = vmatprep.subr.mxu0 0.0
    %3298 = vmatpush1.msra.mxu0 %v3264
    %3299 = vmatprep.subr.mxu0 0.0
    %3300 = vmatpush1.msra.mxu0 %v3263
    %3301 = vmatprep.subr.mxu0 0.0
    %3302 = vmatpush1.msra.mxu0 %v3262
    %3303 = vmatprep.subr.mxu0 0.0
    %3304 = vmatpush1.msra.mxu0 %v3261
    %3305 = vmatprep.subr.mxu0 0.0
    %3306 = vmatpush2.msra.mxu0 0.0
    %3307 = vmatprep.subr.mxu0 0.0
    %3308 = vmatpush2.msra.mxu0 0.0
    %3309 = vmatprep.subr.mxu0 0.0
    %3310 = vmatpush2.msra.mxu0 0.0
    %3311 = vmatprep.subr.mxu0 0.0
    %3312 = vmatpush2.msra.mxu0 0.0
    %3313 = vmatprep.subr.mxu0 0.0
    %3314 = vmatpush2.msra.mxu0 0.0
    %3315 = vmatprep.subr.mxu0 0.0
    %3316 = vmatpush2.msra.mxu0 0.0
    %3317 = vmatprep.subr.mxu0 0.0
    %3318 = vmatpush2.msra.mxu0 0.0
    %3319 = vmatprep.subr.mxu0 0.0
    %3320 = vmatpush2.msra.mxu0 0.0
    %3321 = vmatprep.subr.mxu0 0.0
    %3322 = vmatpush2.msra.mxu0 0.0
    %3323 = vmatprep.subr.mxu0 0.0
    %3324 = vmatpush2.msra.mxu0 0.0
    %3325 = vmatprep.subr.mxu0 0.0
    %3326 = vmatpush2.msra.mxu0 0.0
    %3327 = vmatprep.subr.mxu0 0.0
    %3328 = vmatpush2.msra.mxu0 0.0
    %3329 = vmatprep.subr.mxu0 0.0
    %3330 = vmatpush2.msra.mxu0 0.0
    %3331 = vmatprep.subr.mxu0 0.0
    %3332 = vmatpush2.msra.mxu0 0.0
    %3333 = vmatprep.subr.mxu0 0.0
    %3334 = vmatpush2.msra.mxu0 0.0
    %3335 = vmatprep.subr.mxu0 0.0
    %3336 = vmatpush2.msra.mxu0 0.0
    %3337 = vmatprep.mubr.f32.mxu0 0.0
    %3338 = vmatmul.mubr.f32.gmra.mxu0 %v2551
    %v3339 = vpop.f32.mrf.mxu0
    %v3340 = vadd.f32 %v3271, %v3339
    %v3341 = vpop.f32.mrf.mxu0
    %3342 = vmatprep.mubr.f32.mxu0 0.0
    %3343 = vmatmul.mubr.f32.gmra.mxu0 %v2554
    %v3344 = vpop.f32.mrf.mxu0
    %v3345 = vadd.f32 %v3271, %v3344
    %v3346 = vpop.f32.mrf.mxu0
    %3347 = vdwg.mxu0
    %v3349 = vsel %vm352, %v3164, 0
    %v3352 = vsel %vm352, %v3169, 0
    %v3355 = vsel %vm352, %v3252, 0
    %v3358 = vsel %vm352, %v3257, 0
    %3360 = vmatprep.subr.mxu0 0.0
    %3361 = vmatpush1.xpose.msra.mxu0 0.0
    %3362 = vmatprep.subr.mxu0 0.0
    %3363 = vmatpush1.xpose.msra.mxu0 0.0
    %3364 = vmatprep.subr.mxu0 0.0
    %3365 = vmatpush1.xpose.msra.mxu0 0.0
    %3366 = vmatprep.subr.mxu0 0.0
    %3367 = vmatpush1.xpose.msra.mxu0 0.0
    %3368 = vmatprep.subr.mxu0 0.0
    %3369 = vmatpush1.xpose.msra.mxu0 0.0
    %3370 = vmatprep.subr.mxu0 0.0
    %3371 = vmatpush1.xpose.msra.mxu0 0.0
    %3372 = vmatprep.subr.mxu0 0.0
    %3373 = vmatpush1.xpose.msra.mxu0 0.0
    %3374 = vmatprep.subr.mxu0 0.0
    %3375 = vmatpush1.xpose.msra.mxu0 0.0
    %3376 = vmatprep.subr.mxu0 0.0
    %3377 = vmatpush1.xpose.msra.mxu0 0.0
    %3378 = vmatprep.subr.mxu0 0.0
    %3379 = vmatpush1.xpose.msra.mxu0 0.0
    %3380 = vmatprep.subr.mxu0 0.0
    %3381 = vmatpush1.xpose.msra.mxu0 0.0
    %3382 = vmatprep.subr.mxu0 0.0
    %3383 = vmatpush1.xpose.msra.mxu0 0.0
    %3384 = vmatprep.subr.mxu0 0.0
    %3385 = vmatpush1.xpose.msra.mxu0 0.0
    %3386 = vmatprep.subr.mxu0 0.0
    %3387 = vmatpush1.xpose.msra.mxu0 0.0
    %3388 = vmatprep.subr.mxu0 0.0
    %3389 = vmatpush1.xpose.msra.mxu0 %v3358
    %3390 = vmatprep.subr.mxu0 0.0
    %3391 = vmatpush1.xpose.msra.mxu0 %v3355
    %3392 = vmatprep.subr.mxu0 0.0
    %3393 = vmatpush2.xpose.msra.mxu0 0.0
    %3394 = vmatprep.subr.mxu0 0.0
    %3395 = vmatpush2.xpose.msra.mxu0 0.0
    %3396 = vmatprep.subr.mxu0 0.0
    %3397 = vmatpush2.xpose.msra.mxu0 0.0
    %3398 = vmatprep.subr.mxu0 0.0
    %3399 = vmatpush2.xpose.msra.mxu0 0.0
    %3400 = vmatprep.subr.mxu0 0.0
    %3401 = vmatpush2.xpose.msra.mxu0 0.0
    %3402 = vmatprep.subr.mxu0 0.0
    %3403 = vmatpush2.xpose.msra.mxu0 0.0
    %3404 = vmatprep.subr.mxu0 0.0
    %3405 = vmatpush2.xpose.msra.mxu0 0.0
    %3406 = vmatprep.subr.mxu0 0.0
    %3407 = vmatpush2.xpose.msra.mxu0 0.0
    %3408 = vmatprep.subr.mxu0 0.0
    %3409 = vmatpush2.xpose.msra.mxu0 0.0
    %3410 = vmatprep.subr.mxu0 0.0
    %3411 = vmatpush2.xpose.msra.mxu0 0.0
    %3412 = vmatprep.subr.mxu0 0.0
    %3413 = vmatpush2.xpose.msra.mxu0 0.0
    %3414 = vmatprep.subr.mxu0 0.0
    %3415 = vmatpush2.xpose.msra.mxu0 0.0
    %3416 = vmatprep.subr.mxu0 0.0
    %3417 = vmatpush2.xpose.msra.mxu0 0.0
    %3418 = vmatprep.subr.mxu0 0.0
    %3419 = vmatpush2.xpose.msra.mxu0 0.0
    %3420 = vmatprep.subr.mxu0 0.0
    %3421 = vmatpush2.xpose.msra.mxu0 0.0
    %3422 = vmatprep.subr.mxu0 0.0
    %3423 = vmatpush2.xpose.msra.mxu0 0.0
    %3424 = vmatprep.mubr.f32.mxu0 0.0
    %3425 = vmatmul.mubr.f32.gmra.mxu0 %v3349
    %v3426 = vpop.f32.mrf.mxu0
    %v3427 = vadd.f32 0.0, %v3426
    %v3428 = vpop.f32.mrf.mxu0
    %3429 = vmatprep.mubr.f32.mxu0 0.0
    %3430 = vmatmul.mubr.f32.gmra.mxu0 %v3352
    %v3431 = vpop.f32.mrf.mxu0
    %v3432 = vadd.f32 0.0, %v3431
    %v3433 = vpop.f32.mrf.mxu0
    %3434 = vdwg.mxu0
    %v3435 = vmul.f32 %v3427, 0.35355338
    %v3436 = vmul.f32 %v3432, 0.35355338
    %v3437 = vadd.f32 %v3435, %v81
    %v3438 = vadd.f32 %v3436, %v82
    %v3439 = vmul.f32 %v3437, 1.442695
    %v3440 = vpow.pop %v3439
    %v3441 = vmul.f32 %v3438, 1.442695
    %v3442 = vpow.pop %v3441
    %v3443 = vsel %vm448, %v3440, 0.0
    %3444 = vadd.xlane.f32.xlu0 %v3443
    %v3445 = vpop.xlane.xlu0 %3444
    %v3446 = vsel %vm448, %v3442, 0.0
    %3447 = vadd.xlane.f32.xlu0 %v3446
    %v3448 = vpop.xlane.xlu0 %3447
    %v3449 = vrcp.pop %v3445
    %v3450 = vrcp.pop %v3448
    %v3451 = vmul.f32 %v3440, %v3449
    %v3452 = vmul.f32 %v3442, %v3450
    %v3454 = vsel %vm448, %v3451, 0
    %v3457 = vsel %vm448, %v3452, 0
    %3459 = vmatprep.subr.mxu0 0.0
    %3460 = vmatpush1.msra.mxu0 0.0
    %3461 = vmatprep.subr.mxu0 0.0
    %3462 = vmatpush1.msra.mxu0 0.0
    %3463 = vmatprep.subr.mxu0 0.0
    %3464 = vmatpush1.msra.mxu0 0.0
    %3465 = vmatprep.subr.mxu0 0.0
    %3466 = vmatpush1.msra.mxu0 0.0
    %3467 = vmatprep.subr.mxu0 0.0
    %3468 = vmatpush1.msra.mxu0 0.0
    %3469 = vmatprep.subr.mxu0 0.0
    %3470 = vmatpush1.msra.mxu0 0.0
    %3471 = vmatprep.subr.mxu0 0.0
    %3472 = vmatpush1.msra.mxu0 0.0
    %3473 = vmatprep.subr.mxu0 0.0
    %3474 = vmatpush1.msra.mxu0 0.0
    %3475 = vmatprep.subr.mxu0 0.0
    %3476 = vmatpush1.msra.mxu0 0.0
    %3477 = vmatprep.subr.mxu0 0.0
    %3478 = vmatpush1.msra.mxu0 0.0
    %3479 = vmatprep.subr.mxu0 0.0
    %3480 = vmatpush1.msra.mxu0 0.0
    %3481 = vmatprep.subr.mxu0 0.0
    %3482 = vmatpush1.msra.mxu0 0.0
    %3483 = vmatprep.subr.mxu0 0.0
    %3484 = vmatpush1.msra.mxu0 0.0
    %3485 = vmatprep.subr.mxu0 0.0
    %3486 = vmatpush1.msra.mxu0 0.0
    %3487 = vmatprep.subr.mxu0 0.0
    %3488 = vmatpush1.msra.mxu0 %v3345
    %3489 = vmatprep.subr.mxu0 0.0
    %3490 = vmatpush1.msra.mxu0 %v3340
    %3491 = vmatprep.subr.mxu0 0.0
    %3492 = vmatpush2.msra.mxu0 0.0
    %3493 = vmatprep.subr.mxu0 0.0
    %3494 = vmatpush2.msra.mxu0 0.0
    %3495 = vmatprep.subr.mxu0 0.0
    %3496 = vmatpush2.msra.mxu0 0.0
    %3497 = vmatprep.subr.mxu0 0.0
    %3498 = vmatpush2.msra.mxu0 0.0
    %3499 = vmatprep.subr.mxu0 0.0
    %3500 = vmatpush2.msra.mxu0 0.0
    %3501 = vmatprep.subr.mxu0 0.0
    %3502 = vmatpush2.msra.mxu0 0.0
    %3503 = vmatprep.subr.mxu0 0.0
    %3504 = vmatpush2.msra.mxu0 0.0
    %3505 = vmatprep.subr.mxu0 0.0
    %3506 = vmatpush2.msra.mxu0 0.0
    %3507 = vmatprep.subr.mxu0 0.0
    %3508 = vmatpush2.msra.mxu0 0.0
    %3509 = vmatprep.subr.mxu0 0.0
    %3510 = vmatpush2.msra.mxu0 0.0
    %3511 = vmatprep.subr.mxu0 0.0
    %3512 = vmatpush2.msra.mxu0 0.0
    %3513 = vmatprep.subr.mxu0 0.0
    %3514 = vmatpush2.msra.mxu0 0.0
    %3515 = vmatprep.subr.mxu0 0.0
    %3516 = vmatpush2.msra.mxu0 0.0
    %3517 = vmatprep.subr.mxu0 0.0
    %3518 = vmatpush2.msra.mxu0 0.0
    %3519 = vmatprep.subr.mxu0 0.0
    %3520 = vmatpush2.msra.mxu0 0.0
    %3521 = vmatprep.subr.mxu0 0.0
    %3522 = vmatpush2.msra.mxu0 0.0
    %3523 = vmatprep.mubr.f32.mxu0 0.0
    %3524 = vmatmul.mubr.f32.gmra.mxu0 %v3454
    %v3525 = vpop.f32.mrf.mxu0
    %v3526 = vadd.f32 0.0, %v3525
    %v3527 = vpop.f32.mrf.mxu0
    %3528 = vmatprep.mubr.f32.mxu0 0.0
    %3529 = vmatmul.mubr.f32.gmra.mxu0 %v3457
    %v3530 = vpop.f32.mrf.mxu0
    %v3531 = vadd.f32 0.0, %v3530
    %v3532 = vpop.f32.mrf.mxu0
    %3533 = vdwg.mxu0
    %s3534 = scalar_lea.vmem %s10, 40
    %v3535 = vld [vmem:[%s3534] sm:$0xff]
    %v3537 = vsel %vm352, %v3526, 0
    %v3540 = vsel %vm352, %v3531, 0
    %3542 = vmatprep.subr.mxu0 0.0
    %3543 = vmatpush1.msra.mxu0 0.0
    %3544 = vmatprep.subr.mxu0 0.0
    %3545 = vmatpush1.msra.mxu0 0.0
    %3546 = vmatprep.subr.mxu0 0.0
    %3547 = vmatpush1.msra.mxu0 0.0
    %3548 = vmatprep.subr.mxu0 0.0
    %3549 = vmatpush1.msra.mxu0 0.0
    %3550 = vmatprep.subr.mxu0 0.0
    %3551 = vmatpush1.msra.mxu0 0.0
    %3552 = vmatprep.subr.mxu0 0.0
    %3553 = vmatpush1.msra.mxu0 0.0
    %3554 = vmatprep.subr.mxu0 0.0
    %3555 = vmatpush1.msra.mxu0 0.0
    %3556 = vmatprep.subr.mxu0 0.0
    %3557 = vmatpush1.msra.mxu0 0.0
    %3558 = vmatprep.subr.mxu0 0.0
    %3559 = vmatpush1.msra.mxu0 0.0
    %3560 = vmatprep.subr.mxu0 0.0
    %3561 = vmatpush1.msra.mxu0 0.0
    %3562 = vmatprep.subr.mxu0 0.0
    %3563 = vmatpush1.msra.mxu0 0.0
    %3564 = vmatprep.subr.mxu0 0.0
    %3565 = vmatpush1.msra.mxu0 0.0
    %3566 = vmatprep.subr.mxu0 0.0
    %3567 = vmatpush1.msra.mxu0 0.0
    %3568 = vmatprep.subr.mxu0 0.0
    %3569 = vmatpush1.msra.mxu0 0.0
    %3570 = vmatprep.subr.mxu0 0.0
    %3571 = vmatpush1.msra.mxu0 0.0
    %3572 = vmatprep.subr.mxu0 0.0
    %3573 = vmatpush1.msra.mxu0 %v3535
    %3574 = vmatprep.subr.mxu0 0.0
    %3575 = vmatpush2.msra.mxu0 0.0
    %3576 = vmatprep.subr.mxu0 0.0
    %3577 = vmatpush2.msra.mxu0 0.0
    %3578 = vmatprep.subr.mxu0 0.0
    %3579 = vmatpush2.msra.mxu0 0.0
    %3580 = vmatprep.subr.mxu0 0.0
    %3581 = vmatpush2.msra.mxu0 0.0
    %3582 = vmatprep.subr.mxu0 0.0
    %3583 = vmatpush2.msra.mxu0 0.0
    %3584 = vmatprep.subr.mxu0 0.0
    %3585 = vmatpush2.msra.mxu0 0.0
    %3586 = vmatprep.subr.mxu0 0.0
    %3587 = vmatpush2.msra.mxu0 0.0
    %3588 = vmatprep.subr.mxu0 0.0
    %3589 = vmatpush2.msra.mxu0 0.0
    %3590 = vmatprep.subr.mxu0 0.0
    %3591 = vmatpush2.msra.mxu0 0.0
    %3592 = vmatprep.subr.mxu0 0.0
    %3593 = vmatpush2.msra.mxu0 0.0
    %3594 = vmatprep.subr.mxu0 0.0
    %3595 = vmatpush2.msra.mxu0 0.0
    %3596 = vmatprep.subr.mxu0 0.0
    %3597 = vmatpush2.msra.mxu0 0.0
    %3598 = vmatprep.subr.mxu0 0.0
    %3599 = vmatpush2.msra.mxu0 0.0
    %3600 = vmatprep.subr.mxu0 0.0
    %3601 = vmatpush2.msra.mxu0 0.0
    %3602 = vmatprep.subr.mxu0 0.0
    %3603 = vmatpush2.msra.mxu0 0.0
    %3604 = vmatprep.subr.mxu0 0.0
    %3605 = vmatpush2.msra.mxu0 0.0
    %3606 = vmatprep.mubr.f32.mxu0 0.0
    %3607 = vmatmul.mubr.f32.gmra.mxu0 %v3537
    %v3608 = vpop.f32.mrf.mxu0
    %v3609 = vadd.f32 0.0, %v3608
    %v3610 = vpop.f32.mrf.mxu0
    %3611 = vmatprep.mubr.f32.mxu0 0.0
    %3612 = vmatmul.mubr.f32.gmra.mxu0 %v3540
    %v3613 = vpop.f32.mrf.mxu0
    %v3614 = vadd.f32 0.0, %v3613
    %v3615 = vpop.f32.mrf.mxu0
    %3616 = vdwg.mxu0
    %v3617 = vadd.f32 %v3082, %v3609
    %v3618 = vadd.f32 %v3083, %v3614
    %s3619 = scalar_lea.vmem %s4, 192
    %v3620 = vld [vmem:[%s3619] sm:$0xff]
    %v3621 = vld [vmem:[%s3619 + $0x8] sm:$0xff]
    %v3622 = vld [vmem:[%s3619 + $0x10] sm:$0xff]
    %v3623 = vld [vmem:[%s3619 + $0x18] sm:$0xff]
    %s3624 = scalar_lea.vmem %s5, 6
    %v3625 = vld [vmem:[%s3624] sm:$0x1]
    %v3627 = vlaneseq
    %v3628 = vshrl.u32 %v3627, 7
    %v3629 = vsub.s32 0, %v3628
    %v3630 = vrot.slane %v3625, %v3629
    %3632 = vmatprep.subr.mxu0 0.0
    %3633 = vmatpush1.msra.mxu0 0.0
    %3634 = vmatprep.subr.mxu0 0.0
    %3635 = vmatpush1.msra.mxu0 0.0
    %3636 = vmatprep.subr.mxu0 0.0
    %3637 = vmatpush1.msra.mxu0 0.0
    %3638 = vmatprep.subr.mxu0 0.0
    %3639 = vmatpush1.msra.mxu0 0.0
    %3640 = vmatprep.subr.mxu0 0.0
    %3641 = vmatpush1.msra.mxu0 0.0
    %3642 = vmatprep.subr.mxu0 0.0
    %3643 = vmatpush1.msra.mxu0 0.0
    %3644 = vmatprep.subr.mxu0 0.0
    %3645 = vmatpush1.msra.mxu0 0.0
    %3646 = vmatprep.subr.mxu0 0.0
    %3647 = vmatpush1.msra.mxu0 0.0
    %3648 = vmatprep.subr.mxu0 0.0
    %3649 = vmatpush1.msra.mxu0 0.0
    %3650 = vmatprep.subr.mxu0 0.0
    %3651 = vmatpush1.msra.mxu0 0.0
    %3652 = vmatprep.subr.mxu0 0.0
    %3653 = vmatpush1.msra.mxu0 0.0
    %3654 = vmatprep.subr.mxu0 0.0
    %3655 = vmatpush1.msra.mxu0 0.0
    %3656 = vmatprep.subr.mxu0 0.0
    %3657 = vmatpush1.msra.mxu0 %v3623
    %3658 = vmatprep.subr.mxu0 0.0
    %3659 = vmatpush1.msra.mxu0 %v3622
    %3660 = vmatprep.subr.mxu0 0.0
    %3661 = vmatpush1.msra.mxu0 %v3621
    %3662 = vmatprep.subr.mxu0 0.0
    %3663 = vmatpush1.msra.mxu0 %v3620
    %3664 = vmatprep.subr.mxu0 0.0
    %3665 = vmatpush2.msra.mxu0 0.0
    %3666 = vmatprep.subr.mxu0 0.0
    %3667 = vmatpush2.msra.mxu0 0.0
    %3668 = vmatprep.subr.mxu0 0.0
    %3669 = vmatpush2.msra.mxu0 0.0
    %3670 = vmatprep.subr.mxu0 0.0
    %3671 = vmatpush2.msra.mxu0 0.0
    %3672 = vmatprep.subr.mxu0 0.0
    %3673 = vmatpush2.msra.mxu0 0.0
    %3674 = vmatprep.subr.mxu0 0.0
    %3675 = vmatpush2.msra.mxu0 0.0
    %3676 = vmatprep.subr.mxu0 0.0
    %3677 = vmatpush2.msra.mxu0 0.0
    %3678 = vmatprep.subr.mxu0 0.0
    %3679 = vmatpush2.msra.mxu0 0.0
    %3680 = vmatprep.subr.mxu0 0.0
    %3681 = vmatpush2.msra.mxu0 0.0
    %3682 = vmatprep.subr.mxu0 0.0
    %3683 = vmatpush2.msra.mxu0 0.0
    %3684 = vmatprep.subr.mxu0 0.0
    %3685 = vmatpush2.msra.mxu0 0.0
    %3686 = vmatprep.subr.mxu0 0.0
    %3687 = vmatpush2.msra.mxu0 0.0
    %3688 = vmatprep.subr.mxu0 0.0
    %3689 = vmatpush2.msra.mxu0 0.0
    %3690 = vmatprep.subr.mxu0 0.0
    %3691 = vmatpush2.msra.mxu0 0.0
    %3692 = vmatprep.subr.mxu0 0.0
    %3693 = vmatpush2.msra.mxu0 0.0
    %3694 = vmatprep.subr.mxu0 0.0
    %3695 = vmatpush2.msra.mxu0 0.0
    %3696 = vmatprep.mubr.f32.mxu0 0.0
    %3697 = vmatmul.mubr.f32.gmra.mxu0 %v2551
    %v3698 = vpop.f32.mrf.mxu0
    %v3699 = vadd.f32 %v3630, %v3698
    %v3700 = vpop.f32.mrf.mxu0
    %3701 = vmatprep.mubr.f32.mxu0 0.0
    %3702 = vmatmul.mubr.f32.gmra.mxu0 %v2554
    %v3703 = vpop.f32.mrf.mxu0
    %v3704 = vadd.f32 %v3630, %v3703
    %v3705 = vpop.f32.mrf.mxu0
    %3706 = vdwg.mxu0
    %s3707 = scalar_lea.vmem %s6, 192
    %v3708 = vld [vmem:[%s3707] sm:$0xff]
    %v3709 = vld [vmem:[%s3707 + $0x8] sm:$0xff]
    %v3710 = vld [vmem:[%s3707 + $0x10] sm:$0xff]
    %v3711 = vld [vmem:[%s3707 + $0x18] sm:$0xff]
    %s3712 = scalar_lea.vmem %s7, 6
    %v3713 = vld [vmem:[%s3712] sm:$0x1]
    %v3715 = vlaneseq
    %v3716 = vshrl.u32 %v3715, 7
    %v3717 = vsub.s32 0, %v3716
    %v3718 = vrot.slane %v3713, %v3717
    %3720 = vmatprep.subr.mxu0 0.0
    %3721 = vmatpush1.msra.mxu0 0.0
    %3722 = vmatprep.subr.mxu0 0.0
    %3723 = vmatpush1.msra.mxu0 0.0
    %3724 = vmatprep.subr.mxu0 0.0
    %3725 = vmatpush1.msra.mxu0 0.0
    %3726 = vmatprep.subr.mxu0 0.0
    %3727 = vmatpush1.msra.mxu0 0.0
    %3728 = vmatprep.subr.mxu0 0.0
    %3729 = vmatpush1.msra.mxu0 0.0
    %3730 = vmatprep.subr.mxu0 0.0
    %3731 = vmatpush1.msra.mxu0 0.0
    %3732 = vmatprep.subr.mxu0 0.0
    %3733 = vmatpush1.msra.mxu0 0.0
    %3734 = vmatprep.subr.mxu0 0.0
    %3735 = vmatpush1.msra.mxu0 0.0
    %3736 = vmatprep.subr.mxu0 0.0
    %3737 = vmatpush1.msra.mxu0 0.0
    %3738 = vmatprep.subr.mxu0 0.0
    %3739 = vmatpush1.msra.mxu0 0.0
    %3740 = vmatprep.subr.mxu0 0.0
    %3741 = vmatpush1.msra.mxu0 0.0
    %3742 = vmatprep.subr.mxu0 0.0
    %3743 = vmatpush1.msra.mxu0 0.0
    %3744 = vmatprep.subr.mxu0 0.0
    %3745 = vmatpush1.msra.mxu0 %v3711
    %3746 = vmatprep.subr.mxu0 0.0
    %3747 = vmatpush1.msra.mxu0 %v3710
    %3748 = vmatprep.subr.mxu0 0.0
    %3749 = vmatpush1.msra.mxu0 %v3709
    %3750 = vmatprep.subr.mxu0 0.0
    %3751 = vmatpush1.msra.mxu0 %v3708
    %3752 = vmatprep.subr.mxu0 0.0
    %3753 = vmatpush2.msra.mxu0 0.0
    %3754 = vmatprep.subr.mxu0 0.0
    %3755 = vmatpush2.msra.mxu0 0.0
    %3756 = vmatprep.subr.mxu0 0.0
    %3757 = vmatpush2.msra.mxu0 0.0
    %3758 = vmatprep.subr.mxu0 0.0
    %3759 = vmatpush2.msra.mxu0 0.0
    %3760 = vmatprep.subr.mxu0 0.0
    %3761 = vmatpush2.msra.mxu0 0.0
    %3762 = vmatprep.subr.mxu0 0.0
    %3763 = vmatpush2.msra.mxu0 0.0
    %3764 = vmatprep.subr.mxu0 0.0
    %3765 = vmatpush2.msra.mxu0 0.0
    %3766 = vmatprep.subr.mxu0 0.0
    %3767 = vmatpush2.msra.mxu0 0.0
    %3768 = vmatprep.subr.mxu0 0.0
    %3769 = vmatpush2.msra.mxu0 0.0
    %3770 = vmatprep.subr.mxu0 0.0
    %3771 = vmatpush2.msra.mxu0 0.0
    %3772 = vmatprep.subr.mxu0 0.0
    %3773 = vmatpush2.msra.mxu0 0.0
    %3774 = vmatprep.subr.mxu0 0.0
    %3775 = vmatpush2.msra.mxu0 0.0
    %3776 = vmatprep.subr.mxu0 0.0
    %3777 = vmatpush2.msra.mxu0 0.0
    %3778 = vmatprep.subr.mxu0 0.0
    %3779 = vmatpush2.msra.mxu0 0.0
    %3780 = vmatprep.subr.mxu0 0.0
    %3781 = vmatpush2.msra.mxu0 0.0
    %3782 = vmatprep.subr.mxu0 0.0
    %3783 = vmatpush2.msra.mxu0 0.0
    %3784 = vmatprep.mubr.f32.mxu0 0.0
    %3785 = vmatmul.mubr.f32.gmra.mxu0 %v2551
    %v3786 = vpop.f32.mrf.mxu0
    %v3787 = vadd.f32 %v3718, %v3786
    %v3788 = vpop.f32.mrf.mxu0
    %3789 = vmatprep.mubr.f32.mxu0 0.0
    %3790 = vmatmul.mubr.f32.gmra.mxu0 %v2554
    %v3791 = vpop.f32.mrf.mxu0
    %v3792 = vadd.f32 %v3718, %v3791
    %v3793 = vpop.f32.mrf.mxu0
    %3794 = vdwg.mxu0
    %s3795 = scalar_lea.vmem %s8, 192
    %v3796 = vld [vmem:[%s3795] sm:$0xff]
    %v3797 = vld [vmem:[%s3795 + $0x8] sm:$0xff]
    %v3798 = vld [vmem:[%s3795 + $0x10] sm:$0xff]
    %v3799 = vld [vmem:[%s3795 + $0x18] sm:$0xff]
    %s3800 = scalar_lea.vmem %s9, 6
    %v3801 = vld [vmem:[%s3800] sm:$0x1]
    %v3803 = vlaneseq
    %v3804 = vshrl.u32 %v3803, 7
    %v3805 = vsub.s32 0, %v3804
    %v3806 = vrot.slane %v3801, %v3805
    %3808 = vmatprep.subr.mxu0 0.0
    %3809 = vmatpush1.msra.mxu0 0.0
    %3810 = vmatprep.subr.mxu0 0.0
    %3811 = vmatpush1.msra.mxu0 0.0
    %3812 = vmatprep.subr.mxu0 0.0
    %3813 = vmatpush1.msra.mxu0 0.0
    %3814 = vmatprep.subr.mxu0 0.0
    %3815 = vmatpush1.msra.mxu0 0.0
    %3816 = vmatprep.subr.mxu0 0.0
    %3817 = vmatpush1.msra.mxu0 0.0
    %3818 = vmatprep.subr.mxu0 0.0
    %3819 = vmatpush1.msra.mxu0 0.0
    %3820 = vmatprep.subr.mxu0 0.0
    %3821 = vmatpush1.msra.mxu0 0.0
    %3822 = vmatprep.subr.mxu0 0.0
    %3823 = vmatpush1.msra.mxu0 0.0
    %3824 = vmatprep.subr.mxu0 0.0
    %3825 = vmatpush1.msra.mxu0 0.0
    %3826 = vmatprep.subr.mxu0 0.0
    %3827 = vmatpush1.msra.mxu0 0.0
    %3828 = vmatprep.subr.mxu0 0.0
    %3829 = vmatpush1.msra.mxu0 0.0
    %3830 = vmatprep.subr.mxu0 0.0
    %3831 = vmatpush1.msra.mxu0 0.0
    %3832 = vmatprep.subr.mxu0 0.0
    %3833 = vmatpush1.msra.mxu0 %v3799
    %3834 = vmatprep.subr.mxu0 0.0
    %3835 = vmatpush1.msra.mxu0 %v3798
    %3836 = vmatprep.subr.mxu0 0.0
    %3837 = vmatpush1.msra.mxu0 %v3797
    %3838 = vmatprep.subr.mxu0 0.0
    %3839 = vmatpush1.msra.mxu0 %v3796
    %3840 = vmatprep.subr.mxu0 0.0
    %3841 = vmatpush2.msra.mxu0 0.0
    %3842 = vmatprep.subr.mxu0 0.0
    %3843 = vmatpush2.msra.mxu0 0.0
    %3844 = vmatprep.subr.mxu0 0.0
    %3845 = vmatpush2.msra.mxu0 0.0
    %3846 = vmatprep.subr.mxu0 0.0
    %3847 = vmatpush2.msra.mxu0 0.0
    %3848 = vmatprep.subr.mxu0 0.0
    %3849 = vmatpush2.msra.mxu0 0.0
    %3850 = vmatprep.subr.mxu0 0.0
    %3851 = vmatpush2.msra.mxu0 0.0
    %3852 = vmatprep.subr.mxu0 0.0
    %3853 = vmatpush2.msra.mxu0 0.0
    %3854 = vmatprep.subr.mxu0 0.0
    %3855 = vmatpush2.msra.mxu0 0.0
    %3856 = vmatprep.subr.mxu0 0.0
    %3857 = vmatpush2.msra.mxu0 0.0
    %3858 = vmatprep.subr.mxu0 0.0
    %3859 = vmatpush2.msra.mxu0 0.0
    %3860 = vmatprep.subr.mxu0 0.0
    %3861 = vmatpush2.msra.mxu0 0.0
    %3862 = vmatprep.subr.mxu0 0.0
    %3863 = vmatpush2.msra.mxu0 0.0
    %3864 = vmatprep.subr.mxu0 0.0
    %3865 = vmatpush2.msra.mxu0 0.0
    %3866 = vmatprep.subr.mxu0 0.0
    %3867 = vmatpush2.msra.mxu0 0.0
    %3868 = vmatprep.subr.mxu0 0.0
    %3869 = vmatpush2.msra.mxu0 0.0
    %3870 = vmatprep.subr.mxu0 0.0
    %3871 = vmatpush2.msra.mxu0 0.0
    %3872 = vmatprep.mubr.f32.mxu0 0.0
    %3873 = vmatmul.mubr.f32.gmra.mxu0 %v2551
    %v3874 = vpop.f32.mrf.mxu0
    %v3875 = vadd.f32 %v3806, %v3874
    %v3876 = vpop.f32.mrf.mxu0
    %3877 = vmatprep.mubr.f32.mxu0 0.0
    %3878 = vmatmul.mubr.f32.gmra.mxu0 %v2554
    %v3879 = vpop.f32.mrf.mxu0
    %v3880 = vadd.f32 %v3806, %v3879
    %v3881 = vpop.f32.mrf.mxu0
    %3882 = vdwg.mxu0
    %v3884 = vsel %vm352, %v3699, 0
    %v3887 = vsel %vm352, %v3704, 0
    %v3890 = vsel %vm352, %v3787, 0
    %v3893 = vsel %vm352, %v3792, 0
    %3895 = vmatprep.subr.mxu0 0.0
    %3896 = vmatpush1.xpose.msra.mxu0 0.0
    %3897 = vmatprep.subr.mxu0 0.0
    %3898 = vmatpush1.xpose.msra.mxu0 0.0
    %3899 = vmatprep.subr.mxu0 0.0
    %3900 = vmatpush1.xpose.msra.mxu0 0.0
    %3901 = vmatprep.subr.mxu0 0.0
    %3902 = vmatpush1.xpose.msra.mxu0 0.0
    %3903 = vmatprep.subr.mxu0 0.0
    %3904 = vmatpush1.xpose.msra.mxu0 0.0
    %3905 = vmatprep.subr.mxu0 0.0
    %3906 = vmatpush1.xpose.msra.mxu0 0.0
    %3907 = vmatprep.subr.mxu0 0.0
    %3908 = vmatpush1.xpose.msra.mxu0 0.0
    %3909 = vmatprep.subr.mxu0 0.0
    %3910 = vmatpush1.xpose.msra.mxu0 0.0
    %3911 = vmatprep.subr.mxu0 0.0
    %3912 = vmatpush1.xpose.msra.mxu0 0.0
    %3913 = vmatprep.subr.mxu0 0.0
    %3914 = vmatpush1.xpose.msra.mxu0 0.0
    %3915 = vmatprep.subr.mxu0 0.0
    %3916 = vmatpush1.xpose.msra.mxu0 0.0
    %3917 = vmatprep.subr.mxu0 0.0
    %3918 = vmatpush1.xpose.msra.mxu0 0.0
    %3919 = vmatprep.subr.mxu0 0.0
    %3920 = vmatpush1.xpose.msra.mxu0 0.0
    %3921 = vmatprep.subr.mxu0 0.0
    %3922 = vmatpush1.xpose.msra.mxu0 0.0
    %3923 = vmatprep.subr.mxu0 0.0
    %3924 = vmatpush1.xpose.msra.mxu0 %v3893
    %3925 = vmatprep.subr.mxu0 0.0
    %3926 = vmatpush1.xpose.msra.mxu0 %v3890
    %3927 = vmatprep.subr.mxu0 0.0
    %3928 = vmatpush2.xpose.msra.mxu0 0.0
    %3929 = vmatprep.subr.mxu0 0.0
    %3930 = vmatpush2.xpose.msra.mxu0 0.0
    %3931 = vmatprep.subr.mxu0 0.0
    %3932 = vmatpush2.xpose.msra.mxu0 0.0
    %3933 = vmatprep.subr.mxu0 0.0
    %3934 = vmatpush2.xpose.msra.mxu0 0.0
    %3935 = vmatprep.subr.mxu0 0.0
    %3936 = vmatpush2.xpose.msra.mxu0 0.0
    %3937 = vmatprep.subr.mxu0 0.0
    %3938 = vmatpush2.xpose.msra.mxu0 0.0
    %3939 = vmatprep.subr.mxu0 0.0
    %3940 = vmatpush2.xpose.msra.mxu0 0.0
    %3941 = vmatprep.subr.mxu0 0.0
    %3942 = vmatpush2.xpose.msra.mxu0 0.0
    %3943 = vmatprep.subr.mxu0 0.0
    %3944 = vmatpush2.xpose.msra.mxu0 0.0
    %3945 = vmatprep.subr.mxu0 0.0
    %3946 = vmatpush2.xpose.msra.mxu0 0.0
    %3947 = vmatprep.subr.mxu0 0.0
    %3948 = vmatpush2.xpose.msra.mxu0 0.0
    %3949 = vmatprep.subr.mxu0 0.0
    %3950 = vmatpush2.xpose.msra.mxu0 0.0
    %3951 = vmatprep.subr.mxu0 0.0
    %3952 = vmatpush2.xpose.msra.mxu0 0.0
    %3953 = vmatprep.subr.mxu0 0.0
    %3954 = vmatpush2.xpose.msra.mxu0 0.0
    %3955 = vmatprep.subr.mxu0 0.0
    %3956 = vmatpush2.xpose.msra.mxu0 0.0
    %3957 = vmatprep.subr.mxu0 0.0
    %3958 = vmatpush2.xpose.msra.mxu0 0.0
    %3959 = vmatprep.mubr.f32.mxu0 0.0
    %3960 = vmatmul.mubr.f32.gmra.mxu0 %v3884
    %v3961 = vpop.f32.mrf.mxu0
    %v3962 = vadd.f32 0.0, %v3961
    %v3963 = vpop.f32.mrf.mxu0
    %3964 = vmatprep.mubr.f32.mxu0 0.0
    %3965 = vmatmul.mubr.f32.gmra.mxu0 %v3887
    %v3966 = vpop.f32.mrf.mxu0
    %v3967 = vadd.f32 0.0, %v3966
    %v3968 = vpop.f32.mrf.mxu0
    %3969 = vdwg.mxu0
    %v3970 = vmul.f32 %v3962, 0.35355338
    %v3971 = vmul.f32 %v3967, 0.35355338
    %v3972 = vadd.f32 %v3970, %v81
    %v3973 = vadd.f32 %v3971, %v82
    %v3974 = vmul.f32 %v3972, 1.442695
    %v3975 = vpow.pop %v3974
    %v3976 = vmul.f32 %v3973, 1.442695
    %v3977 = vpow.pop %v3976
    %v3978 = vsel %vm448, %v3975, 0.0
    %3979 = vadd.xlane.f32.xlu0 %v3978
    %v3980 = vpop.xlane.xlu0 %3979
    %v3981 = vsel %vm448, %v3977, 0.0
    %3982 = vadd.xlane.f32.xlu0 %v3981
    %v3983 = vpop.xlane.xlu0 %3982
    %v3984 = vrcp.pop %v3980
    %v3985 = vrcp.pop %v3983
    %v3986 = vmul.f32 %v3975, %v3984
    %v3987 = vmul.f32 %v3977, %v3985
    %v3989 = vsel %vm448, %v3986, 0
    %v3992 = vsel %vm448, %v3987, 0
    %3994 = vmatprep.subr.mxu0 0.0
    %3995 = vmatpush1.msra.mxu0 0.0
    %3996 = vmatprep.subr.mxu0 0.0
    %3997 = vmatpush1.msra.mxu0 0.0
    %3998 = vmatprep.subr.mxu0 0.0
    %3999 = vmatpush1.msra.mxu0 0.0
    %4000 = vmatprep.subr.mxu0 0.0
    %4001 = vmatpush1.msra.mxu0 0.0
    %4002 = vmatprep.subr.mxu0 0.0
    %4003 = vmatpush1.msra.mxu0 0.0
    %4004 = vmatprep.subr.mxu0 0.0
    %4005 = vmatpush1.msra.mxu0 0.0
    %4006 = vmatprep.subr.mxu0 0.0
    %4007 = vmatpush1.msra.mxu0 0.0
    %4008 = vmatprep.subr.mxu0 0.0
    %4009 = vmatpush1.msra.mxu0 0.0
    %4010 = vmatprep.subr.mxu0 0.0
    %4011 = vmatpush1.msra.mxu0 0.0
    %4012 = vmatprep.subr.mxu0 0.0
    %4013 = vmatpush1.msra.mxu0 0.0
    %4014 = vmatprep.subr.mxu0 0.0
    %4015 = vmatpush1.msra.mxu0 0.0
    %4016 = vmatprep.subr.mxu0 0.0
    %4017 = vmatpush1.msra.mxu0 0.0
    %4018 = vmatprep.subr.mxu0 0.0
    %4019 = vmatpush1.msra.mxu0 0.0
    %4020 = vmatprep.subr.mxu0 0.0
    %4021 = vmatpush1.msra.mxu0 0.0
    %4022 = vmatprep.subr.mxu0 0.0
    %4023 = vmatpush1.msra.mxu0 %v3880
    %4024 = vmatprep.subr.mxu0 0.0
    %4025 = vmatpush1.msra.mxu0 %v3875
    %4026 = vmatprep.subr.mxu0 0.0
    %4027 = vmatpush2.msra.mxu0 0.0
    %4028 = vmatprep.subr.mxu0 0.0
    %4029 = vmatpush2.msra.mxu0 0.0
    %4030 = vmatprep.subr.mxu0 0.0
    %4031 = vmatpush2.msra.mxu0 0.0
    %4032 = vmatprep.subr.mxu0 0.0
    %4033 = vmatpush2.msra.mxu0 0.0
    %4034 = vmatprep.subr.mxu0 0.0
    %4035 = vmatpush2.msra.mxu0 0.0
    %4036 = vmatprep.subr.mxu0 0.0
    %4037 = vmatpush2.msra.mxu0 0.0
    %4038 = vmatprep.subr.mxu0 0.0
    %4039 = vmatpush2.msra.mxu0 0.0
    %4040 = vmatprep.subr.mxu0 0.0
    %4041 = vmatpush2.msra.mxu0 0.0
    %4042 = vmatprep.subr.mxu0 0.0
    %4043 = vmatpush2.msra.mxu0 0.0
    %4044 = vmatprep.subr.mxu0 0.0
    %4045 = vmatpush2.msra.mxu0 0.0
    %4046 = vmatprep.subr.mxu0 0.0
    %4047 = vmatpush2.msra.mxu0 0.0
    %4048 = vmatprep.subr.mxu0 0.0
    %4049 = vmatpush2.msra.mxu0 0.0
    %4050 = vmatprep.subr.mxu0 0.0
    %4051 = vmatpush2.msra.mxu0 0.0
    %4052 = vmatprep.subr.mxu0 0.0
    %4053 = vmatpush2.msra.mxu0 0.0
    %4054 = vmatprep.subr.mxu0 0.0
    %4055 = vmatpush2.msra.mxu0 0.0
    %4056 = vmatprep.subr.mxu0 0.0
    %4057 = vmatpush2.msra.mxu0 0.0
    %4058 = vmatprep.mubr.f32.mxu0 0.0
    %4059 = vmatmul.mubr.f32.gmra.mxu0 %v3989
    %v4060 = vpop.f32.mrf.mxu0
    %v4061 = vadd.f32 0.0, %v4060
    %v4062 = vpop.f32.mrf.mxu0
    %4063 = vmatprep.mubr.f32.mxu0 0.0
    %4064 = vmatmul.mubr.f32.gmra.mxu0 %v3992
    %v4065 = vpop.f32.mrf.mxu0
    %v4066 = vadd.f32 0.0, %v4065
    %v4067 = vpop.f32.mrf.mxu0
    %4068 = vdwg.mxu0
    %s4069 = scalar_lea.vmem %s10, 48
    %v4070 = vld [vmem:[%s4069] sm:$0xff]
    %v4072 = vsel %vm352, %v4061, 0
    %v4075 = vsel %vm352, %v4066, 0
    %4077 = vmatprep.subr.mxu0 0.0
    %4078 = vmatpush1.msra.mxu0 0.0
    %4079 = vmatprep.subr.mxu0 0.0
    %4080 = vmatpush1.msra.mxu0 0.0
    %4081 = vmatprep.subr.mxu0 0.0
    %4082 = vmatpush1.msra.mxu0 0.0
    %4083 = vmatprep.subr.mxu0 0.0
    %4084 = vmatpush1.msra.mxu0 0.0
    %4085 = vmatprep.subr.mxu0 0.0
    %4086 = vmatpush1.msra.mxu0 0.0
    %4087 = vmatprep.subr.mxu0 0.0
    %4088 = vmatpush1.msra.mxu0 0.0
    %4089 = vmatprep.subr.mxu0 0.0
    %4090 = vmatpush1.msra.mxu0 0.0
    %4091 = vmatprep.subr.mxu0 0.0
    %4092 = vmatpush1.msra.mxu0 0.0
    %4093 = vmatprep.subr.mxu0 0.0
    %4094 = vmatpush1.msra.mxu0 0.0
    %4095 = vmatprep.subr.mxu0 0.0
    %4096 = vmatpush1.msra.mxu0 0.0
    %4097 = vmatprep.subr.mxu0 0.0
    %4098 = vmatpush1.msra.mxu0 0.0
    %4099 = vmatprep.subr.mxu0 0.0
    %4100 = vmatpush1.msra.mxu0 0.0
    %4101 = vmatprep.subr.mxu0 0.0
    %4102 = vmatpush1.msra.mxu0 0.0
    %4103 = vmatprep.subr.mxu0 0.0
    %4104 = vmatpush1.msra.mxu0 0.0
    %4105 = vmatprep.subr.mxu0 0.0
    %4106 = vmatpush1.msra.mxu0 0.0
    %4107 = vmatprep.subr.mxu0 0.0
    %4108 = vmatpush1.msra.mxu0 %v4070
    %4109 = vmatprep.subr.mxu0 0.0
    %4110 = vmatpush2.msra.mxu0 0.0
    %4111 = vmatprep.subr.mxu0 0.0
    %4112 = vmatpush2.msra.mxu0 0.0
    %4113 = vmatprep.subr.mxu0 0.0
    %4114 = vmatpush2.msra.mxu0 0.0
    %4115 = vmatprep.subr.mxu0 0.0
    %4116 = vmatpush2.msra.mxu0 0.0
    %4117 = vmatprep.subr.mxu0 0.0
    %4118 = vmatpush2.msra.mxu0 0.0
    %4119 = vmatprep.subr.mxu0 0.0
    %4120 = vmatpush2.msra.mxu0 0.0
    %4121 = vmatprep.subr.mxu0 0.0
    %4122 = vmatpush2.msra.mxu0 0.0
    %4123 = vmatprep.subr.mxu0 0.0
    %4124 = vmatpush2.msra.mxu0 0.0
    %4125 = vmatprep.subr.mxu0 0.0
    %4126 = vmatpush2.msra.mxu0 0.0
    %4127 = vmatprep.subr.mxu0 0.0
    %4128 = vmatpush2.msra.mxu0 0.0
    %4129 = vmatprep.subr.mxu0 0.0
    %4130 = vmatpush2.msra.mxu0 0.0
    %4131 = vmatprep.subr.mxu0 0.0
    %4132 = vmatpush2.msra.mxu0 0.0
    %4133 = vmatprep.subr.mxu0 0.0
    %4134 = vmatpush2.msra.mxu0 0.0
    %4135 = vmatprep.subr.mxu0 0.0
    %4136 = vmatpush2.msra.mxu0 0.0
    %4137 = vmatprep.subr.mxu0 0.0
    %4138 = vmatpush2.msra.mxu0 0.0
    %4139 = vmatprep.subr.mxu0 0.0
    %4140 = vmatpush2.msra.mxu0 0.0
    %4141 = vmatprep.mubr.f32.mxu0 0.0
    %4142 = vmatmul.mubr.f32.gmra.mxu0 %v4072
    %v4143 = vpop.f32.mrf.mxu0
    %v4144 = vadd.f32 0.0, %v4143
    %v4145 = vpop.f32.mrf.mxu0
    %4146 = vmatprep.mubr.f32.mxu0 0.0
    %4147 = vmatmul.mubr.f32.gmra.mxu0 %v4075
    %v4148 = vpop.f32.mrf.mxu0
    %v4149 = vadd.f32 0.0, %v4148
    %v4150 = vpop.f32.mrf.mxu0
    %4151 = vdwg.mxu0
    %v4152 = vadd.f32 %v3617, %v4144
    %v4153 = vadd.f32 %v3618, %v4149
    %s4154 = scalar_lea.vmem %s4, 224
    %v4155 = vld [vmem:[%s4154] sm:$0xff]
    %v4156 = vld [vmem:[%s4154 + $0x8] sm:$0xff]
    %v4157 = vld [vmem:[%s4154 + $0x10] sm:$0xff]
    %v4158 = vld [vmem:[%s4154 + $0x18] sm:$0xff]
    %s4159 = scalar_lea.vmem %s5, 7
    %v4160 = vld [vmem:[%s4159] sm:$0x1]
    %v4162 = vlaneseq
    %v4163 = vshrl.u32 %v4162, 7
    %v4164 = vsub.s32 0, %v4163
    %v4165 = vrot.slane %v4160, %v4164
    %4167 = vmatprep.subr.mxu0 0.0
    %4168 = vmatpush1.msra.mxu0 0.0
    %4169 = vmatprep.subr.mxu0 0.0
    %4170 = vmatpush1.msra.mxu0 0.0
    %4171 = vmatprep.subr.mxu0 0.0
    %4172 = vmatpush1.msra.mxu0 0.0
    %4173 = vmatprep.subr.mxu0 0.0
    %4174 = vmatpush1.msra.mxu0 0.0
    %4175 = vmatprep.subr.mxu0 0.0
    %4176 = vmatpush1.msra.mxu0 0.0
    %4177 = vmatprep.subr.mxu0 0.0
    %4178 = vmatpush1.msra.mxu0 0.0
    %4179 = vmatprep.subr.mxu0 0.0
    %4180 = vmatpush1.msra.mxu0 0.0
    %4181 = vmatprep.subr.mxu0 0.0
    %4182 = vmatpush1.msra.mxu0 0.0
    %4183 = vmatprep.subr.mxu0 0.0
    %4184 = vmatpush1.msra.mxu0 0.0
    %4185 = vmatprep.subr.mxu0 0.0
    %4186 = vmatpush1.msra.mxu0 0.0
    %4187 = vmatprep.subr.mxu0 0.0
    %4188 = vmatpush1.msra.mxu0 0.0
    %4189 = vmatprep.subr.mxu0 0.0
    %4190 = vmatpush1.msra.mxu0 0.0
    %4191 = vmatprep.subr.mxu0 0.0
    %4192 = vmatpush1.msra.mxu0 %v4158
    %4193 = vmatprep.subr.mxu0 0.0
    %4194 = vmatpush1.msra.mxu0 %v4157
    %4195 = vmatprep.subr.mxu0 0.0
    %4196 = vmatpush1.msra.mxu0 %v4156
    %4197 = vmatprep.subr.mxu0 0.0
    %4198 = vmatpush1.msra.mxu0 %v4155
    %4199 = vmatprep.subr.mxu0 0.0
    %4200 = vmatpush2.msra.mxu0 0.0
    %4201 = vmatprep.subr.mxu0 0.0
    %4202 = vmatpush2.msra.mxu0 0.0
    %4203 = vmatprep.subr.mxu0 0.0
    %4204 = vmatpush2.msra.mxu0 0.0
    %4205 = vmatprep.subr.mxu0 0.0
    %4206 = vmatpush2.msra.mxu0 0.0
    %4207 = vmatprep.subr.mxu0 0.0
    %4208 = vmatpush2.msra.mxu0 0.0
    %4209 = vmatprep.subr.mxu0 0.0
    %4210 = vmatpush2.msra.mxu0 0.0
    %4211 = vmatprep.subr.mxu0 0.0
    %4212 = vmatpush2.msra.mxu0 0.0
    %4213 = vmatprep.subr.mxu0 0.0
    %4214 = vmatpush2.msra.mxu0 0.0
    %4215 = vmatprep.subr.mxu0 0.0
    %4216 = vmatpush2.msra.mxu0 0.0
    %4217 = vmatprep.subr.mxu0 0.0
    %4218 = vmatpush2.msra.mxu0 0.0
    %4219 = vmatprep.subr.mxu0 0.0
    %4220 = vmatpush2.msra.mxu0 0.0
    %4221 = vmatprep.subr.mxu0 0.0
    %4222 = vmatpush2.msra.mxu0 0.0
    %4223 = vmatprep.subr.mxu0 0.0
    %4224 = vmatpush2.msra.mxu0 0.0
    %4225 = vmatprep.subr.mxu0 0.0
    %4226 = vmatpush2.msra.mxu0 0.0
    %4227 = vmatprep.subr.mxu0 0.0
    %4228 = vmatpush2.msra.mxu0 0.0
    %4229 = vmatprep.subr.mxu0 0.0
    %4230 = vmatpush2.msra.mxu0 0.0
    %4231 = vmatprep.mubr.f32.mxu0 0.0
    %4232 = vmatmul.mubr.f32.gmra.mxu0 %v2551
    %v4233 = vpop.f32.mrf.mxu0
    %v4234 = vadd.f32 %v4165, %v4233
    %v4235 = vpop.f32.mrf.mxu0
    %4236 = vmatprep.mubr.f32.mxu0 0.0
    %4237 = vmatmul.mubr.f32.gmra.mxu0 %v2554
    %v4238 = vpop.f32.mrf.mxu0
    %v4239 = vadd.f32 %v4165, %v4238
    %v4240 = vpop.f32.mrf.mxu0
    %4241 = vdwg.mxu0
    %s4242 = scalar_lea.vmem %s6, 224
    %v4243 = vld [vmem:[%s4242] sm:$0xff]
    %v4244 = vld [vmem:[%s4242 + $0x8] sm:$0xff]
    %v4245 = vld [vmem:[%s4242 + $0x10] sm:$0xff]
    %v4246 = vld [vmem:[%s4242 + $0x18] sm:$0xff]
    %s4247 = scalar_lea.vmem %s7, 7
    %v4248 = vld [vmem:[%s4247] sm:$0x1]
    %v4250 = vlaneseq
    %v4251 = vshrl.u32 %v4250, 7
    %v4252 = vsub.s32 0, %v4251
    %v4253 = vrot.slane %v4248, %v4252
    %4255 = vmatprep.subr.mxu0 0.0
    %4256 = vmatpush1.msra.mxu0 0.0
    %4257 = vmatprep.subr.mxu0 0.0
    %4258 = vmatpush1.msra.mxu0 0.0
    %4259 = vmatprep.subr.mxu0 0.0
    %4260 = vmatpush1.msra.mxu0 0.0
    %4261 = vmatprep.subr.mxu0 0.0
    %4262 = vmatpush1.msra.mxu0 0.0
    %4263 = vmatprep.subr.mxu0 0.0
    %4264 = vmatpush1.msra.mxu0 0.0
    %4265 = vmatprep.subr.mxu0 0.0
    %4266 = vmatpush1.msra.mxu0 0.0
    %4267 = vmatprep.subr.mxu0 0.0
    %4268 = vmatpush1.msra.mxu0 0.0
    %4269 = vmatprep.subr.mxu0 0.0
    %4270 = vmatpush1.msra.mxu0 0.0
    %4271 = vmatprep.subr.mxu0 0.0
    %4272 = vmatpush1.msra.mxu0 0.0
    %4273 = vmatprep.subr.mxu0 0.0
    %4274 = vmatpush1.msra.mxu0 0.0
    %4275 = vmatprep.subr.mxu0 0.0
    %4276 = vmatpush1.msra.mxu0 0.0
    %4277 = vmatprep.subr.mxu0 0.0
    %4278 = vmatpush1.msra.mxu0 0.0
    %4279 = vmatprep.subr.mxu0 0.0
    %4280 = vmatpush1.msra.mxu0 %v4246
    %4281 = vmatprep.subr.mxu0 0.0
    %4282 = vmatpush1.msra.mxu0 %v4245
    %4283 = vmatprep.subr.mxu0 0.0
    %4284 = vmatpush1.msra.mxu0 %v4244
    %4285 = vmatprep.subr.mxu0 0.0
    %4286 = vmatpush1.msra.mxu0 %v4243
    %4287 = vmatprep.subr.mxu0 0.0
    %4288 = vmatpush2.msra.mxu0 0.0
    %4289 = vmatprep.subr.mxu0 0.0
    %4290 = vmatpush2.msra.mxu0 0.0
    %4291 = vmatprep.subr.mxu0 0.0
    %4292 = vmatpush2.msra.mxu0 0.0
    %4293 = vmatprep.subr.mxu0 0.0
    %4294 = vmatpush2.msra.mxu0 0.0
    %4295 = vmatprep.subr.mxu0 0.0
    %4296 = vmatpush2.msra.mxu0 0.0
    %4297 = vmatprep.subr.mxu0 0.0
    %4298 = vmatpush2.msra.mxu0 0.0
    %4299 = vmatprep.subr.mxu0 0.0
    %4300 = vmatpush2.msra.mxu0 0.0
    %4301 = vmatprep.subr.mxu0 0.0
    %4302 = vmatpush2.msra.mxu0 0.0
    %4303 = vmatprep.subr.mxu0 0.0
    %4304 = vmatpush2.msra.mxu0 0.0
    %4305 = vmatprep.subr.mxu0 0.0
    %4306 = vmatpush2.msra.mxu0 0.0
    %4307 = vmatprep.subr.mxu0 0.0
    %4308 = vmatpush2.msra.mxu0 0.0
    %4309 = vmatprep.subr.mxu0 0.0
    %4310 = vmatpush2.msra.mxu0 0.0
    %4311 = vmatprep.subr.mxu0 0.0
    %4312 = vmatpush2.msra.mxu0 0.0
    %4313 = vmatprep.subr.mxu0 0.0
    %4314 = vmatpush2.msra.mxu0 0.0
    %4315 = vmatprep.subr.mxu0 0.0
    %4316 = vmatpush2.msra.mxu0 0.0
    %4317 = vmatprep.subr.mxu0 0.0
    %4318 = vmatpush2.msra.mxu0 0.0
    %4319 = vmatprep.mubr.f32.mxu0 0.0
    %4320 = vmatmul.mubr.f32.gmra.mxu0 %v2551
    %v4321 = vpop.f32.mrf.mxu0
    %v4322 = vadd.f32 %v4253, %v4321
    %v4323 = vpop.f32.mrf.mxu0
    %4324 = vmatprep.mubr.f32.mxu0 0.0
    %4325 = vmatmul.mubr.f32.gmra.mxu0 %v2554
    %v4326 = vpop.f32.mrf.mxu0
    %v4327 = vadd.f32 %v4253, %v4326
    %v4328 = vpop.f32.mrf.mxu0
    %4329 = vdwg.mxu0
    %s4330 = scalar_lea.vmem %s8, 224
    %v4331 = vld [vmem:[%s4330] sm:$0xff]
    %v4332 = vld [vmem:[%s4330 + $0x8] sm:$0xff]
    %v4333 = vld [vmem:[%s4330 + $0x10] sm:$0xff]
    %v4334 = vld [vmem:[%s4330 + $0x18] sm:$0xff]
    %s4335 = scalar_lea.vmem %s9, 7
    %v4336 = vld [vmem:[%s4335] sm:$0x1]
    %v4338 = vlaneseq
    %v4339 = vshrl.u32 %v4338, 7
    %v4340 = vsub.s32 0, %v4339
    %v4341 = vrot.slane %v4336, %v4340
    %4343 = vmatprep.subr.mxu0 0.0
    %4344 = vmatpush1.msra.mxu0 0.0
    %4345 = vmatprep.subr.mxu0 0.0
    %4346 = vmatpush1.msra.mxu0 0.0
    %4347 = vmatprep.subr.mxu0 0.0
    %4348 = vmatpush1.msra.mxu0 0.0
    %4349 = vmatprep.subr.mxu0 0.0
    %4350 = vmatpush1.msra.mxu0 0.0
    %4351 = vmatprep.subr.mxu0 0.0
    %4352 = vmatpush1.msra.mxu0 0.0
    %4353 = vmatprep.subr.mxu0 0.0
    %4354 = vmatpush1.msra.mxu0 0.0
    %4355 = vmatprep.subr.mxu0 0.0
    %4356 = vmatpush1.msra.mxu0 0.0
    %4357 = vmatprep.subr.mxu0 0.0
    %4358 = vmatpush1.msra.mxu0 0.0
    %4359 = vmatprep.subr.mxu0 0.0
    %4360 = vmatpush1.msra.mxu0 0.0
    %4361 = vmatprep.subr.mxu0 0.0
    %4362 = vmatpush1.msra.mxu0 0.0
    %4363 = vmatprep.subr.mxu0 0.0
    %4364 = vmatpush1.msra.mxu0 0.0
    %4365 = vmatprep.subr.mxu0 0.0
    %4366 = vmatpush1.msra.mxu0 0.0
    %4367 = vmatprep.subr.mxu0 0.0
    %4368 = vmatpush1.msra.mxu0 %v4334
    %4369 = vmatprep.subr.mxu0 0.0
    %4370 = vmatpush1.msra.mxu0 %v4333
    %4371 = vmatprep.subr.mxu0 0.0
    %4372 = vmatpush1.msra.mxu0 %v4332
    %4373 = vmatprep.subr.mxu0 0.0
    %4374 = vmatpush1.msra.mxu0 %v4331
    %4375 = vmatprep.subr.mxu0 0.0
    %4376 = vmatpush2.msra.mxu0 0.0
    %4377 = vmatprep.subr.mxu0 0.0
    %4378 = vmatpush2.msra.mxu0 0.0
    %4379 = vmatprep.subr.mxu0 0.0
    %4380 = vmatpush2.msra.mxu0 0.0
    %4381 = vmatprep.subr.mxu0 0.0
    %4382 = vmatpush2.msra.mxu0 0.0
    %4383 = vmatprep.subr.mxu0 0.0
    %4384 = vmatpush2.msra.mxu0 0.0
    %4385 = vmatprep.subr.mxu0 0.0
    %4386 = vmatpush2.msra.mxu0 0.0
    %4387 = vmatprep.subr.mxu0 0.0
    %4388 = vmatpush2.msra.mxu0 0.0
    %4389 = vmatprep.subr.mxu0 0.0
    %4390 = vmatpush2.msra.mxu0 0.0
    %4391 = vmatprep.subr.mxu0 0.0
    %4392 = vmatpush2.msra.mxu0 0.0
    %4393 = vmatprep.subr.mxu0 0.0
    %4394 = vmatpush2.msra.mxu0 0.0
    %4395 = vmatprep.subr.mxu0 0.0
    %4396 = vmatpush2.msra.mxu0 0.0
    %4397 = vmatprep.subr.mxu0 0.0
    %4398 = vmatpush2.msra.mxu0 0.0
    %4399 = vmatprep.subr.mxu0 0.0
    %4400 = vmatpush2.msra.mxu0 0.0
    %4401 = vmatprep.subr.mxu0 0.0
    %4402 = vmatpush2.msra.mxu0 0.0
    %4403 = vmatprep.subr.mxu0 0.0
    %4404 = vmatpush2.msra.mxu0 0.0
    %4405 = vmatprep.subr.mxu0 0.0
    %4406 = vmatpush2.msra.mxu0 0.0
    %4407 = vmatprep.mubr.f32.mxu0 0.0
    %4408 = vmatmul.mubr.f32.gmra.mxu0 %v2551
    %v4409 = vpop.f32.mrf.mxu0
    %v4410 = vadd.f32 %v4341, %v4409
    %v4411 = vpop.f32.mrf.mxu0
    %4412 = vmatprep.mubr.f32.mxu0 0.0
    %4413 = vmatmul.mubr.f32.gmra.mxu0 %v2554
    %v4414 = vpop.f32.mrf.mxu0
    %v4415 = vadd.f32 %v4341, %v4414
    %v4416 = vpop.f32.mrf.mxu0
    %4417 = vdwg.mxu0
    %v4419 = vsel %vm352, %v4234, 0
    %v4422 = vsel %vm352, %v4239, 0
    %v4425 = vsel %vm352, %v4322, 0
    %v4428 = vsel %vm352, %v4327, 0
    %4430 = vmatprep.subr.mxu0 0.0
    %4431 = vmatpush1.xpose.msra.mxu0 0.0
    %4432 = vmatprep.subr.mxu0 0.0
    %4433 = vmatpush1.xpose.msra.mxu0 0.0
    %4434 = vmatprep.subr.mxu0 0.0
    %4435 = vmatpush1.xpose.msra.mxu0 0.0
    %4436 = vmatprep.subr.mxu0 0.0
    %4437 = vmatpush1.xpose.msra.mxu0 0.0
    %4438 = vmatprep.subr.mxu0 0.0
    %4439 = vmatpush1.xpose.msra.mxu0 0.0
    %4440 = vmatprep.subr.mxu0 0.0
    %4441 = vmatpush1.xpose.msra.mxu0 0.0
    %4442 = vmatprep.subr.mxu0 0.0
    %4443 = vmatpush1.xpose.msra.mxu0 0.0
    %4444 = vmatprep.subr.mxu0 0.0
    %4445 = vmatpush1.xpose.msra.mxu0 0.0
    %4446 = vmatprep.subr.mxu0 0.0
    %4447 = vmatpush1.xpose.msra.mxu0 0.0
    %4448 = vmatprep.subr.mxu0 0.0
    %4449 = vmatpush1.xpose.msra.mxu0 0.0
    %4450 = vmatprep.subr.mxu0 0.0
    %4451 = vmatpush1.xpose.msra.mxu0 0.0
    %4452 = vmatprep.subr.mxu0 0.0
    %4453 = vmatpush1.xpose.msra.mxu0 0.0
    %4454 = vmatprep.subr.mxu0 0.0
    %4455 = vmatpush1.xpose.msra.mxu0 0.0
    %4456 = vmatprep.subr.mxu0 0.0
    %4457 = vmatpush1.xpose.msra.mxu0 0.0
    %4458 = vmatprep.subr.mxu0 0.0
    %4459 = vmatpush1.xpose.msra.mxu0 %v4428
    %4460 = vmatprep.subr.mxu0 0.0
    %4461 = vmatpush1.xpose.msra.mxu0 %v4425
    %4462 = vmatprep.subr.mxu0 0.0
    %4463 = vmatpush2.xpose.msra.mxu0 0.0
    %4464 = vmatprep.subr.mxu0 0.0
    %4465 = vmatpush2.xpose.msra.mxu0 0.0
    %4466 = vmatprep.subr.mxu0 0.0
    %4467 = vmatpush2.xpose.msra.mxu0 0.0
    %4468 = vmatprep.subr.mxu0 0.0
    %4469 = vmatpush2.xpose.msra.mxu0 0.0
    %4470 = vmatprep.subr.mxu0 0.0
    %4471 = vmatpush2.xpose.msra.mxu0 0.0
    %4472 = vmatprep.subr.mxu0 0.0
    %4473 = vmatpush2.xpose.msra.mxu0 0.0
    %4474 = vmatprep.subr.mxu0 0.0
    %4475 = vmatpush2.xpose.msra.mxu0 0.0
    %4476 = vmatprep.subr.mxu0 0.0
    %4477 = vmatpush2.xpose.msra.mxu0 0.0
    %4478 = vmatprep.subr.mxu0 0.0
    %4479 = vmatpush2.xpose.msra.mxu0 0.0
    %4480 = vmatprep.subr.mxu0 0.0
    %4481 = vmatpush2.xpose.msra.mxu0 0.0
    %4482 = vmatprep.subr.mxu0 0.0
    %4483 = vmatpush2.xpose.msra.mxu0 0.0
    %4484 = vmatprep.subr.mxu0 0.0
    %4485 = vmatpush2.xpose.msra.mxu0 0.0
    %4486 = vmatprep.subr.mxu0 0.0
    %4487 = vmatpush2.xpose.msra.mxu0 0.0
    %4488 = vmatprep.subr.mxu0 0.0
    %4489 = vmatpush2.xpose.msra.mxu0 0.0
    %4490 = vmatprep.subr.mxu0 0.0
    %4491 = vmatpush2.xpose.msra.mxu0 0.0
    %4492 = vmatprep.subr.mxu0 0.0
    %4493 = vmatpush2.xpose.msra.mxu0 0.0
    %4494 = vmatprep.mubr.f32.mxu0 0.0
    %4495 = vmatmul.mubr.f32.gmra.mxu0 %v4419
    %v4496 = vpop.f32.mrf.mxu0
    %v4497 = vadd.f32 0.0, %v4496
    %v4498 = vpop.f32.mrf.mxu0
    %4499 = vmatprep.mubr.f32.mxu0 0.0
    %4500 = vmatmul.mubr.f32.gmra.mxu0 %v4422
    %v4501 = vpop.f32.mrf.mxu0
    %v4502 = vadd.f32 0.0, %v4501
    %v4503 = vpop.f32.mrf.mxu0
    %4504 = vdwg.mxu0
    %v4505 = vmul.f32 %v4497, 0.35355338
    %v4506 = vmul.f32 %v4502, 0.35355338
    %v4507 = vadd.f32 %v4505, %v81
    %v4508 = vadd.f32 %v4506, %v82
    %v4509 = vmul.f32 %v4507, 1.442695
    %v4510 = vpow.pop %v4509
    %v4511 = vmul.f32 %v4508, 1.442695
    %v4512 = vpow.pop %v4511
    %v4513 = vsel %vm448, %v4510, 0.0
    %4514 = vadd.xlane.f32.xlu0 %v4513
    %v4515 = vpop.xlane.xlu0 %4514
    %v4516 = vsel %vm448, %v4512, 0.0
    %4517 = vadd.xlane.f32.xlu0 %v4516
    %v4518 = vpop.xlane.xlu0 %4517
    %v4519 = vrcp.pop %v4515
    %v4520 = vrcp.pop %v4518
    %v4521 = vmul.f32 %v4510, %v4519
    %v4522 = vmul.f32 %v4512, %v4520
    %v4524 = vsel %vm448, %v4521, 0
    %v4527 = vsel %vm448, %v4522, 0
    %4529 = vmatprep.subr.mxu0 0.0
    %4530 = vmatpush1.msra.mxu0 0.0
    %4531 = vmatprep.subr.mxu0 0.0
    %4532 = vmatpush1.msra.mxu0 0.0
    %4533 = vmatprep.subr.mxu0 0.0
    %4534 = vmatpush1.msra.mxu0 0.0
    %4535 = vmatprep.subr.mxu0 0.0
    %4536 = vmatpush1.msra.mxu0 0.0
    %4537 = vmatprep.subr.mxu0 0.0
    %4538 = vmatpush1.msra.mxu0 0.0
    %4539 = vmatprep.subr.mxu0 0.0
    %4540 = vmatpush1.msra.mxu0 0.0
    %4541 = vmatprep.subr.mxu0 0.0
    %4542 = vmatpush1.msra.mxu0 0.0
    %4543 = vmatprep.subr.mxu0 0.0
    %4544 = vmatpush1.msra.mxu0 0.0
    %4545 = vmatprep.subr.mxu0 0.0
    %4546 = vmatpush1.msra.mxu0 0.0
    %4547 = vmatprep.subr.mxu0 0.0
    %4548 = vmatpush1.msra.mxu0 0.0
    %4549 = vmatprep.subr.mxu0 0.0
    %4550 = vmatpush1.msra.mxu0 0.0
    %4551 = vmatprep.subr.mxu0 0.0
    %4552 = vmatpush1.msra.mxu0 0.0
    %4553 = vmatprep.subr.mxu0 0.0
    %4554 = vmatpush1.msra.mxu0 0.0
    %4555 = vmatprep.subr.mxu0 0.0
    %4556 = vmatpush1.msra.mxu0 0.0
    %4557 = vmatprep.subr.mxu0 0.0
    %4558 = vmatpush1.msra.mxu0 %v4415
    %4559 = vmatprep.subr.mxu0 0.0
    %4560 = vmatpush1.msra.mxu0 %v4410
    %4561 = vmatprep.subr.mxu0 0.0
    %4562 = vmatpush2.msra.mxu0 0.0
    %4563 = vmatprep.subr.mxu0 0.0
    %4564 = vmatpush2.msra.mxu0 0.0
    %4565 = vmatprep.subr.mxu0 0.0
    %4566 = vmatpush2.msra.mxu0 0.0
    %4567 = vmatprep.subr.mxu0 0.0
    %4568 = vmatpush2.msra.mxu0 0.0
    %4569 = vmatprep.subr.mxu0 0.0
    %4570 = vmatpush2.msra.mxu0 0.0
    %4571 = vmatprep.subr.mxu0 0.0
    %4572 = vmatpush2.msra.mxu0 0.0
    %4573 = vmatprep.subr.mxu0 0.0
    %4574 = vmatpush2.msra.mxu0 0.0
    %4575 = vmatprep.subr.mxu0 0.0
    %4576 = vmatpush2.msra.mxu0 0.0
    %4577 = vmatprep.subr.mxu0 0.0
    %4578 = vmatpush2.msra.mxu0 0.0
    %4579 = vmatprep.subr.mxu0 0.0
    %4580 = vmatpush2.msra.mxu0 0.0
    %4581 = vmatprep.subr.mxu0 0.0
    %4582 = vmatpush2.msra.mxu0 0.0
    %4583 = vmatprep.subr.mxu0 0.0
    %4584 = vmatpush2.msra.mxu0 0.0
    %4585 = vmatprep.subr.mxu0 0.0
    %4586 = vmatpush2.msra.mxu0 0.0
    %4587 = vmatprep.subr.mxu0 0.0
    %4588 = vmatpush2.msra.mxu0 0.0
    %4589 = vmatprep.subr.mxu0 0.0
    %4590 = vmatpush2.msra.mxu0 0.0
    %4591 = vmatprep.subr.mxu0 0.0
    %4592 = vmatpush2.msra.mxu0 0.0
    %4593 = vmatprep.mubr.f32.mxu0 0.0
    %4594 = vmatmul.mubr.f32.gmra.mxu0 %v4524
    %v4595 = vpop.f32.mrf.mxu0
    %v4596 = vadd.f32 0.0, %v4595
    %v4597 = vpop.f32.mrf.mxu0
    %4598 = vmatprep.mubr.f32.mxu0 0.0
    %4599 = vmatmul.mubr.f32.gmra.mxu0 %v4527
    %v4600 = vpop.f32.mrf.mxu0
    %v4601 = vadd.f32 0.0, %v4600
    %v4602 = vpop.f32.mrf.mxu0
    %4603 = vdwg.mxu0
    %s4604 = scalar_lea.vmem %s10, 56
    %v4605 = vld [vmem:[%s4604] sm:$0xff]
    %v4607 = vsel %vm352, %v4596, 0
    %v4610 = vsel %vm352, %v4601, 0
    %4612 = vmatprep.subr.mxu0 0.0
    %4613 = vmatpush1.msra.mxu0 0.0
    %4614 = vmatprep.subr.mxu0 0.0
    %4615 = vmatpush1.msra.mxu0 0.0
    %4616 = vmatprep.subr.mxu0 0.0
    %4617 = vmatpush1.msra.mxu0 0.0
    %4618 = vmatprep.subr.mxu0 0.0
    %4619 = vmatpush1.msra.mxu0 0.0
    %4620 = vmatprep.subr.mxu0 0.0
    %4621 = vmatpush1.msra.mxu0 0.0
    %4622 = vmatprep.subr.mxu0 0.0
    %4623 = vmatpush1.msra.mxu0 0.0
    %4624 = vmatprep.subr.mxu0 0.0
    %4625 = vmatpush1.msra.mxu0 0.0
    %4626 = vmatprep.subr.mxu0 0.0
    %4627 = vmatpush1.msra.mxu0 0.0
    %4628 = vmatprep.subr.mxu0 0.0
    %4629 = vmatpush1.msra.mxu0 0.0
    %4630 = vmatprep.subr.mxu0 0.0
    %4631 = vmatpush1.msra.mxu0 0.0
    %4632 = vmatprep.subr.mxu0 0.0
    %4633 = vmatpush1.msra.mxu0 0.0
    %4634 = vmatprep.subr.mxu0 0.0
    %4635 = vmatpush1.msra.mxu0 0.0
    %4636 = vmatprep.subr.mxu0 0.0
    %4637 = vmatpush1.msra.mxu0 0.0
    %4638 = vmatprep.subr.mxu0 0.0
    %4639 = vmatpush1.msra.mxu0 0.0
    %4640 = vmatprep.subr.mxu0 0.0
    %4641 = vmatpush1.msra.mxu0 0.0
    %4642 = vmatprep.subr.mxu0 0.0
    %4643 = vmatpush1.msra.mxu0 %v4605
    %4644 = vmatprep.subr.mxu0 0.0
    %4645 = vmatpush2.msra.mxu0 0.0
    %4646 = vmatprep.subr.mxu0 0.0
    %4647 = vmatpush2.msra.mxu0 0.0
    %4648 = vmatprep.subr.mxu0 0.0
    %4649 = vmatpush2.msra.mxu0 0.0
    %4650 = vmatprep.subr.mxu0 0.0
    %4651 = vmatpush2.msra.mxu0 0.0
    %4652 = vmatprep.subr.mxu0 0.0
    %4653 = vmatpush2.msra.mxu0 0.0
    %4654 = vmatprep.subr.mxu0 0.0
    %4655 = vmatpush2.msra.mxu0 0.0
    %4656 = vmatprep.subr.mxu0 0.0
    %4657 = vmatpush2.msra.mxu0 0.0
    %4658 = vmatprep.subr.mxu0 0.0
    %4659 = vmatpush2.msra.mxu0 0.0
    %4660 = vmatprep.subr.mxu0 0.0
    %4661 = vmatpush2.msra.mxu0 0.0
    %4662 = vmatprep.subr.mxu0 0.0
    %4663 = vmatpush2.msra.mxu0 0.0
    %4664 = vmatprep.subr.mxu0 0.0
    %4665 = vmatpush2.msra.mxu0 0.0
    %4666 = vmatprep.subr.mxu0 0.0
    %4667 = vmatpush2.msra.mxu0 0.0
    %4668 = vmatprep.subr.mxu0 0.0
    %4669 = vmatpush2.msra.mxu0 0.0
    %4670 = vmatprep.subr.mxu0 0.0
    %4671 = vmatpush2.msra.mxu0 0.0
    %4672 = vmatprep.subr.mxu0 0.0
    %4673 = vmatpush2.msra.mxu0 0.0
    %4674 = vmatprep.subr.mxu0 0.0
    %4675 = vmatpush2.msra.mxu0 0.0
    %4676 = vmatprep.mubr.f32.mxu0 0.0
    %4677 = vmatmul.mubr.f32.gmra.mxu0 %v4607
    %v4678 = vpop.f32.mrf.mxu0
    %v4679 = vadd.f32 0.0, %v4678
    %v4680 = vpop.f32.mrf.mxu0
    %4681 = vmatprep.mubr.f32.mxu0 0.0
    %4682 = vmatmul.mubr.f32.gmra.mxu0 %v4610
    %v4683 = vpop.f32.mrf.mxu0
    %v4684 = vadd.f32 0.0, %v4683
    %v4685 = vpop.f32.mrf.mxu0
    %4686 = vdwg.mxu0
    %v4687 = vadd.f32 %v4152, %v4679
    %v4688 = vadd.f32 %v4153, %v4684
    %v4689 = vadd.f32 %v4687, %v2533
    %v4690 = vadd.f32 %v4688, %v2534
    %s4691 = scalar_lea.vmem %s12, 1
    %v4692 = vld [vmem:[%s4691] sm:$0x1]
    %s4693 = scalar_lea.vmem %s13, 1
    %v4694 = vld [vmem:[%s4693] sm:$0x1]
    %v4695 = vsel %vm98, %v4689, 0.0
    %4696 = vadd.xlane.f32.xlu0 %v4695
    %v4697 = vpop.xlane.xlu0 %4696
    %v4698 = vsel %vm98, %v4690, 0.0
    %4699 = vadd.xlane.f32.xlu0 %v4698
    %v4700 = vpop.xlane.xlu0 %4699
    %v4701 = vmul.f32 %v4697, %v2245
    %v4702 = vmul.f32 %v4700, %v2245
    %v4703 = vsub.f32 %v4689, %v4701
    %v4704 = vsub.f32 %v4690, %v4702
    %v4705 = vmul.f32 %v4703, %v4703
    %v4706 = vmul.f32 %v4704, %v4704
    %v4707 = vsel %vm98, %v4705, 0.0
    %4708 = vadd.xlane.f32.xlu0 %v4707
    %v4709 = vpop.xlane.xlu0 %4708
    %v4710 = vsel %vm98, %v4706, 0.0
    %4711 = vadd.xlane.f32.xlu0 %v4710
    %v4712 = vpop.xlane.xlu0 %4711
    %v4713 = vmul.f32 %v4709, %v2245
    %v4714 = vmul.f32 %v4712, %v2245
    %v4715 = vadd.f32 %v4713, 1e-05
    %v4716 = vadd.f32 %v4714, 1e-05
    %v4717 = vrsqrt.pop %v4715
    %v4718 = vrsqrt.pop %v4716
    %v4719 = vmul.f32 %v4703, %v4717
    %v4720 = vmul.f32 %v4704, %v4718
    %v4722 = vlaneseq
    %v4723 = vshrl.u32 %v4722, 7
    %v4724 = vsub.s32 0, %v4723
    %v4725 = vrot.slane %v4692, %v4724
    %v4727 = vmul.f32 %v4719, %v4725
    %v4728 = vmul.f32 %v4720, %v4725
    %v4730 = vlaneseq
    %v4731 = vshrl.u32 %v4730, 7
    %v4732 = vsub.s32 0, %v4731
    %v4733 = vrot.slane %v4694, %v4732
    %v4735 = vadd.f32 %v4727, %v4733
    %v4736 = vadd.f32 %v4728, %v4733
    %s4737 = scalar_lea.vmem %s14, 32
    %v4738 = vld [vmem:[%s4737] sm:$0xff]
    %v4739 = vld [vmem:[%s4737 + $0x8] sm:$0xff]
    %v4740 = vld [vmem:[%s4737 + $0x10] sm:$0xff]
    %v4741 = vld [vmem:[%s4737 + $0x18] sm:$0xff]
    %s4742 = scalar_lea.vmem %s15, 1
    %v4743 = vld [vmem:[%s4742] sm:$0x1]
    %v4745 = vlaneseq
    %v4746 = vshrl.u32 %v4745, 7
    %v4747 = vsub.s32 0, %v4746
    %v4748 = vrot.slane %v4743, %v4747
    %v4751 = vsel %vm98, %v4735, 0
    %v4754 = vsel %vm98, %v4736, 0
    %4756 = vmatprep.subr.mxu0 0.0
    %4757 = vmatpush1.msra.mxu0 0.0
    %4758 = vmatprep.subr.mxu0 0.0
    %4759 = vmatpush1.msra.mxu0 0.0
    %4760 = vmatprep.subr.mxu0 0.0
    %4761 = vmatpush1.msra.mxu0 0.0
    %4762 = vmatprep.subr.mxu0 0.0
    %4763 = vmatpush1.msra.mxu0 0.0
    %4764 = vmatprep.subr.mxu0 0.0
    %4765 = vmatpush1.msra.mxu0 0.0
    %4766 = vmatprep.subr.mxu0 0.0
    %4767 = vmatpush1.msra.mxu0 0.0
    %4768 = vmatprep.subr.mxu0 0.0
    %4769 = vmatpush1.msra.mxu0 0.0
    %4770 = vmatprep.subr.mxu0 0.0
    %4771 = vmatpush1.msra.mxu0 0.0
    %4772 = vmatprep.subr.mxu0 0.0
    %4773 = vmatpush1.msra.mxu0 0.0
    %4774 = vmatprep.subr.mxu0 0.0
    %4775 = vmatpush1.msra.mxu0 0.0
    %4776 = vmatprep.subr.mxu0 0.0
    %4777 = vmatpush1.msra.mxu0 0.0
    %4778 = vmatprep.subr.mxu0 0.0
    %4779 = vmatpush1.msra.mxu0 0.0
    %4780 = vmatprep.subr.mxu0 0.0
    %4781 = vmatpush1.msra.mxu0 %v4741
    %4782 = vmatprep.subr.mxu0 0.0
    %4783 = vmatpush1.msra.mxu0 %v4740
    %4784 = vmatprep.subr.mxu0 0.0
    %4785 = vmatpush1.msra.mxu0 %v4739
    %4786 = vmatprep.subr.mxu0 0.0
    %4787 = vmatpush1.msra.mxu0 %v4738
    %4788 = vmatprep.subr.mxu0 0.0
    %4789 = vmatpush2.msra.mxu0 0.0
    %4790 = vmatprep.subr.mxu0 0.0
    %4791 = vmatpush2.msra.mxu0 0.0
    %4792 = vmatprep.subr.mxu0 0.0
    %4793 = vmatpush2.msra.mxu0 0.0
    %4794 = vmatprep.subr.mxu0 0.0
    %4795 = vmatpush2.msra.mxu0 0.0
    %4796 = vmatprep.subr.mxu0 0.0
    %4797 = vmatpush2.msra.mxu0 0.0
    %4798 = vmatprep.subr.mxu0 0.0
    %4799 = vmatpush2.msra.mxu0 0.0
    %4800 = vmatprep.subr.mxu0 0.0
    %4801 = vmatpush2.msra.mxu0 0.0
    %4802 = vmatprep.subr.mxu0 0.0
    %4803 = vmatpush2.msra.mxu0 0.0
    %4804 = vmatprep.subr.mxu0 0.0
    %4805 = vmatpush2.msra.mxu0 0.0
    %4806 = vmatprep.subr.mxu0 0.0
    %4807 = vmatpush2.msra.mxu0 0.0
    %4808 = vmatprep.subr.mxu0 0.0
    %4809 = vmatpush2.msra.mxu0 0.0
    %4810 = vmatprep.subr.mxu0 0.0
    %4811 = vmatpush2.msra.mxu0 0.0
    %4812 = vmatprep.subr.mxu0 0.0
    %4813 = vmatpush2.msra.mxu0 0.0
    %4814 = vmatprep.subr.mxu0 0.0
    %4815 = vmatpush2.msra.mxu0 0.0
    %4816 = vmatprep.subr.mxu0 0.0
    %4817 = vmatpush2.msra.mxu0 0.0
    %4818 = vmatprep.subr.mxu0 0.0
    %4819 = vmatpush2.msra.mxu0 0.0
    %4820 = vmatprep.mubr.f32.mxu0 0.0
    %4821 = vmatmul.mubr.f32.gmra.mxu0 %v4751
    %v4822 = vpop.f32.mrf.mxu0
    %v4823 = vadd.f32 %v4748, %v4822
    %v4824 = vpop.f32.mrf.mxu0
    %4825 = vmatprep.mubr.f32.mxu0 0.0
    %4826 = vmatmul.mubr.f32.gmra.mxu0 %v4754
    %v4827 = vpop.f32.mrf.mxu0
    %v4828 = vadd.f32 %v4748, %v4827
    %v4829 = vpop.f32.mrf.mxu0
    %4830 = vdwg.mxu0
    %v4831 = vmul.f32 %v4823, 0.5
    %v4832 = vmul.f32 %v4828, 0.5
    %v4833 = vmul.f32 %v4823, 0.70710677
    %v4834 = vmul.f32 %v4828, 0.70710677
    %v4835 = verf.f32.pop %v4833
    %v4836 = verf.f32.pop %v4834
    %v4837 = vadd.f32 %v4835, 1.0
    %v4838 = vadd.f32 %v4836, 1.0
    %v4839 = vmul.f32 %v4831, %v4837
    %v4840 = vmul.f32 %v4832, %v4838
    %s4841 = scalar_lea.vmem %s16, 64
    %v4842 = vld [vmem:[%s4841] sm:$0xff]
    %v4843 = vld [vmem:[%s4841 + $0x8] sm:$0xff]
    %v4844 = vld [vmem:[%s4841 + $0x10] sm:$0xff]
    %v4845 = vld [vmem:[%s4841 + $0x18] sm:$0xff]
    %v4846 = vld [vmem:[%s4841 + $0x20] sm:$0xff]
    %v4847 = vld [vmem:[%s4841 + $0x28] sm:$0xff]
    %v4848 = vld [vmem:[%s4841 + $0x30] sm:$0xff]
    %v4849 = vld [vmem:[%s4841 + $0x38] sm:$0xff]
    %s4850 = scalar_lea.vmem %s17, 1
    %v4851 = vld [vmem:[%s4850] sm:$0x1]
    %v4853 = vlaneseq
    %v4854 = vshrl.u32 %v4853, 7
    %v4855 = vsub.s32 0, %v4854
    %v4856 = vrot.slane %v4851, %v4855
    %v4859 = vsel %vm2399, %v4839, 0
    %v4862 = vsel %vm2399, %v4840, 0
    %4864 = vmatprep.subr.mxu0 0.0
    %4865 = vmatpush1.msra.mxu0 0.0
    %4866 = vmatprep.subr.mxu0 0.0
    %4867 = vmatpush1.msra.mxu0 0.0
    %4868 = vmatprep.subr.mxu0 0.0
    %4869 = vmatpush1.msra.mxu0 0.0
    %4870 = vmatprep.subr.mxu0 0.0
    %4871 = vmatpush1.msra.mxu0 0.0
    %4872 = vmatprep.subr.mxu0 0.0
    %4873 = vmatpush1.msra.mxu0 0.0
    %4874 = vmatprep.subr.mxu0 0.0
    %4875 = vmatpush1.msra.mxu0 0.0
    %4876 = vmatprep.subr.mxu0 0.0
    %4877 = vmatpush1.msra.mxu0 0.0
    %4878 = vmatprep.subr.mxu0 0.0
    %4879 = vmatpush1.msra.mxu0 0.0
    %4880 = vmatprep.subr.mxu0 0.0
    %4881 = vmatpush1.msra.mxu0 %v4849
    %4882 = vmatprep.subr.mxu0 0.0
    %4883 = vmatpush1.msra.mxu0 %v4848
    %4884 = vmatprep.subr.mxu0 0.0
    %4885 = vmatpush1.msra.mxu0 %v4847
    %4886 = vmatprep.subr.mxu0 0.0
    %4887 = vmatpush1.msra.mxu0 %v4846
    %4888 = vmatprep.subr.mxu0 0.0
    %4889 = vmatpush1.msra.mxu0 %v4845
    %4890 = vmatprep.subr.mxu0 0.0
    %4891 = vmatpush1.msra.mxu0 %v4844
    %4892 = vmatprep.subr.mxu0 0.0
    %4893 = vmatpush1.msra.mxu0 %v4843
    %4894 = vmatprep.subr.mxu0 0.0
    %4895 = vmatpush1.msra.mxu0 %v4842
    %4896 = vmatprep.subr.mxu0 0.0
    %4897 = vmatpush2.msra.mxu0 0.0
    %4898 = vmatprep.subr.mxu0 0.0
    %4899 = vmatpush2.msra.mxu0 0.0
    %4900 = vmatprep.subr.mxu0 0.0
    %4901 = vmatpush2.msra.mxu0 0.0
    %4902 = vmatprep.subr.mxu0 0.0
    %4903 = vmatpush2.msra.mxu0 0.0
    %4904 = vmatprep.subr.mxu0 0.0
    %4905 = vmatpush2.msra.mxu0 0.0
    %4906 = vmatprep.subr.mxu0 0.0
    %4907 = vmatpush2.msra.mxu0 0.0
    %4908 = vmatprep.subr.mxu0 0.0
    %4909 = vmatpush2.msra.mxu0 0.0
    %4910 = vmatprep.subr.mxu0 0.0
    %4911 = vmatpush2.msra.mxu0 0.0
    %4912 = vmatprep.subr.mxu0 0.0
    %4913 = vmatpush2.msra.mxu0 0.0
    %4914 = vmatprep.subr.mxu0 0.0
    %4915 = vmatpush2.msra.mxu0 0.0
    %4916 = vmatprep.subr.mxu0 0.0
    %4917 = vmatpush2.msra.mxu0 0.0
    %4918 = vmatprep.subr.mxu0 0.0
    %4919 = vmatpush2.msra.mxu0 0.0
    %4920 = vmatprep.subr.mxu0 0.0
    %4921 = vmatpush2.msra.mxu0 0.0
    %4922 = vmatprep.subr.mxu0 0.0
    %4923 = vmatpush2.msra.mxu0 0.0
    %4924 = vmatprep.subr.mxu0 0.0
    %4925 = vmatpush2.msra.mxu0 0.0
    %4926 = vmatprep.subr.mxu0 0.0
    %4927 = vmatpush2.msra.mxu0 0.0
    %4928 = vmatprep.mubr.f32.mxu0 0.0
    %4929 = vmatmul.mubr.f32.gmra.mxu0 %v4859
    %v4930 = vpop.f32.mrf.mxu0
    %v4931 = vadd.f32 %v4856, %v4930
    %v4932 = vpop.f32.mrf.mxu0
    %4933 = vmatprep.mubr.f32.mxu0 0.0
    %4934 = vmatmul.mubr.f32.gmra.mxu0 %v4862
    %v4935 = vpop.f32.mrf.mxu0
    %v4936 = vadd.f32 %v4856, %v4935
    %v4937 = vpop.f32.mrf.mxu0
    %4938 = vdwg.mxu0
    %v4939 = vadd.f32 %v4931, %v4735
    %v4940 = vadd.f32 %v4936, %v4736
    %s4941 = scalar_lea.vmem %s18, 1
    %v4942 = vld [vmem:[%s4941] sm:$0x1]
    %s4943 = scalar_lea.vmem %s19, 1
    %v4944 = vld [vmem:[%s4943] sm:$0x1]
    %v4945 = vsel %vm98, %v4939, 0.0
    %4946 = vadd.xlane.f32.xlu0 %v4945
    %v4947 = vpop.xlane.xlu0 %4946
    %v4948 = vsel %vm98, %v4940, 0.0
    %4949 = vadd.xlane.f32.xlu0 %v4948
    %v4950 = vpop.xlane.xlu0 %4949
    %v4951 = vmul.f32 %v4947, %v2245
    %v4952 = vmul.f32 %v4950, %v2245
    %v4953 = vsub.f32 %v4939, %v4951
    %v4954 = vsub.f32 %v4940, %v4952
    %v4955 = vmul.f32 %v4953, %v4953
    %v4956 = vmul.f32 %v4954, %v4954
    %v4957 = vsel %vm98, %v4955, 0.0
    %4958 = vadd.xlane.f32.xlu0 %v4957
    %v4959 = vpop.xlane.xlu0 %4958
    %v4960 = vsel %vm98, %v4956, 0.0
    %4961 = vadd.xlane.f32.xlu0 %v4960
    %v4962 = vpop.xlane.xlu0 %4961
    %v4963 = vmul.f32 %v4959, %v2245
    %v4964 = vmul.f32 %v4962, %v2245
    %v4965 = vadd.f32 %v4963, 1e-05
    %v4966 = vadd.f32 %v4964, 1e-05
    %v4967 = vrsqrt.pop %v4965
    %v4968 = vrsqrt.pop %v4966
    %v4969 = vmul.f32 %v4953, %v4967
    %v4970 = vmul.f32 %v4954, %v4968
    %v4972 = vlaneseq
    %v4973 = vshrl.u32 %v4972, 7
    %v4974 = vsub.s32 0, %v4973
    %v4975 = vrot.slane %v4942, %v4974
    %v4977 = vmul.f32 %v4969, %v4975
    %v4978 = vmul.f32 %v4970, %v4975
    %v4980 = vlaneseq
    %v4981 = vshrl.u32 %v4980, 7
    %v4982 = vsub.s32 0, %v4981
    %v4983 = vrot.slane %v4944, %v4982
    %v4985 = vadd.f32 %v4977, %v4983
    %v4986 = vadd.f32 %v4978, %v4983
    %4987 = vst.msk [vmem:[#allocation2] sm:$0xff] %vm98, %v4985
    %4988 = vst.msk [vmem:[#allocation2 + $0x8] sm:$0xff] %vm98, %v4986
    // Predicated region
    $region82: #{tpu_custom_call.1} parent=1 // pred_check
      _
    $region83: #{tpu_custom_call.1} parent=1 // pred_check_branch
      %4990 = sbr.rel (0) target = $region85
    $region84: #{tpu_custom_call.1} parent=1 // pred_region
      %s4992 = ssub.s32 256, 256
      %4993 = vsyncadd [#allocation3], %s4992
      %s4994 = sshll.u32 [#allocation2], 4
      %s4995 = int_to_ptr.vmem [resolvable:$true] %s4994
      %5000 = dma.vmem_to_hbm [thread:$0]  %s4995, 256, %s20, [#allocation3], 128, 128, 8
    $region85: #{tpu_custom_call.1} parent=1 // pred_fallthru
      _
    // Predicated region
    $region86: #{tpu_custom_call.1} parent=1 // pred_check
      _
    $region87: #{tpu_custom_call.1} parent=1 // pred_check_branch
      %5002 = sbr.rel (0) target = $region89
    $region88: #{tpu_custom_call.1} parent=1 // pred_region
      %5003 = dma.done [#allocation3], 256
    $region89: #{tpu_custom_call.1} parent=1 // pred_fallthru
      _
    %5004 = vsyncpa [#allocation3], 1

</llo_original>
